<compile_context>
chip_gen: v7x
topology: tpu7x:2x2x1
jax: 0.10.0
libtpu: 0.0.40
codegen_flags: <defaults>
</compile_context>

<pallas_src>
import functools

import jax
import jax.numpy as jnp
from jax import lax
from jax.experimental import pallas as pl
from jax.experimental.pallas import tpu as pltpu

EPS = 1e-6  # GroupNorm eps in Normalize()


# --------------------------------------------------------------------------
# Small helpers (host side)
# --------------------------------------------------------------------------
def _round_up(x, m):
    return (x + m - 1) // m * m


def _padded_vmem_bytes(shape, dtype):
    """(8,128)-tile padded VMEM footprint of one buffer."""
    itemsize = jnp.dtype(dtype).itemsize
    if len(shape) == 1:
        return _round_up(int(shape[0]) * itemsize, 512)
    lead = 1
    for d in shape[:-2]:
        lead *= int(d)
    return lead * _round_up(int(shape[-2]), 8) * _round_up(int(shape[-1]), 128) * itemsize


# --------------------------------------------------------------------------
# In-kernel helpers (operate on VMEM-resident values / refs)
# --------------------------------------------------------------------------
def _gn_swish(xf, m, mt, gamma, beta):
    """GroupNorm(eps=1e-6, affine) + x*sigmoid(x) on an (N, C) f32 slab.

    m:  (C, G) one-hot channel->group mask (precomputed, grid-invariant).
    mt: (G, C) its transpose.
    Two-pass (mean, then centered variance) stats, all in f32.
    """
    n, c = xf.shape
    g = m.shape[1]
    inv_cnt = 1.0 / float(n * (c // g))

    sum_c = jnp.sum(xf, axis=0, keepdims=True)                         # (1, C)
    mean_g = jnp.dot(sum_c, m, preferred_element_type=jnp.float32) * inv_cnt
    mean_c = jnp.dot(mean_g, mt, preferred_element_type=jnp.float32)   # (1, C)
    xc = xf - mean_c
    var_g = jnp.dot(jnp.sum(xc * xc, axis=0, keepdims=True), m,
                    preferred_element_type=jnp.float32) * inv_cnt
    var_c = jnp.dot(var_g, mt, preferred_element_type=jnp.float32)     # (1, C)

    y = xc * lax.rsqrt(var_c + EPS) * gamma + beta
    return y * jax.nn.sigmoid(y)                                       # nonlinearity()


def _conv3x3(band_ref, h, w_ref, not_first_col, not_last_col, H, W):
    """3x3 conv, stride 1, zero pad 1, on an (H*W, C) f32 slab.

    band_ref: VMEM scratch ((H+2)*W, 3*C) in the MXU operand dtype.
      rows [W, W+H*W)        : the image, as three column-shifted copies
                               (dx = -1 / 0 / +1) side by side along lanes
      rows [0,W), [(H+1)W,..): zero halo strips (y=-1 and y=H)
    w_ref: (3, 3*C, Cout) row-band tap weights (w_ref[dy][dx*C + cin, cout]).
    Returns an (H*W, Cout) f32 accumulator.
    """
    HW, C = h.shape
    bdt = band_ref.dtype

    # Zero only the two W-row halo strips actually read by the dy=0 / dy=2
    # windows; the interior is fully overwritten below (review: no full zero).
    zstrip = jnp.zeros((W, band_ref.shape[1]), bdt)
    band_ref[0:W, :] = zstrip
    band_ref[(H + 1) * W:(H + 2) * W, :] = zstrip

    # dx = -1 / +1 column shifts: sublane roll (XLU slot) + halo-zero select.
    # shift=HW-1 is the non-negative form of shift=-1.
    left = jnp.where(not_first_col, pltpu.roll(h, shift=1, axis=0), 0.0)
    right = jnp.where(not_last_col, pltpu.roll(h, shift=HW - 1, axis=0), 0.0)

    # Interior stores land at sublane offset W (multiple of 8), so the three
    # dy window reads below are aligned contiguous views (no per-tap copies).
    band_ref[W:W + HW, 0:C] = left.astype(bdt)
    band_ref[W:W + HW, C:2 * C] = h.astype(bdt)
    band_ref[W:W + HW, 2 * C:3 * C] = right.astype(bdt)

    # Three row-band matmuls, K = 3*C (im2col along kx), f32 accumulation.
    acc = None
    for dy in range(3):                                      # static unroll
        patch = band_ref[dy * W:dy * W + HW, :]              # aligned window view
        part = jnp.dot(patch, w_ref[dy], preferred_element_type=jnp.float32)
        acc = part if acc is None else acc + part
    return acc                                               # (H*W, Cout) f32


# --------------------------------------------------------------------------
# Fused ResnetBlock kernel: one grid step == one batch image, all in VMEM.
# --------------------------------------------------------------------------
def _resnet_block_kernel(*refs, H, W, has_nin):
    if has_nin:
        (x_ref, m1_ref, m1t_ref, g1_ref, b1_ref, w1_ref, a1_ref,
         m2_ref, m2t_ref, g2_ref, b2_ref, w2_ref, ws_ref, fb_ref,
         o_ref, band1_ref, band2_ref) = refs
    else:
        (x_ref, m1_ref, m1t_ref, g1_ref, b1_ref, w1_ref, a1_ref,
         m2_ref, m2t_ref, g2_ref, b2_ref, w2_ref, fb_ref,
         o_ref, band1_ref, band2_ref) = refs
        ws_ref = None

    HW = H * W
    x = x_ref[0].astype(jnp.float32)                          # (H*W, Cin)

    # Column-edge halo masks (x==0 / x==W-1): computed once per grid step and
    # shared by both convs (a handful of VPU ops, no VMEM/DMA cost).
    flat = lax.broadcasted_iota(jnp.int32, (HW, 1), 0)
    col = flat % W
    not_first_col = col != 0
    not_last_col = col != (W - 1)

    h = _gn_swish(x, m1_ref[...], m1t_ref[...], g1_ref[...], b1_ref[...])
    h = _conv3x3(band1_ref, h, w1_ref, not_first_col, not_last_col, H, W)
    h = h + a1_ref[0]                                         # conv1 bias + temb_proj
    h = _gn_swish(h, m2_ref[...], m2t_ref[...], g2_ref[...], b2_ref[...])
    # nn.Dropout: identity in eval / inference mode.
    # TODO(synk): training-mode dropout (pltpu.prng_* mask) not implemented.
    h = _conv3x3(band2_ref, h, w2_ref, not_first_col, not_last_col, H, W)

    if has_nin:            # 1x1 nin_shortcut (in_channels != out_channels)
        sc = jnp.dot(x.astype(ws_ref.dtype), ws_ref[...],
                     preferred_element_type=jnp.float32)
    else:                  # identity shortcut: no matmul, no extra rounding
        sc = x
    o_ref[0] = (h + sc + fb_ref[...]).astype(o_ref.dtype)     # residual add in f32


# --------------------------------------------------------------------------
# One-time parameter preparation (hoisted out of the per-forward path)
# --------------------------------------------------------------------------
def prepare_params(params, *, num_groups=8, conv_dtype=jnp.bfloat16):
    """Weight / mask re-layout.  conv_dtype is the MXU operand dtype for the
    conv and 1x1-shortcut matmuls (accumulation is always f32); bf16 is the
    recommended default on v6e/v7x."""
    p = dict(params)
    Cout, Cin = params["conv1_w"].shape[:2]

    def band_taps(w):  # OIHW -> (ky, kx*Cin_, Cout_) row-band im2col layout
        co, ci = w.shape[:2]
        return jnp.transpose(w, (2, 3, 1, 0)).reshape(3, 3 * ci, co).astype(conv_dtype)

    p["conv1_wb"] = band_taps(params["conv1_w"])
    p["conv2_wb"] = band_taps(params["conv2_w"])
    if Cin != Cout:
        p["nin_wt"] = params["nin_w"].reshape(Cout, Cin).T.astype(conv_dtype)

    def gn_masks(C):  # channel<->group one-hot masks, hoisted out of the kernel
        cs = C // num_groups
        ci = jnp.arange(C, dtype=jnp.int32)[:, None]
        gi = jnp.arange(num_groups, dtype=jnp.int32)[None, :]
        m = ((ci // cs) == gi).astype(jnp.float32)            # (C, G)
        return m, m.T

    p["gn1_m"], p["gn1_mt"] = gn_masks(Cin)
    p["gn2_m"], p["gn2_mt"] = gn_masks(Cout)
    return p


# --------------------------------------------------------------------------
# Wrapper (NCHW in / NCHW out like the PyTorch module)
# --------------------------------------------------------------------------
def resnet_block_forward(x_nchw, temb, params, *, num_groups=8):
    B, Cin, H, W = x_nchw.shape
    Cout = params["conv1_wb"].shape[-1]
    HW = H * W
    conv_dtype = params["conv1_wb"].dtype
    has_nin = Cin != Cout
    # TODO(synk): general W (not a multiple of 8) needs a wrapper pad plus a
    # GroupNorm count correction; not required for this module's shapes.
    assert W % 8 == 0, "W must be a multiple of 8 for aligned band windows"

    # NCHW -> lane-dense (B, H*W, C) slabs.  (When ResnetBlocks are chained,
    # keep this layout end-to-end and drop the transposes.)
    x2d = jnp.transpose(x_nchw, (0, 2, 3, 1)).reshape(B, HW, Cin)

    # temb_proj(nonlinearity(temb)): tiny (B,T)x(T,Cout) matmul -> plain XLA.
    # conv1 bias folded in; conv2 bias (+ nin bias) folded into fb.
    a1 = (jax.nn.silu(temb.astype(jnp.float32)) @ params["temb_w"].astype(jnp.float32)
          + params["temb_b"] + params["conv1_b"]).reshape(B, 1, Cout).astype(jnp.float32)
    fb = params["conv2_b"] + (params["nin_b"] if has_nin else 0.0)
    fb = fb.reshape(1, Cout).astype(jnp.float32)

    inputs = [
        x2d,
        params["gn1_m"], params["gn1_mt"],
        params["norm1_g"].reshape(1, Cin).astype(jnp.float32),
        params["norm1_b"].reshape(1, Cin).astype(jnp.float32),
        params["conv1_wb"], a1,
        params["gn2_m"], params["gn2_mt"],
        params["norm2_g"].reshape(1, Cout).astype(jnp.float32),
        params["norm2_b"].reshape(1, Cout).astype(jnp.float32),
        params["conv2_wb"],
    ]
    in_specs = [
        pl.BlockSpec((1, HW, Cin), lambda b: (b, 0, 0)),          # x slab
        pl.BlockSpec((Cin, num_groups), lambda b: (0, 0)),        # GN1 mask
        pl.BlockSpec((num_groups, Cin), lambda b: (0, 0)),        # GN1 mask^T
        pl.BlockSpec((1, Cin), lambda b: (0, 0)),                 # norm1 gamma
        pl.BlockSpec((1, Cin), lambda b: (0, 0)),                 # norm1 beta
        pl.BlockSpec((3, 3 * Cin, Cout), lambda b: (0, 0, 0)),    # conv1 band taps
        pl.BlockSpec((1, 1, Cout), lambda b: (b, 0, 0)),          # conv1_b + temb
        pl.BlockSpec((Cout, num_groups), lambda b: (0, 0)),       # GN2 mask
        pl.BlockSpec((num_groups, Cout), lambda b: (0, 0)),       # GN2 mask^T
        pl.BlockSpec((1, Cout), lambda b: (0, 0)),                # norm2 gamma
        pl.BlockSpec((1, Cout), lambda b: (0, 0)),                # norm2 beta
        pl.BlockSpec((3, 3 * Cout, Cout), lambda b: (0, 0, 0)),   # conv2 band taps
    ]
    if has_nin:
        inputs.append(params["nin_wt"])
        in_specs.append(pl.BlockSpec((Cin, Cout), lambda b: (0, 0)))   # 1x1 shortcut w
    inputs.append(fb)
    in_specs.append(pl.BlockSpec((1, Cout), lambda b: (0, 0)))         # conv2_b (+nin_b)

    band1_shape = ((H + 2) * W, 3 * Cin)
    band2_shape = ((H + 2) * W, 3 * Cout)
    scratch_shapes = [pltpu.VMEM(band1_shape, conv_dtype),     # conv1 row-band buffer
                      pltpu.VMEM(band2_shape, conv_dtype)]     # conv2 row-band buffer

    # Explicit VMEM budget: padded footprint of the double-buffered pipeline
    # blocks + scratch, floored at the portable 32 MiB scoped default.
    big_blocks = [((1, HW, Cin), x2d.dtype), ((1, HW, Cout), x_nchw.dtype),
                  ((3, 3 * Cin, Cout), conv_dtype), ((3, 3 * Cout, Cout), conv_dtype),
                  ((1, 1, Cout), jnp.float32)]
    if has_nin:
        big_blocks.append(((Cin, Cout), conv_dtype))
    est = sum(2 * _padded_vmem_bytes(s, d) for s, d in big_blocks)
    est += _padded_vmem_bytes(band1_shape, conv_dtype)
    est += _padded_vmem_bytes(band2_shape, conv_dtype)
    vmem_limit = int(min(max(est + (8 << 20), 32 << 20), 96 << 20))

    kernel = functools.partial(_resnet_block_kernel, H=H, W=W, has_nin=has_nin)
    out2d = pl.pallas_call(
        kernel,
        out_shape=jax.ShapeDtypeStruct((B, HW, Cout), x_nchw.dtype),
        grid=(B,),
        in_specs=in_specs,
        out_specs=pl.BlockSpec((1, HW, Cout), lambda b: (b, 0, 0)),
        scratch_shapes=scratch_shapes,
        compiler_params=pltpu.CompilerParams(
            dimension_semantics=("parallel",),     # batch across TCs (v7x megacore)
            vmem_limit_bytes=vmem_limit),
    )(*inputs)
    return jnp.transpose(out2d.reshape(B, H, W, Cout), (0, 3, 1, 2))


# --------------------------------------------------------------------------
# Pure-JAX reference (mirrors the PyTorch forward) for validation
# --------------------------------------------------------------------------
def ref_forward(x, temb, params, num_groups=8):
    def gn(v, g, b):
        B, C, H, W = v.shape
        G = num_groups
        vr = v.reshape(B, G, C // G, H, W)
        mean = vr.mean(axis=(2, 3, 4), keepdims=True)
        var = vr.var(axis=(2, 3, 4), keepdims=True)
        vn = ((vr - mean) / jnp.sqrt(var + EPS)).reshape(B, C, H, W)
        return vn * g[None, :, None, None] + b[None, :, None, None]

    def silu(v):
        return v * jax.nn.sigmoid(v)

    def conv(v, w, b, pad):
        y = lax.conv_general_dilated(
            v, w, (1, 1), ((pad, pad), (pad, pad)),
            dimension_numbers=("NCHW", "OIHW", "NCHW"))
        return y + b[None, :, None, None]

    h = silu(gn(x, params["norm1_g"], params["norm1_b"]))
    h = conv(h, params["conv1_w"], params["conv1_b"], 1)
    h = h + (silu(temb) @ params["temb_w"] + params["temb_b"])[:, :, None, None]
    h = silu(gn(h, params["norm2_g"], params["norm2_b"]))
    h = conv(h, params["conv2_w"], params["conv2_b"], 1)
    if x.shape[1] != h.shape[1]:
        x = conv(x, params["nin_w"], params["nin_b"], 0)
    return x + h


# --------------------------------------------------------------------------
if __name__ == "__main__":
    B, H, W, T = 2, 16, 16, 64   # temb_channels=64

    key = jax.random.PRNGKey(0)
    kp, kx, kt = jax.random.split(key, 3)

    def make_params(k, Cin, Cout):
        ks = jax.random.split(k, 12)
        p = {
            "norm1_g": 1.0 + 0.05 * jax.random.normal(ks[0], (Cin,), jnp.float32),
            "norm1_b": 0.05 * jax.random.normal(ks[1], (Cin,), jnp.float32),
            "conv1_w": 0.1 * jax.random.normal(ks[2], (Cout, Cin, 3, 3), jnp.float32),
            "conv1_b": 0.1 * jax.random.normal(ks[3], (Cout,), jnp.float32),
            "temb_w": 0.1 * jax.random.normal(ks[4], (T, Cout), jnp.float32),
            "temb_b": 0.1 * jax.random.normal(ks[5], (Cout,), jnp.float32),
            "norm2_g": 1.0 + 0.05 * jax.random.normal(ks[6], (Cout,), jnp.float32),
            "norm2_b": 0.05 * jax.random.normal(ks[7], (Cout,), jnp.float32),
            "conv2_w": 0.1 * jax.random.normal(ks[8], (Cout, Cout, 3, 3), jnp.float32),
            "conv2_b": 0.1 * jax.random.normal(ks[9], (Cout,), jnp.float32),
        }
        if Cin != Cout:
            p["nin_w"] = 0.1 * jax.random.normal(ks[10], (Cout, Cin, 1, 1), jnp.float32)
            p["nin_b"] = 0.1 * jax.random.normal(ks[11], (Cout,), jnp.float32)
        return p

    # (Cin, Cout, MXU operand dtype, tolerance vs f32 XLA reference)
    cases = [
        (16, 32, jnp.bfloat16, 5e-2),   # nin shortcut, bf16 operands (prod default)
        (16, 32, jnp.float32, 2e-3),    # nin shortcut, f32 operands (tight check)
        (32, 32, jnp.bfloat16, 5e-2),   # identity-shortcut kernel variant
    ]

    fwd = jax.jit(resnet_block_forward)
    for Cin, Cout, conv_dtype, tol in cases:
        params = make_params(kp, Cin, Cout)
        prepped = prepare_params(params, num_groups=8, conv_dtype=conv_dtype)
        x = jax.random.normal(kx, (B, Cin, H, W), jnp.float32)     # NCHW like PyTorch
        temb = jax.random.normal(kt, (B, T), jnp.float32)

        out = jax.block_until_ready(fwd(x, temb, prepped))
        assert out.shape == (B, Cout, H, W), out.shape

        ref = ref_forward(x, temb, params)
        max_err = float(jnp.max(jnp.abs(out - ref)))
        assert max_err < tol, (
            f"mismatch (Cin={Cin}, Cout={Cout}, dtype={conv_dtype}): "
            f"max_err={max_err} tol={tol}")

    print("KERNEL_OK")
</pallas_src>

<mosaic_0001>
module attributes {stable_mosaic.version = 11 : i64} {
  func.func @_resnet_block_kernel(%arg0: i32, %arg1: memref<1x256x16xf32, #tpu.memory_space<vmem>>, %arg2: memref<16x8xf32, #tpu.memory_space<vmem>>, %arg3: memref<8x16xf32, #tpu.memory_space<vmem>>, %arg4: memref<1x16xf32, #tpu.memory_space<vmem>>, %arg5: memref<1x16xf32, #tpu.memory_space<vmem>>, %arg6: memref<3x48x32xbf16, #tpu.memory_space<vmem>>, %arg7: memref<1x1x32xf32, #tpu.memory_space<vmem>>, %arg8: memref<32x8xf32, #tpu.memory_space<vmem>>, %arg9: memref<8x32xf32, #tpu.memory_space<vmem>>, %arg10: memref<1x32xf32, #tpu.memory_space<vmem>>, %arg11: memref<1x32xf32, #tpu.memory_space<vmem>>, %arg12: memref<3x96x32xbf16, #tpu.memory_space<vmem>>, %arg13: memref<16x32xbf16, #tpu.memory_space<vmem>>, %arg14: memref<1x32xf32, #tpu.memory_space<vmem>>, %arg15: memref<1x256x32xf32, #tpu.memory_space<vmem>>, %arg16: memref<288x48xbf16, #tpu.memory_space<vmem>>, %arg17: memref<288x96xbf16, #tpu.memory_space<vmem>>) attributes {dimension_semantics = [#tpu.dimension_semantics<parallel>], iteration_bounds = array<i64: 2>, scalar_prefetch = 0 : i64, scratch_operands = 2 : i64, tpu.core_type = #tpu.core_type<tc>, window_params = [{transform_indices = @transform_0, window_bounds = array<i64: 1, 256, 16>}, {pipeline_mode = #tpu.pipeline_mode<synchronous>, transform_indices = @transform_1, window_bounds = array<i64: 16, 8>}, {pipeline_mode = #tpu.pipeline_mode<synchronous>, transform_indices = @transform_2, window_bounds = array<i64: 8, 16>}, {pipeline_mode = #tpu.pipeline_mode<synchronous>, transform_indices = @transform_3, window_bounds = array<i64: 1, 16>}, {pipeline_mode = #tpu.pipeline_mode<synchronous>, transform_indices = @transform_4, window_bounds = array<i64: 1, 16>}, {pipeline_mode = #tpu.pipeline_mode<synchronous>, transform_indices = @transform_5, window_bounds = array<i64: 3, 48, 32>}, {transform_indices = @transform_6, window_bounds = array<i64: 1, 1, 32>}, {pipeline_mode = #tpu.pipeline_mode<synchronous>, transform_indices = @transform_7, window_bounds = array<i64: 32, 8>}, {pipeline_mode = #tpu.pipeline_mode<synchronous>, transform_indices = @transform_8, window_bounds = array<i64: 8, 32>}, {pipeline_mode = #tpu.pipeline_mode<synchronous>, transform_indices = @transform_9, window_bounds = array<i64: 1, 32>}, {pipeline_mode = #tpu.pipeline_mode<synchronous>, transform_indices = @transform_10, window_bounds = array<i64: 1, 32>}, {pipeline_mode = #tpu.pipeline_mode<synchronous>, transform_indices = @transform_11, window_bounds = array<i64: 3, 96, 32>}, {pipeline_mode = #tpu.pipeline_mode<synchronous>, transform_indices = @transform_12, window_bounds = array<i64: 16, 32>}, {pipeline_mode = #tpu.pipeline_mode<synchronous>, transform_indices = @transform_13, window_bounds = array<i64: 1, 32>}, {transform_indices = @transform_14, window_bounds = array<i64: 1, 256, 32>}]} {
    %c0 = arith.constant 0 : index
    %c0_0 = arith.constant 0 : index
    %c0_1 = arith.constant 0 : index
    %0 = vector.load %arg1[%c0, %c0_0, %c0_1] : memref<1x256x16xf32, #tpu.memory_space<vmem>>, vector<1x256x16xf32>
    %1 = vector.shape_cast %0 : vector<1x256x16xf32> to vector<256x16xf32>
    %2 = tpu.iota {dimensions = array<i32: 0>} : vector<256x1xi32>
    %c16_i32 = arith.constant 16 : i32
    %c0_i32 = arith.constant 0 : i32
    %3 = arith.cmpi eq, %c16_i32, %c0_i32 : i32
    %c1_i32 = arith.constant 1 : i32
    %4 = arith.select %3, %c1_i32, %c16_i32 : i32
    %5 = vector.broadcast %4 : i32 to vector<256x1xi32>
    %6 = arith.remsi %2, %5 : vector<256x1xi32>
    %c0_i32_2 = arith.constant 0 : i32
    %7 = vector.broadcast %c0_i32_2 : i32 to vector<256x1xi32>
    %8 = arith.cmpi ne, %6, %7 : vector<256x1xi32>
    %c0_i32_3 = arith.constant 0 : i32
    %9 = vector.broadcast %c0_i32_3 : i32 to vector<256x1xi32>
    %10 = arith.cmpi slt, %6, %9 : vector<256x1xi32>
    %c0_i32_4 = arith.constant 0 : i32
    %11 = arith.cmpi slt, %4, %c0_i32_4 : i32
    %12 = vector.broadcast %11 : i1 to vector<256x1xi1>
    %13 = vector.broadcast %12 : vector<256x1xi1> to vector<256x1xi1>
    %14 = arith.xori %10, %13 : vector<256x1xi1>
    %15 = arith.andi %14, %8 : vector<256x1xi1>
    %16 = vector.broadcast %4 : i32 to vector<256x1xi32>
    %17 = arith.addi %6, %16 : vector<256x1xi32>
    %18 = arith.select %15, %17, %6 : vector<256x1xi1>, vector<256x1xi32>
    %c0_i32_5 = arith.constant 0 : i32
    %19 = vector.broadcast %c0_i32_5 : i32 to vector<256x1xi32>
    %20 = arith.cmpi ne, %18, %19 : vector<256x1xi32>
    %c15_i32 = arith.constant 15 : i32
    %21 = vector.broadcast %c15_i32 : i32 to vector<256x1xi32>
    %22 = arith.cmpi ne, %18, %21 : vector<256x1xi32>
    %c0_6 = arith.constant 0 : index
    %c0_7 = arith.constant 0 : index
    %23 = vector.load %arg2[%c0_6, %c0_7] : memref<16x8xf32, #tpu.memory_space<vmem>>, vector<16x8xf32>
    %c0_8 = arith.constant 0 : index
    %c0_9 = arith.constant 0 : index
    %24 = vector.load %arg3[%c0_8, %c0_9] : memref<8x16xf32, #tpu.memory_space<vmem>>, vector<8x16xf32>
    %c0_10 = arith.constant 0 : index
    %c0_11 = arith.constant 0 : index
    %25 = vector.load %arg4[%c0_10, %c0_11] : memref<1x16xf32, #tpu.memory_space<vmem>>, vector<1x16xf32>
    %c0_12 = arith.constant 0 : index
    %c0_13 = arith.constant 0 : index
    %26 = vector.load %arg5[%c0_12, %c0_13] : memref<1x16xf32, #tpu.memory_space<vmem>>, vector<1x16xf32>
    %cst = arith.constant dense<0.000000e+00> : vector<16xf32>
    %27 = vector.multi_reduction <add>, %1, %cst [0] : vector<256x16xf32> to vector<16xf32>
    %28 = vector.shape_cast %27 : vector<16xf32> to vector<1x16xf32>
    %cst_14 = arith.constant dense<0.000000e+00> : vector<1x8xf32>
    %29 = tpu.matmul %28, %23, %cst_14 {dimension_numbers = #tpu.dot_dimension_numbers<[1], [0], [0], [1], [0, 0, 1, 1], [], []>} : vector<1x16xf32>, vector<16x8xf32>, vector<1x8xf32> -> vector<1x8xf32>
    %cst_15 = arith.constant 0.001953125 : f32
    %30 = vector.broadcast %cst_15 : f32 to vector<1x8xf32>
    %31 = arith.mulf %29, %30 : vector<1x8xf32>
    %cst_16 = arith.constant dense<0.000000e+00> : vector<1x16xf32>
    %32 = tpu.matmul %31, %24, %cst_16 {dimension_numbers = #tpu.dot_dimension_numbers<[1], [0], [0], [1], [0, 0, 1, 1], [], []>} : vector<1x8xf32>, vector<8x16xf32>, vector<1x16xf32> -> vector<1x16xf32>
    %33 = vector.broadcast %32 : vector<1x16xf32> to vector<256x16xf32>
    %34 = arith.subf %1, %33 : vector<256x16xf32>
    %35 = arith.mulf %34, %34 : vector<256x16xf32>
    %cst_17 = arith.constant dense<0.000000e+00> : vector<16xf32>
    %36 = vector.multi_reduction <add>, %35, %cst_17 [0] : vector<256x16xf32> to vector<16xf32>
    %37 = vector.shape_cast %36 : vector<16xf32> to vector<1x16xf32>
    %cst_18 = arith.constant dense<0.000000e+00> : vector<1x8xf32>
    %38 = tpu.matmul %37, %23, %cst_18 {dimension_numbers = #tpu.dot_dimension_numbers<[1], [0], [0], [1], [0, 0, 1, 1], [], []>} : vector<1x16xf32>, vector<16x8xf32>, vector<1x8xf32> -> vector<1x8xf32>
    %cst_19 = arith.constant 0.001953125 : f32
    %39 = vector.broadcast %cst_19 : f32 to vector<1x8xf32>
    %40 = arith.mulf %38, %39 : vector<1x8xf32>
    %cst_20 = arith.constant dense<0.000000e+00> : vector<1x16xf32>
    %41 = tpu.matmul %40, %24, %cst_20 {dimension_numbers = #tpu.dot_dimension_numbers<[1], [0], [0], [1], [0, 0, 1, 1], [], []>} : vector<1x8xf32>, vector<8x16xf32>, vector<1x16xf32> -> vector<1x16xf32>
    %cst_21 = arith.constant 9.99999997E-7 : f32
    %42 = vector.broadcast %cst_21 : f32 to vector<1x16xf32>
    %43 = arith.addf %41, %42 : vector<1x16xf32>
    %44 = math.rsqrt %43 : vector<1x16xf32>
    %45 = vector.broadcast %44 : vector<1x16xf32> to vector<256x16xf32>
    %46 = arith.mulf %34, %45 : vector<256x16xf32>
    %47 = vector.broadcast %25 : vector<1x16xf32> to vector<256x16xf32>
    %48 = arith.mulf %46, %47 : vector<256x16xf32>
    %49 = vector.broadcast %26 : vector<1x16xf32> to vector<256x16xf32>
    %50 = arith.addf %48, %49 : vector<256x16xf32>
    %51 = arith.negf %50 : vector<256x16xf32>
    %52 = math.exp %51 : vector<256x16xf32>
    %cst_22 = arith.constant 1.000000e+00 : f32
    %53 = vector.broadcast %cst_22 : f32 to vector<256x16xf32>
    %54 = arith.addf %53, %52 : vector<256x16xf32>
    %55 = arith.divf %53, %54 : vector<256x16xf32>
    %56 = arith.mulf %50, %55 : vector<256x16xf32>
    %cst_23 = arith.constant 0.000000e+00 : bf16
    %57 = vector.broadcast %cst_23 : bf16 to vector<16x48xbf16>
    %c0_24 = arith.constant 0 : index
    %c0_25 = arith.constant 0 : index
    %58 = vector.load %arg16[%c0_24, %c0_25] : memref<288x48xbf16, #tpu.memory_space<vmem>>, vector<16x48xbf16>
    tpu.vector_store %arg16[%c0_24, %c0_25], %57 {strides = array<i32>} : memref<288x48xbf16, #tpu.memory_space<vmem>>, vector<16x48xbf16>,
    %c272 = arith.constant 272 : index
    %c0_26 = arith.constant 0 : index
    %59 = vector.load %arg16[%c272, %c0_26] : memref<288x48xbf16, #tpu.memory_space<vmem>>, vector<16x48xbf16>
    tpu.vector_store %arg16[%c272, %c0_26], %57 {strides = array<i32>} : memref<288x48xbf16, #tpu.memory_space<vmem>>, vector<16x48xbf16>,
    %c1_i32_27 = arith.constant 1 : i32
    %60 = tpu.dynamic_rotate %56 by %c1_i32_27 dim 0 : vector<256x16xf32>, i32 -> vector<256x16xf32>
    %cst_28 = arith.constant 0.000000e+00 : f32
    %61 = vector.shape_cast %20 : vector<256x1xi1> to vector<256x1xi1>
    %62 = vector.broadcast %61 : vector<256x1xi1> to vector<256x16xi1>
    %63 = vector.broadcast %cst_28 : f32 to vector<256x16xf32>
    %64 = arith.select %62, %60, %63 : vector<256x16xi1>, vector<256x16xf32>
    %c255_i32 = arith.constant 255 : i32
    %65 = tpu.dynamic_rotate %56 by %c255_i32 dim 0 : vector<256x16xf32>, i32 -> vector<256x16xf32>
    %cst_29 = arith.constant 0.000000e+00 : f32
    %66 = vector.shape_cast %22 : vector<256x1xi1> to vector<256x1xi1>
    %67 = vector.broadcast %66 : vector<256x1xi1> to vector<256x16xi1>
    %68 = vector.broadcast %cst_29 : f32 to vector<256x16xf32>
    %69 = arith.select %67, %65, %68 : vector<256x16xi1>, vector<256x16xf32>
    %70 = arith.truncf %64 : vector<256x16xf32> to vector<256x16xbf16>
    %c16 = arith.constant 16 : index
    %c0_30 = arith.constant 0 : index
    %71 = vector.load %arg16[%c16, %c0_30] : memref<288x48xbf16, #tpu.memory_space<vmem>>, vector<256x16xbf16>
    tpu.vector_store %arg16[%c16, %c0_30], %70 {strides = array<i32>} : memref<288x48xbf16, #tpu.memory_space<vmem>>, vector<256x16xbf16>,
    %72 = arith.truncf %56 : vector<256x16xf32> to vector<256x16xbf16>
    %c16_31 = arith.constant 16 : index
    %c16_32 = arith.constant 16 : index
    %73 = vector.load %arg16[%c16_31, %c16_32] : memref<288x48xbf16, #tpu.memory_space<vmem>>, vector<256x16xbf16>
    tpu.vector_store %arg16[%c16_31, %c16_32], %72 {strides = array<i32>} : memref<288x48xbf16, #tpu.memory_space<vmem>>, vector<256x16xbf16>,
    %74 = arith.truncf %69 : vector<256x16xf32> to vector<256x16xbf16>
    %c16_33 = arith.constant 16 : index
    %c32 = arith.constant 32 : index
    %75 = vector.load %arg16[%c16_33, %c32] : memref<288x48xbf16, #tpu.memory_space<vmem>>, vector<256x16xbf16>
    tpu.vector_store %arg16[%c16_33, %c32], %74 {strides = array<i32>} : memref<288x48xbf16, #tpu.memory_space<vmem>>, vector<256x16xbf16>,
    %c0_34 = arith.constant 0 : index
    %c0_35 = arith.constant 0 : index
    %76 = vector.load %arg16[%c0_34, %c0_35] : memref<288x48xbf16, #tpu.memory_space<vmem>>, vector<256x48xbf16>
    %c0_36 = arith.constant 0 : index
    %c0_37 = arith.constant 0 : index
    %c0_38 = arith.constant 0 : index
    %77 = vector.load %arg6[%c0_36, %c0_37, %c0_38] : memref<3x48x32xbf16, #tpu.memory_space<vmem>>, vector<1x48x32xbf16>
    %78 = vector.shape_cast %77 : vector<1x48x32xbf16> to vector<48x32xbf16>
    %cst_39 = arith.constant dense<0.000000e+00> : vector<256x32xf32>
    %79 = tpu.matmul %76, %78, %cst_39 {dimension_numbers = #tpu.dot_dimension_numbers<[1], [0], [0], [1], [0, 0, 1, 1], [], []>} : vector<256x48xbf16>, vector<48x32xbf16>, vector<256x32xf32> -> vector<256x32xf32>
    %c16_40 = arith.constant 16 : index
    %c0_41 = arith.constant 0 : index
    %80 = vector.load %arg16[%c16_40, %c0_41] : memref<288x48xbf16, #tpu.memory_space<vmem>>, vector<256x48xbf16>
    %c1 = arith.constant 1 : index
    %c0_42 = arith.constant 0 : index
    %c0_43 = arith.constant 0 : index
    %81 = vector.load %arg6[%c1, %c0_42, %c0_43] : memref<3x48x32xbf16, #tpu.memory_space<vmem>>, vector<1x48x32xbf16>
    %82 = vector.shape_cast %81 : vector<1x48x32xbf16> to vector<48x32xbf16>
    %cst_44 = arith.constant dense<0.000000e+00> : vector<256x32xf32>
    %83 = tpu.matmul %80, %82, %cst_44 {dimension_numbers = #tpu.dot_dimension_numbers<[1], [0], [0], [1], [0, 0, 1, 1], [], []>} : vector<256x48xbf16>, vector<48x32xbf16>, vector<256x32xf32> -> vector<256x32xf32>
    %84 = arith.addf %79, %83 : vector<256x32xf32>
    %c32_45 = arith.constant 32 : index
    %c0_46 = arith.constant 0 : index
    %85 = vector.load %arg16[%c32_45, %c0_46] : memref<288x48xbf16, #tpu.memory_space<vmem>>, vector<256x48xbf16>
    %c2 = arith.constant 2 : index
    %c0_47 = arith.constant 0 : index
    %c0_48 = arith.constant 0 : index
    %86 = vector.load %arg6[%c2, %c0_47, %c0_48] : memref<3x48x32xbf16, #tpu.memory_space<vmem>>, vector<1x48x32xbf16>
    %87 = vector.shape_cast %86 : vector<1x48x32xbf16> to vector<48x32xbf16>
    %cst_49 = arith.constant dense<0.000000e+00> : vector<256x32xf32>
    %88 = tpu.matmul %85, %87, %cst_49 {dimension_numbers = #tpu.dot_dimension_numbers<[1], [0], [0], [1], [0, 0, 1, 1], [], []>} : vector<256x48xbf16>, vector<48x32xbf16>, vector<256x32xf32> -> vector<256x32xf32>
    %89 = arith.addf %84, %88 : vector<256x32xf32>
    %c0_50 = arith.constant 0 : index
    %c0_51 = arith.constant 0 : index
    %c0_52 = arith.constant 0 : index
    %90 = vector.load %arg7[%c0_50, %c0_51, %c0_52] : memref<1x1x32xf32, #tpu.memory_space<vmem>>, vector<1x1x32xf32>
    %91 = vector.shape_cast %90 : vector<1x1x32xf32> to vector<1x32xf32>
    %92 = vector.broadcast %91 : vector<1x32xf32> to vector<256x32xf32>
    %93 = arith.addf %89, %92 : vector<256x32xf32>
    %c0_53 = arith.constant 0 : index
    %c0_54 = arith.constant 0 : index
    %94 = vector.load %arg8[%c0_53, %c0_54] : memref<32x8xf32, #tpu.memory_space<vmem>>, vector<32x8xf32>
    %c0_55 = arith.constant 0 : index
    %c0_56 = arith.constant 0 : index
    %95 = vector.load %arg9[%c0_55, %c0_56] : memref<8x32xf32, #tpu.memory_space<vmem>>, vector<8x32xf32>
    %c0_57 = arith.constant 0 : index
    %c0_58 = arith.constant 0 : index
    %96 = vector.load %arg10[%c0_57, %c0_58] : memref<1x32xf32, #tpu.memory_space<vmem>>, vector<1x32xf32>
    %c0_59 = arith.constant 0 : index
    %c0_60 = arith.constant 0 : index
    %97 = vector.load %arg11[%c0_59, %c0_60] : memref<1x32xf32, #tpu.memory_space<vmem>>, vector<1x32xf32>
    %cst_61 = arith.constant dense<0.000000e+00> : vector<32xf32>
    %98 = vector.multi_reduction <add>, %93, %cst_61 [0] : vector<256x32xf32> to vector<32xf32>
    %99 = vector.shape_cast %98 : vector<32xf32> to vector<1x32xf32>
    %cst_62 = arith.constant dense<0.000000e+00> : vector<1x8xf32>
    %100 = tpu.matmul %99, %94, %cst_62 {dimension_numbers = #tpu.dot_dimension_numbers<[1], [0], [0], [1], [0, 0, 1, 1], [], []>} : vector<1x32xf32>, vector<32x8xf32>, vector<1x8xf32> -> vector<1x8xf32>
    %cst_63 = arith.constant 9.765625E-4 : f32
    %101 = vector.broadcast %cst_63 : f32 to vector<1x8xf32>
    %102 = arith.mulf %100, %101 : vector<1x8xf32>
    %cst_64 = arith.constant dense<0.000000e+00> : vector<1x32xf32>
    %103 = tpu.matmul %102, %95, %cst_64 {dimension_numbers = #tpu.dot_dimension_numbers<[1], [0], [0], [1], [0, 0, 1, 1], [], []>} : vector<1x8xf32>, vector<8x32xf32>, vector<1x32xf32> -> vector<1x32xf32>
    %104 = vector.broadcast %103 : vector<1x32xf32> to vector<256x32xf32>
    %105 = arith.subf %93, %104 : vector<256x32xf32>
    %106 = arith.mulf %105, %105 : vector<256x32xf32>
    %cst_65 = arith.constant dense<0.000000e+00> : vector<32xf32>
    %107 = vector.multi_reduction <add>, %106, %cst_65 [0] : vector<256x32xf32> to vector<32xf32>
    %108 = vector.shape_cast %107 : vector<32xf32> to vector<1x32xf32>
    %cst_66 = arith.constant dense<0.000000e+00> : vector<1x8xf32>
    %109 = tpu.matmul %108, %94, %cst_66 {dimension_numbers = #tpu.dot_dimension_numbers<[1], [0], [0], [1], [0, 0, 1, 1], [], []>} : vector<1x32xf32>, vector<32x8xf32>, vector<1x8xf32> -> vector<1x8xf32>
    %cst_67 = arith.constant 9.765625E-4 : f32
    %110 = vector.broadcast %cst_67 : f32 to vector<1x8xf32>
    %111 = arith.mulf %109, %110 : vector<1x8xf32>
    %cst_68 = arith.constant dense<0.000000e+00> : vector<1x32xf32>
    %112 = tpu.matmul %111, %95, %cst_68 {dimension_numbers = #tpu.dot_dimension_numbers<[1], [0], [0], [1], [0, 0, 1, 1], [], []>} : vector<1x8xf32>, vector<8x32xf32>, vector<1x32xf32> -> vector<1x32xf32>
    %cst_69 = arith.constant 9.99999997E-7 : f32
    %113 = vector.broadcast %cst_69 : f32 to vector<1x32xf32>
    %114 = arith.addf %112, %113 : vector<1x32xf32>
    %115 = math.rsqrt %114 : vector<1x32xf32>
    %116 = vector.broadcast %115 : vector<1x32xf32> to vector<256x32xf32>
    %117 = arith.mulf %105, %116 : vector<256x32xf32>
    %118 = vector.broadcast %96 : vector<1x32xf32> to vector<256x32xf32>
    %119 = arith.mulf %117, %118 : vector<256x32xf32>
    %120 = vector.broadcast %97 : vector<1x32xf32> to vector<256x32xf32>
    %121 = arith.addf %119, %120 : vector<256x32xf32>
    %122 = arith.negf %121 : vector<256x32xf32>
    %123 = math.exp %122 : vector<256x32xf32>
    %cst_70 = arith.constant 1.000000e+00 : f32
    %124 = vector.broadcast %cst_70 : f32 to vector<256x32xf32>
    %125 = arith.addf %124, %123 : vector<256x32xf32>
    %126 = arith.divf %124, %125 : vector<256x32xf32>
    %127 = arith.mulf %121, %126 : vector<256x32xf32>
    %cst_71 = arith.constant 0.000000e+00 : bf16
    %128 = vector.broadcast %cst_71 : bf16 to vector<16x96xbf16>
    %c0_72 = arith.constant 0 : index
    %c0_73 = arith.constant 0 : index
    %129 = vector.load %arg17[%c0_72, %c0_73] : memref<288x96xbf16, #tpu.memory_space<vmem>>, vector<16x96xbf16>
    tpu.vector_store %arg17[%c0_72, %c0_73], %128 {strides = array<i32>} : memref<288x96xbf16, #tpu.memory_space<vmem>>, vector<16x96xbf16>,
    %c272_74 = arith.constant 272 : index
    %c0_75 = arith.constant 0 : index
    %130 = vector.load %arg17[%c272_74, %c0_75] : memref<288x96xbf16, #tpu.memory_space<vmem>>, vector<16x96xbf16>
    tpu.vector_store %arg17[%c272_74, %c0_75], %128 {strides = array<i32>} : memref<288x96xbf16, #tpu.memory_space<vmem>>, vector<16x96xbf16>,
    %c1_i32_76 = arith.constant 1 : i32
    %131 = tpu.dynamic_rotate %127 by %c1_i32_76 dim 0 : vector<256x32xf32>, i32 -> vector<256x32xf32>
    %cst_77 = arith.constant 0.000000e+00 : f32
    %132 = vector.shape_cast %20 : vector<256x1xi1> to vector<256x1xi1>
    %133 = vector.broadcast %132 : vector<256x1xi1> to vector<256x32xi1>
    %134 = vector.broadcast %cst_77 : f32 to vector<256x32xf32>
    %135 = arith.select %133, %131, %134 : vector<256x32xi1>, vector<256x32xf32>
    %c255_i32_78 = arith.constant 255 : i32
    %136 = tpu.dynamic_rotate %127 by %c255_i32_78 dim 0 : vector<256x32xf32>, i32 -> vector<256x32xf32>
    %cst_79 = arith.constant 0.000000e+00 : f32
    %137 = vector.shape_cast %22 : vector<256x1xi1> to vector<256x1xi1>
    %138 = vector.broadcast %137 : vector<256x1xi1> to vector<256x32xi1>
    %139 = vector.broadcast %cst_79 : f32 to vector<256x32xf32>
    %140 = arith.select %138, %136, %139 : vector<256x32xi1>, vector<256x32xf32>
    %141 = arith.truncf %135 : vector<256x32xf32> to vector<256x32xbf16>
    %c16_80 = arith.constant 16 : index
    %c0_81 = arith.constant 0 : index
    %142 = vector.load %arg17[%c16_80, %c0_81] : memref<288x96xbf16, #tpu.memory_space<vmem>>, vector<256x32xbf16>
    tpu.vector_store %arg17[%c16_80, %c0_81], %141 {strides = array<i32>} : memref<288x96xbf16, #tpu.memory_space<vmem>>, vector<256x32xbf16>,
    %143 = arith.truncf %127 : vector<256x32xf32> to vector<256x32xbf16>
    %c16_82 = arith.constant 16 : index
    %c32_83 = arith.constant 32 : index
    %144 = vector.load %arg17[%c16_82, %c32_83] : memref<288x96xbf16, #tpu.memory_space<vmem>>, vector<256x32xbf16>
    tpu.vector_store %arg17[%c16_82, %c32_83], %143 {strides = array<i32>} : memref<288x96xbf16, #tpu.memory_space<vmem>>, vector<256x32xbf16>,
    %145 = arith.truncf %140 : vector<256x32xf32> to vector<256x32xbf16>
    %c16_84 = arith.constant 16 : index
    %c64 = arith.constant 64 : index
    %146 = vector.load %arg17[%c16_84, %c64] : memref<288x96xbf16, #tpu.memory_space<vmem>>, vector<256x32xbf16>
    tpu.vector_store %arg17[%c16_84, %c64], %145 {strides = array<i32>} : memref<288x96xbf16, #tpu.memory_space<vmem>>, vector<256x32xbf16>,
    %c0_85 = arith.constant 0 : index
    %c0_86 = arith.constant 0 : index
    %147 = vector.load %arg17[%c0_85, %c0_86] : memref<288x96xbf16, #tpu.memory_space<vmem>>, vector<256x96xbf16>
    %c0_87 = arith.constant 0 : index
    %c0_88 = arith.constant 0 : index
    %c0_89 = arith.constant 0 : index
    %148 = vector.load %arg12[%c0_87, %c0_88, %c0_89] : memref<3x96x32xbf16, #tpu.memory_space<vmem>>, vector<1x96x32xbf16>
    %149 = vector.shape_cast %148 : vector<1x96x32xbf16> to vector<96x32xbf16>
    %cst_90 = arith.constant dense<0.000000e+00> : vector<256x32xf32>
    %150 = tpu.matmul %147, %149, %cst_90 {dimension_numbers = #tpu.dot_dimension_numbers<[1], [0], [0], [1], [0, 0, 1, 1], [], []>} : vector<256x96xbf16>, vector<96x32xbf16>, vector<256x32xf32> -> vector<256x32xf32>
    %c16_91 = arith.constant 16 : index
    %c0_92 = arith.constant 0 : index
    %151 = vector.load %arg17[%c16_91, %c0_92] : memref<288x96xbf16, #tpu.memory_space<vmem>>, vector<256x96xbf16>
    %c1_93 = arith.constant 1 : index
    %c0_94 = arith.constant 0 : index
    %c0_95 = arith.constant 0 : index
    %152 = vector.load %arg12[%c1_93, %c0_94, %c0_95] : memref<3x96x32xbf16, #tpu.memory_space<vmem>>, vector<1x96x32xbf16>
    %153 = vector.shape_cast %152 : vector<1x96x32xbf16> to vector<96x32xbf16>
    %cst_96 = arith.constant dense<0.000000e+00> : vector<256x32xf32>
    %154 = tpu.matmul %151, %153, %cst_96 {dimension_numbers = #tpu.dot_dimension_numbers<[1], [0], [0], [1], [0, 0, 1, 1], [], []>} : vector<256x96xbf16>, vector<96x32xbf16>, vector<256x32xf32> -> vector<256x32xf32>
    %155 = arith.addf %150, %154 : vector<256x32xf32>
    %c32_97 = arith.constant 32 : index
    %c0_98 = arith.constant 0 : index
    %156 = vector.load %arg17[%c32_97, %c0_98] : memref<288x96xbf16, #tpu.memory_space<vmem>>, vector<256x96xbf16>
    %c2_99 = arith.constant 2 : index
    %c0_100 = arith.constant 0 : index
    %c0_101 = arith.constant 0 : index
    %157 = vector.load %arg12[%c2_99, %c0_100, %c0_101] : memref<3x96x32xbf16, #tpu.memory_space<vmem>>, vector<1x96x32xbf16>
    %158 = vector.shape_cast %157 : vector<1x96x32xbf16> to vector<96x32xbf16>
    %cst_102 = arith.constant dense<0.000000e+00> : vector<256x32xf32>
    %159 = tpu.matmul %156, %158, %cst_102 {dimension_numbers = #tpu.dot_dimension_numbers<[1], [0], [0], [1], [0, 0, 1, 1], [], []>} : vector<256x96xbf16>, vector<96x32xbf16>, vector<256x32xf32> -> vector<256x32xf32>
    %160 = arith.addf %155, %159 : vector<256x32xf32>
    %161 = arith.truncf %1 : vector<256x16xf32> to vector<256x16xbf16>
    %c0_103 = arith.constant 0 : index
    %c0_104 = arith.constant 0 : index
    %162 = vector.load %arg13[%c0_103, %c0_104] : memref<16x32xbf16, #tpu.memory_space<vmem>>, vector<16x32xbf16>
    %cst_105 = arith.constant dense<0.000000e+00> : vector<256x32xf32>
    %163 = tpu.matmul %161, %162, %cst_105 {dimension_numbers = #tpu.dot_dimension_numbers<[1], [0], [0], [1], [0, 0, 1, 1], [], []>} : vector<256x16xbf16>, vector<16x32xbf16>, vector<256x32xf32> -> vector<256x32xf32>
    %164 = arith.addf %160, %163 : vector<256x32xf32>
    %c0_106 = arith.constant 0 : index
    %c0_107 = arith.constant 0 : index
    %165 = vector.load %arg14[%c0_106, %c0_107] : memref<1x32xf32, #tpu.memory_space<vmem>>, vector<1x32xf32>
    %166 = vector.broadcast %165 : vector<1x32xf32> to vector<256x32xf32>
    %167 = arith.addf %164, %166 : vector<256x32xf32>
    %c0_108 = arith.constant 0 : index
    %c0_109 = arith.constant 0 : index
    %c0_110 = arith.constant 0 : index
    %168 = vector.load %arg15[%c0_108, %c0_109, %c0_110] : memref<1x256x32xf32, #tpu.memory_space<vmem>>, vector<1x256x32xf32>
    %169 = vector.shape_cast %168 : vector<1x256x32xf32> to vector<256x32xf32>
    %170 = vector.shape_cast %167 : vector<256x32xf32> to vector<1x256x32xf32>
    tpu.vector_store %arg15[%c0_108, %c0_109, %c0_110], %170 {strides = array<i32>} : memref<1x256x32xf32, #tpu.memory_space<vmem>>, vector<1x256x32xf32>,
    return
  }
  func.func @transform_0(%arg0: i32) -> (i32, i32, i32) {
    %c0_i32 = arith.constant 0 : i32
    %c0_i32_0 = arith.constant 0 : i32
    %c0_i32_1 = arith.constant 0 : i32
    return %arg0, %c0_i32, %c0_i32_0 : i32, i32, i32
  }
  func.func @transform_1(%arg0: i32) -> (i32, i32) {
    %c0_i32 = arith.constant 0 : i32
    %c0_i32_0 = arith.constant 0 : i32
    %c0_i32_1 = arith.constant 0 : i32
    return %c0_i32, %c0_i32_0 : i32, i32
  }
  func.func @transform_2(%arg0: i32) -> (i32, i32) {
    %c0_i32 = arith.constant 0 : i32
    %c0_i32_0 = arith.constant 0 : i32
    %c0_i32_1 = arith.constant 0 : i32
    return %c0_i32, %c0_i32_0 : i32, i32
  }
  func.func @transform_3(%arg0: i32) -> (i32, i32) {
    %c0_i32 = arith.constant 0 : i32
    %c0_i32_0 = arith.constant 0 : i32
    %c0_i32_1 = arith.constant 0 : i32
    return %c0_i32, %c0_i32_0 : i32, i32
  }
  func.func @transform_4(%arg0: i32) -> (i32, i32) {
    %c0_i32 = arith.constant 0 : i32
    %c0_i32_0 = arith.constant 0 : i32
    %c0_i32_1 = arith.constant 0 : i32
    return %c0_i32, %c0_i32_0 : i32, i32
  }
  func.func @transform_5(%arg0: i32) -> (i32, i32, i32) {
    %c0_i32 = arith.constant 0 : i32
    %c0_i32_0 = arith.constant 0 : i32
    %c0_i32_1 = arith.constant 0 : i32
    %c0_i32_2 = arith.constant 0 : i32
    return %c0_i32, %c0_i32_0, %c0_i32_1 : i32, i32, i32
  }
  func.func @transform_6(%arg0: i32) -> (i32, i32, i32) {
    %c0_i32 = arith.constant 0 : i32
    %c0_i32_0 = arith.constant 0 : i32
    %c0_i32_1 = arith.constant 0 : i32
    return %arg0, %c0_i32, %c0_i32_0 : i32, i32, i32
  }
  func.func @transform_7(%arg0: i32) -> (i32, i32) {
    %c0_i32 = arith.constant 0 : i32
    %c0_i32_0 = arith.constant 0 : i32
    %c0_i32_1 = arith.constant 0 : i32
    return %c0_i32, %c0_i32_0 : i32, i32
  }
  func.func @transform_8(%arg0: i32) -> (i32, i32) {
    %c0_i32 = arith.constant 0 : i32
    %c0_i32_0 = arith.constant 0 : i32
    %c0_i32_1 = arith.constant 0 : i32
    return %c0_i32, %c0_i32_0 : i32, i32
  }
  func.func @transform_9(%arg0: i32) -> (i32, i32) {
    %c0_i32 = arith.constant 0 : i32
    %c0_i32_0 = arith.constant 0 : i32
    %c0_i32_1 = arith.constant 0 : i32
    return %c0_i32, %c0_i32_0 : i32, i32
  }
  func.func @transform_10(%arg0: i32) -> (i32, i32) {
    %c0_i32 = arith.constant 0 : i32
    %c0_i32_0 = arith.constant 0 : i32
    %c0_i32_1 = arith.constant 0 : i32
    return %c0_i32, %c0_i32_0 : i32, i32
  }
  func.func @transform_11(%arg0: i32) -> (i32, i32, i32) {
    %c0_i32 = arith.constant 0 : i32
    %c0_i32_0 = arith.constant 0 : i32
    %c0_i32_1 = arith.constant 0 : i32
    %c0_i32_2 = arith.constant 0 : i32
    return %c0_i32, %c0_i32_0, %c0_i32_1 : i32, i32, i32
  }
  func.func @transform_12(%arg0: i32) -> (i32, i32) {
    %c0_i32 = arith.constant 0 : i32
    %c0_i32_0 = arith.constant 0 : i32
    %c0_i32_1 = arith.constant 0 : i32
    return %c0_i32, %c0_i32_0 : i32, i32
  }
  func.func @transform_13(%arg0: i32) -> (i32, i32) {
    %c0_i32 = arith.constant 0 : i32
    %c0_i32_0 = arith.constant 0 : i32
    %c0_i32_1 = arith.constant 0 : i32
    return %c0_i32, %c0_i32_0 : i32, i32
  }
  func.func @transform_14(%arg0: i32) -> (i32, i32, i32) {
    %c0_i32 = arith.constant 0 : i32
    %c0_i32_0 = arith.constant 0 : i32
    %c0_i32_1 = arith.constant 0 : i32
    return %arg0, %c0_i32, %c0_i32_0 : i32, i32, i32
  }
}

</mosaic_0001>

<llo_original>
// kernel: resnet_block_forward.1
$region0: #{resnet_block_forward.1}
  #allocation0 [shape = 'u32[]', space=smem, size = 0x4, offset = 0x4, fixed_abs, tag = 'smem constant byte address 0x4 - core index']
  #allocation1 [shape = 'u32[144,128]{1,0:T(1,128)}', space=vmem, size = 0x12000, scoped, tag = 'internal scratch']
  #allocation2 [shape = 'bf16[288,48]{1,0:T(16,128)(2,1)}', space=vmem, size = 0x12000, scoped, tag = 'scratch operand']
  #allocation3 [shape = 'bf16[288,96]{1,0:T(16,128)(2,1)}', space=vmem, size = 0x12000, scoped, tag = 'scratch operand']
  %s0 = inlined_call_operand.vmem [shape: f32[2,256,16], index: 0, kind: input, shape index: {}]
  %s1 = inlined_call_operand.vmem [shape: f32[16,8], index: 1, kind: input, shape index: {}]
  %s2 = inlined_call_operand.vmem [shape: f32[8,16], index: 2, kind: input, shape index: {}]
  %s3 = inlined_call_operand.vmem [shape: f32[1,16], index: 3, kind: input, shape index: {}]
  %s4 = inlined_call_operand.vmem [shape: f32[1,16], index: 4, kind: input, shape index: {}]
  %s5 = inlined_call_operand.vmem [shape: bf16[3,48,32], index: 5, kind: input, shape index: {}]
  %s6 = inlined_call_operand.vmem [shape: f32[2,1,32], index: 6, kind: input, shape index: {}]
  %s7 = inlined_call_operand.vmem [shape: f32[32,8], index: 7, kind: input, shape index: {}]
  %s8 = inlined_call_operand.vmem [shape: f32[8,32], index: 8, kind: input, shape index: {}]
  %s9 = inlined_call_operand.vmem [shape: f32[1,32], index: 9, kind: input, shape index: {}]
  %s10 = inlined_call_operand.vmem [shape: f32[1,32], index: 10, kind: input, shape index: {}]
  %s11 = inlined_call_operand.vmem [shape: bf16[3,96,32], index: 11, kind: input, shape index: {}]
  %s12 = inlined_call_operand.vmem [shape: bf16[16,32], index: 12, kind: input, shape index: {}]
  %s13 = inlined_call_operand.vmem [shape: f32[1,32], index: 13, kind: input, shape index: {}]
  %s14 = inlined_call_operand.hbm [shape: f32[2,256,32], index: 14, kind: output, shape index: {}]
  %s15 = sld [smem:[#allocation0]]
  $region89: #{resnet_block_forward.1} parent=0
    _
  %s17 = ssub.s32 1, %s15
  %s18 = scalar_select 0, %s17, %s15
  $region1: #{resnet_block_forward.1} parent=0
    #allocation4 [shape = 'u8[262144]{0}', space=vmem, size = 0x40000, scoped, tag = 'output window, operand 0']
    #allocation5 [shape = 's32[2]{0}', space=sflag, size = 0x8, scoped, tag = 'scoped memory for resnet_block_forward.1']
    %19 = vsyncpa [#allocation5], 0
    %s20 = scalar_lea.sflag [#allocation5], 1
    %21 = vsyncpa %s20, 0
    loop: start=0, step=1, limit=4
    $region2: #{resnet_block_forward.1} parent=1 // loop_pre_header
      _
    $region3: #{resnet_block_forward.1} parent=1 // loop_header
      %s23 = sphi 0, %s27
      %p24 = scmp.ge.s32.totalorder %s23, 4
      %s33 = sphi 0, %s35
      %s36 = sphi 0, %s33
      %s37 = sphi 0, %s36
      %s53 = sphi 0, %s37
      %s57 = sphi 0, %s57
      %s59 = sphi 0, %s57
      %s60 = sphi 0, %s59
      %s74 = sphi 0, %s60
      %s78 = sphi 0, %s78
      %s80 = sphi 0, %s78
      %s81 = sphi 0, %s80
      %s95 = sphi 0, %s81
      %s99 = sphi 0, %s99
      %s101 = sphi 0, %s99
      %s102 = sphi 0, %s101
      %s116 = sphi 0, %s102
      %s120 = sphi 0, %s120
      %s122 = sphi 0, %s120
      %s123 = sphi 0, %s122
      %s137 = sphi 0, %s123
      %s141 = sphi 0, %s141
      %s143 = sphi 0, %s141
      %s144 = sphi 0, %s143
      %s158 = sphi 0, %s144
      %s164 = sphi 0, %s166
      %s167 = sphi 0, %s164
      %s168 = sphi 0, %s167
      %s184 = sphi 0, %s168
      %s188 = sphi 0, %s188
      %s190 = sphi 0, %s188
      %s191 = sphi 0, %s190
      %s205 = sphi 0, %s191
      %s209 = sphi 0, %s209
      %s211 = sphi 0, %s209
      %s212 = sphi 0, %s211
      %s226 = sphi 0, %s212
      %s230 = sphi 0, %s230
      %s232 = sphi 0, %s230
      %s233 = sphi 0, %s232
      %s247 = sphi 0, %s233
      %s251 = sphi 0, %s251
      %s253 = sphi 0, %s251
      %s254 = sphi 0, %s253
      %s268 = sphi 0, %s254
      %s272 = sphi 0, %s272
      %s274 = sphi 0, %s272
      %s275 = sphi 0, %s274
      %s289 = sphi 0, %s275
      %s293 = sphi 0, %s293
      %s295 = sphi 0, %s293
      %s296 = sphi 0, %s295
      %s310 = sphi 0, %s296
      %s314 = sphi 0, %s314
      %s316 = sphi 0, %s314
      %s317 = sphi 0, %s316
      %s331 = sphi 0, %s317
      %s337 = sphi 0, %s339
      %s340 = sphi 0, %s337
      %s341 = sphi 0, %s340
      %s357 = sphi 0, %s341
    $region4: #{resnet_block_forward.1} parent=1 // loop_header_branch
      %26 = sbr.rel (%p24) target = $region8
    $region5: #{resnet_block_forward.1} parent=1 // loop_body
      %s28 = ssub.s32 %s23, 1
      %s29 = ssub.s32 %s23, 2
      %s30 = sadd.s32 %s23, 1
      %s31 = ssub.s32 %s23, %s30
      %p32 = scmp.eq.s32.totalorder %s31, 0
      %s34 = sadd.s32 %s33, 1
      %s35 = scalar_select %p32, %s33, %s34
      %p38 = pneg %p32
      %p39 = scmp.eq.s32.totalorder %s23, 1
      %p40 = por %p38, %p39
      %p41 = scmp.ne.s32.totalorder %s33, %s36
      %p42 = scmp.eq.s32.totalorder %s23, 0
      %p43 = por %p41, %p42
      %p44 = scmp.ne.s32.totalorder %s33, %s36
      %p45 = scmp.eq.s32.totalorder %s28, 1
      %p46 = por %p44, %p45
      %p47 = scmp.ne.s32.totalorder %s36, %s37
      %p48 = scmp.eq.s32.totalorder %s28, 0
      %p49 = por %p47, %p48
      %p50 = scmp.ne.s32.totalorder %s36, %s37
      %p51 = scmp.eq.s32.totalorder %s29, 1
      %p52 = por %p50, %p51
      %p54 = scmp.ne.s32.totalorder %s37, %s53
      %p55 = scmp.eq.s32.totalorder %s29, 0
      %p56 = por %p54, %p55
      %s58 = sadd.s32 %s57, 1
      %p61 = scmp.eq.s32.totalorder %s23, 1
      %p62 = scmp.ne.s32.totalorder %s57, %s59
      %p63 = scmp.eq.s32.totalorder %s23, 0
      %p64 = por %p62, %p63
      %p65 = scmp.ne.s32.totalorder %s57, %s59
      %p66 = scmp.eq.s32.totalorder %s28, 1
      %p67 = por %p65, %p66
      %p68 = scmp.ne.s32.totalorder %s59, %s60
      %p69 = scmp.eq.s32.totalorder %s28, 0
      %p70 = por %p68, %p69
      %p71 = scmp.ne.s32.totalorder %s59, %s60
      %p72 = scmp.eq.s32.totalorder %s29, 1
      %p73 = por %p71, %p72
      %p75 = scmp.ne.s32.totalorder %s60, %s74
      %p76 = scmp.eq.s32.totalorder %s29, 0
      %p77 = por %p75, %p76
      %s79 = sadd.s32 %s78, 1
      %p82 = scmp.eq.s32.totalorder %s23, 1
      %p83 = scmp.ne.s32.totalorder %s78, %s80
      %p84 = scmp.eq.s32.totalorder %s23, 0
      %p85 = por %p83, %p84
      %p86 = scmp.ne.s32.totalorder %s78, %s80
      %p87 = scmp.eq.s32.totalorder %s28, 1
      %p88 = por %p86, %p87
      %p89 = scmp.ne.s32.totalorder %s80, %s81
      %p90 = scmp.eq.s32.totalorder %s28, 0
      %p91 = por %p89, %p90
      %p92 = scmp.ne.s32.totalorder %s80, %s81
      %p93 = scmp.eq.s32.totalorder %s29, 1
      %p94 = por %p92, %p93
      %p96 = scmp.ne.s32.totalorder %s81, %s95
      %p97 = scmp.eq.s32.totalorder %s29, 0
      %p98 = por %p96, %p97
      %s100 = sadd.s32 %s99, 1
      %p103 = scmp.eq.s32.totalorder %s23, 1
      %p104 = scmp.ne.s32.totalorder %s99, %s101
      %p105 = scmp.eq.s32.totalorder %s23, 0
      %p106 = por %p104, %p105
      %p107 = scmp.ne.s32.totalorder %s99, %s101
      %p108 = scmp.eq.s32.totalorder %s28, 1
      %p109 = por %p107, %p108
      %p110 = scmp.ne.s32.totalorder %s101, %s102
      %p111 = scmp.eq.s32.totalorder %s28, 0
      %p112 = por %p110, %p111
      %p113 = scmp.ne.s32.totalorder %s101, %s102
      %p114 = scmp.eq.s32.totalorder %s29, 1
      %p115 = por %p113, %p114
      %p117 = scmp.ne.s32.totalorder %s102, %s116
      %p118 = scmp.eq.s32.totalorder %s29, 0
      %p119 = por %p117, %p118
      %s121 = sadd.s32 %s120, 1
      %p124 = scmp.eq.s32.totalorder %s23, 1
      %p125 = scmp.ne.s32.totalorder %s120, %s122
      %p126 = scmp.eq.s32.totalorder %s23, 0
      %p127 = por %p125, %p126
      %p128 = scmp.ne.s32.totalorder %s120, %s122
      %p129 = scmp.eq.s32.totalorder %s28, 1
      %p130 = por %p128, %p129
      %p131 = scmp.ne.s32.totalorder %s122, %s123
      %p132 = scmp.eq.s32.totalorder %s28, 0
      %p133 = por %p131, %p132
      %p134 = scmp.ne.s32.totalorder %s122, %s123
      %p135 = scmp.eq.s32.totalorder %s29, 1
      %p136 = por %p134, %p135
      %p138 = scmp.ne.s32.totalorder %s123, %s137
      %p139 = scmp.eq.s32.totalorder %s29, 0
      %p140 = por %p138, %p139
      %s142 = sadd.s32 %s141, 1
      %p145 = scmp.eq.s32.totalorder %s23, 1
      %p146 = scmp.ne.s32.totalorder %s141, %s143
      %p147 = scmp.eq.s32.totalorder %s23, 0
      %p148 = por %p146, %p147
      %p149 = scmp.ne.s32.totalorder %s141, %s143
      %p150 = scmp.eq.s32.totalorder %s28, 1
      %p151 = por %p149, %p150
      %p152 = scmp.ne.s32.totalorder %s143, %s144
      %p153 = scmp.eq.s32.totalorder %s28, 0
      %p154 = por %p152, %p153
      %p155 = scmp.ne.s32.totalorder %s143, %s144
      %p156 = scmp.eq.s32.totalorder %s29, 1
      %p157 = por %p155, %p156
      %p159 = scmp.ne.s32.totalorder %s144, %s158
      %p160 = scmp.eq.s32.totalorder %s29, 0
      %p161 = por %p159, %p160
      %s162 = ssub.s32 %s23, %s30
      %p163 = scmp.eq.s32.totalorder %s162, 0
      %s165 = sadd.s32 %s164, 1
      %s166 = scalar_select %p163, %s164, %s165
      %p169 = pneg %p163
      %p170 = scmp.eq.s32.totalorder %s23, 1
      %p171 = por %p169, %p170
      %p172 = scmp.ne.s32.totalorder %s164, %s167
      %p173 = scmp.eq.s32.totalorder %s23, 0
      %p174 = por %p172, %p173
      %p175 = scmp.ne.s32.totalorder %s164, %s167
      %p176 = scmp.eq.s32.totalorder %s28, 1
      %p177 = por %p175, %p176
      %p178 = scmp.ne.s32.totalorder %s167, %s168
      %p179 = scmp.eq.s32.totalorder %s28, 0
      %p180 = por %p178, %p179
      %p181 = scmp.ne.s32.totalorder %s167, %s168
      %p182 = scmp.eq.s32.totalorder %s29, 1
      %p183 = por %p181, %p182
      %p185 = scmp.ne.s32.totalorder %s168, %s184
      %p186 = scmp.eq.s32.totalorder %s29, 0
      %p187 = por %p185, %p186
      %s189 = sadd.s32 %s188, 1
      %p192 = scmp.eq.s32.totalorder %s23, 1
      %p193 = scmp.ne.s32.totalorder %s188, %s190
      %p194 = scmp.eq.s32.totalorder %s23, 0
      %p195 = por %p193, %p194
      %p196 = scmp.ne.s32.totalorder %s188, %s190
      %p197 = scmp.eq.s32.totalorder %s28, 1
      %p198 = por %p196, %p197
      %p199 = scmp.ne.s32.totalorder %s190, %s191
      %p200 = scmp.eq.s32.totalorder %s28, 0
      %p201 = por %p199, %p200
      %p202 = scmp.ne.s32.totalorder %s190, %s191
      %p203 = scmp.eq.s32.totalorder %s29, 1
      %p204 = por %p202, %p203
      %p206 = scmp.ne.s32.totalorder %s191, %s205
      %p207 = scmp.eq.s32.totalorder %s29, 0
      %p208 = por %p206, %p207
      %s210 = sadd.s32 %s209, 1
      %p213 = scmp.eq.s32.totalorder %s23, 1
      %p214 = scmp.ne.s32.totalorder %s209, %s211
      %p215 = scmp.eq.s32.totalorder %s23, 0
      %p216 = por %p214, %p215
      %p217 = scmp.ne.s32.totalorder %s209, %s211
      %p218 = scmp.eq.s32.totalorder %s28, 1
      %p219 = por %p217, %p218
      %p220 = scmp.ne.s32.totalorder %s211, %s212
      %p221 = scmp.eq.s32.totalorder %s28, 0
      %p222 = por %p220, %p221
      %p223 = scmp.ne.s32.totalorder %s211, %s212
      %p224 = scmp.eq.s32.totalorder %s29, 1
      %p225 = por %p223, %p224
      %p227 = scmp.ne.s32.totalorder %s212, %s226
      %p228 = scmp.eq.s32.totalorder %s29, 0
      %p229 = por %p227, %p228
      %s231 = sadd.s32 %s230, 1
      %p234 = scmp.eq.s32.totalorder %s23, 1
      %p235 = scmp.ne.s32.totalorder %s230, %s232
      %p236 = scmp.eq.s32.totalorder %s23, 0
      %p237 = por %p235, %p236
      %p238 = scmp.ne.s32.totalorder %s230, %s232
      %p239 = scmp.eq.s32.totalorder %s28, 1
      %p240 = por %p238, %p239
      %p241 = scmp.ne.s32.totalorder %s232, %s233
      %p242 = scmp.eq.s32.totalorder %s28, 0
      %p243 = por %p241, %p242
      %p244 = scmp.ne.s32.totalorder %s232, %s233
      %p245 = scmp.eq.s32.totalorder %s29, 1
      %p246 = por %p244, %p245
      %p248 = scmp.ne.s32.totalorder %s233, %s247
      %p249 = scmp.eq.s32.totalorder %s29, 0
      %p250 = por %p248, %p249
      %s252 = sadd.s32 %s251, 1
      %p255 = scmp.eq.s32.totalorder %s23, 1
      %p256 = scmp.ne.s32.totalorder %s251, %s253
      %p257 = scmp.eq.s32.totalorder %s23, 0
      %p258 = por %p256, %p257
      %p259 = scmp.ne.s32.totalorder %s251, %s253
      %p260 = scmp.eq.s32.totalorder %s28, 1
      %p261 = por %p259, %p260
      %p262 = scmp.ne.s32.totalorder %s253, %s254
      %p263 = scmp.eq.s32.totalorder %s28, 0
      %p264 = por %p262, %p263
      %p265 = scmp.ne.s32.totalorder %s253, %s254
      %p266 = scmp.eq.s32.totalorder %s29, 1
      %p267 = por %p265, %p266
      %p269 = scmp.ne.s32.totalorder %s254, %s268
      %p270 = scmp.eq.s32.totalorder %s29, 0
      %p271 = por %p269, %p270
      %s273 = sadd.s32 %s272, 1
      %p276 = scmp.eq.s32.totalorder %s23, 1
      %p277 = scmp.ne.s32.totalorder %s272, %s274
      %p278 = scmp.eq.s32.totalorder %s23, 0
      %p279 = por %p277, %p278
      %p280 = scmp.ne.s32.totalorder %s272, %s274
      %p281 = scmp.eq.s32.totalorder %s28, 1
      %p282 = por %p280, %p281
      %p283 = scmp.ne.s32.totalorder %s274, %s275
      %p284 = scmp.eq.s32.totalorder %s28, 0
      %p285 = por %p283, %p284
      %p286 = scmp.ne.s32.totalorder %s274, %s275
      %p287 = scmp.eq.s32.totalorder %s29, 1
      %p288 = por %p286, %p287
      %p290 = scmp.ne.s32.totalorder %s275, %s289
      %p291 = scmp.eq.s32.totalorder %s29, 0
      %p292 = por %p290, %p291
      %s294 = sadd.s32 %s293, 1
      %p297 = scmp.eq.s32.totalorder %s23, 1
      %p298 = scmp.ne.s32.totalorder %s293, %s295
      %p299 = scmp.eq.s32.totalorder %s23, 0
      %p300 = por %p298, %p299
      %p301 = scmp.ne.s32.totalorder %s293, %s295
      %p302 = scmp.eq.s32.totalorder %s28, 1
      %p303 = por %p301, %p302
      %p304 = scmp.ne.s32.totalorder %s295, %s296
      %p305 = scmp.eq.s32.totalorder %s28, 0
      %p306 = por %p304, %p305
      %p307 = scmp.ne.s32.totalorder %s295, %s296
      %p308 = scmp.eq.s32.totalorder %s29, 1
      %p309 = por %p307, %p308
      %p311 = scmp.ne.s32.totalorder %s296, %s310
      %p312 = scmp.eq.s32.totalorder %s29, 0
      %p313 = por %p311, %p312
      %s315 = sadd.s32 %s314, 1
      %p318 = scmp.eq.s32.totalorder %s23, 1
      %p319 = scmp.ne.s32.totalorder %s314, %s316
      %p320 = scmp.eq.s32.totalorder %s23, 0
      %p321 = por %p319, %p320
      %p322 = scmp.ne.s32.totalorder %s314, %s316
      %p323 = scmp.eq.s32.totalorder %s28, 1
      %p324 = por %p322, %p323
      %p325 = scmp.ne.s32.totalorder %s316, %s317
      %p326 = scmp.eq.s32.totalorder %s28, 0
      %p327 = por %p325, %p326
      %p328 = scmp.ne.s32.totalorder %s316, %s317
      %p329 = scmp.eq.s32.totalorder %s29, 1
      %p330 = por %p328, %p329
      %p332 = scmp.ne.s32.totalorder %s317, %s331
      %p333 = scmp.eq.s32.totalorder %s29, 0
      %p334 = por %p332, %p333
      %s335 = ssub.s32 %s23, %s30
      %p336 = scmp.eq.s32.totalorder %s335, 0
      %s338 = sadd.s32 %s337, 1
      %s339 = scalar_select %p336, %s337, %s338
      %p342 = pneg %p336
      %p343 = scmp.eq.s32.totalorder %s23, 1
      %p344 = por %p342, %p343
      %p345 = scmp.ne.s32.totalorder %s337, %s340
      %p346 = scmp.eq.s32.totalorder %s23, 0
      %p347 = por %p345, %p346
      %p348 = scmp.ne.s32.totalorder %s337, %s340
      %p349 = scmp.eq.s32.totalorder %s28, 1
      %p350 = por %p348, %p349
      %p351 = scmp.ne.s32.totalorder %s340, %s341
      %p352 = scmp.eq.s32.totalorder %s28, 0
      %p353 = por %p351, %p352
      %p354 = scmp.ne.s32.totalorder %s340, %s341
      %p355 = scmp.eq.s32.totalorder %s29, 1
      %p356 = por %p354, %p355
      %p358 = scmp.ne.s32.totalorder %s341, %s357
      %p359 = scmp.eq.s32.totalorder %s29, 0
      %p360 = por %p358, %p359
      %p361 = scmp.le.s32.totalorder 1, %s23
      %p362 = scmp.lt.s32.totalorder %s23, 3
      %p363 = pnand %p361, %p362
      %p364 = pneg %p363
      // Predicated region
      $region9: #{resnet_block_forward.1} parent=5 // pred_check
        _
      $region10: #{resnet_block_forward.1} parent=5 // pred_check_branch
        %366 = sbr.rel (%p363) target = $region12
      $region11: #{resnet_block_forward.1} parent=5 // pred_region
        %s367 = ssub.s32 %s23, 1
        // Predicated region
        $region13: #{resnet_block_forward.1} parent=11 // pred_check
          %p368 = pneg %p70
        $region14: #{resnet_block_forward.1} parent=11 // pred_check_branch
          %370 = sbr.rel (%p368) target = $region16
        $region15: #{resnet_block_forward.1} parent=11 // pred_region
          _
        $region16: #{resnet_block_forward.1} parent=11 // pred_fallthru
          _
        // Predicated region
        $region17: #{resnet_block_forward.1} parent=11 // pred_check
          %p371 = pneg %p91
        $region18: #{resnet_block_forward.1} parent=11 // pred_check_branch
          %373 = sbr.rel (%p371) target = $region20
        $region19: #{resnet_block_forward.1} parent=11 // pred_region
          _
        $region20: #{resnet_block_forward.1} parent=11 // pred_fallthru
          _
        // Predicated region
        $region21: #{resnet_block_forward.1} parent=11 // pred_check
          %p374 = pneg %p112
        $region22: #{resnet_block_forward.1} parent=11 // pred_check_branch
          %376 = sbr.rel (%p374) target = $region24
        $region23: #{resnet_block_forward.1} parent=11 // pred_region
          _
        $region24: #{resnet_block_forward.1} parent=11 // pred_fallthru
          _
        // Predicated region
        $region25: #{resnet_block_forward.1} parent=11 // pred_check
          %p377 = pneg %p133
        $region26: #{resnet_block_forward.1} parent=11 // pred_check_branch
          %379 = sbr.rel (%p377) target = $region28
        $region27: #{resnet_block_forward.1} parent=11 // pred_region
          _
        $region28: #{resnet_block_forward.1} parent=11 // pred_fallthru
          _
        // Predicated region
        $region29: #{resnet_block_forward.1} parent=11 // pred_check
          %p380 = pneg %p154
        $region30: #{resnet_block_forward.1} parent=11 // pred_check_branch
          %382 = sbr.rel (%p380) target = $region32
        $region31: #{resnet_block_forward.1} parent=11 // pred_region
          _
        $region32: #{resnet_block_forward.1} parent=11 // pred_fallthru
          _
        // Predicated region
        $region33: #{resnet_block_forward.1} parent=11 // pred_check
          %p383 = pneg %p201
        $region34: #{resnet_block_forward.1} parent=11 // pred_check_branch
          %385 = sbr.rel (%p383) target = $region36
        $region35: #{resnet_block_forward.1} parent=11 // pred_region
          _
        $region36: #{resnet_block_forward.1} parent=11 // pred_fallthru
          _
        // Predicated region
        $region37: #{resnet_block_forward.1} parent=11 // pred_check
          %p386 = pneg %p222
        $region38: #{resnet_block_forward.1} parent=11 // pred_check_branch
          %388 = sbr.rel (%p386) target = $region40
        $region39: #{resnet_block_forward.1} parent=11 // pred_region
          _
        $region40: #{resnet_block_forward.1} parent=11 // pred_fallthru
          _
        // Predicated region
        $region41: #{resnet_block_forward.1} parent=11 // pred_check
          %p389 = pneg %p243
        $region42: #{resnet_block_forward.1} parent=11 // pred_check_branch
          %391 = sbr.rel (%p389) target = $region44
        $region43: #{resnet_block_forward.1} parent=11 // pred_region
          _
        $region44: #{resnet_block_forward.1} parent=11 // pred_fallthru
          _
        // Predicated region
        $region45: #{resnet_block_forward.1} parent=11 // pred_check
          %p392 = pneg %p264
        $region46: #{resnet_block_forward.1} parent=11 // pred_check_branch
          %394 = sbr.rel (%p392) target = $region48
        $region47: #{resnet_block_forward.1} parent=11 // pred_region
          _
        $region48: #{resnet_block_forward.1} parent=11 // pred_fallthru
          _
        // Predicated region
        $region49: #{resnet_block_forward.1} parent=11 // pred_check
          %p395 = pneg %p285
        $region50: #{resnet_block_forward.1} parent=11 // pred_check_branch
          %397 = sbr.rel (%p395) target = $region52
        $region51: #{resnet_block_forward.1} parent=11 // pred_region
          _
        $region52: #{resnet_block_forward.1} parent=11 // pred_fallthru
          _
        // Predicated region
        $region53: #{resnet_block_forward.1} parent=11 // pred_check
          %p398 = pneg %p306
        $region54: #{resnet_block_forward.1} parent=11 // pred_check_branch
          %400 = sbr.rel (%p398) target = $region56
        $region55: #{resnet_block_forward.1} parent=11 // pred_region
          _
        $region56: #{resnet_block_forward.1} parent=11 // pred_fallthru
          _
        // Predicated region
        $region57: #{resnet_block_forward.1} parent=11 // pred_check
          %p401 = pneg %p327
        $region58: #{resnet_block_forward.1} parent=11 // pred_check_branch
          %403 = sbr.rel (%p401) target = $region60
        $region59: #{resnet_block_forward.1} parent=11 // pred_region
          _
        $region60: #{resnet_block_forward.1} parent=11 // pred_fallthru
          _
      $region12: #{resnet_block_forward.1} parent=5 // pred_fallthru
        _
      %p404 = scmp.lt.s32.totalorder %s23, 2
      // Predicated region
      $region61: #{resnet_block_forward.1} parent=5 // pred_check
        %p405 = pneg %p404
      $region62: #{resnet_block_forward.1} parent=5 // pred_check_branch
        %407 = sbr.rel (%p405) target = $region64
      $region63: #{resnet_block_forward.1} parent=5 // pred_region
        // Predicated region
        $region65: #{resnet_block_forward.1} parent=63 // pred_check
          %p408 = pneg %p43
        $region66: #{resnet_block_forward.1} parent=63 // pred_check_branch
          %410 = sbr.rel (%p408) target = $region68
        $region67: #{resnet_block_forward.1} parent=63 // pred_region
          %p411 = scmp.lt.s32.totalorder %s23, 1
          %s412 = scalar_select %p411, %s23, 1
          %s413 = smul.addr %s412, 32
          %s414 = smul.addr %s413, 8
          %s415 = scalar_lea.vmem %s0, %s414
        $region68: #{resnet_block_forward.1} parent=63 // pred_fallthru
          _
        // Predicated region
        $region69: #{resnet_block_forward.1} parent=63 // pred_check
          %p416 = pneg %p174
        $region70: #{resnet_block_forward.1} parent=63 // pred_check_branch
          %418 = sbr.rel (%p416) target = $region72
        $region71: #{resnet_block_forward.1} parent=63 // pred_region
          %p419 = scmp.lt.s32.totalorder %s23, 1
          %s420 = scalar_select %p419, %s23, 1
          %s421 = scalar_lea.vmem %s6, %s420
        $region72: #{resnet_block_forward.1} parent=63 // pred_fallthru
          _
      $region64: #{resnet_block_forward.1} parent=5 // pred_fallthru
        _
      %p422 = scmp.le.s32.totalorder 1, %s23
      %p423 = scmp.lt.s32.totalorder %s23, 3
      %p424 = pnand %p422, %p423
      %p425 = pneg %p424
      // Predicated region
      $region73: #{resnet_block_forward.1} parent=5 // pred_check
        _
      $region74: #{resnet_block_forward.1} parent=5 // pred_check_branch
        %427 = sbr.rel (%p424) target = $region76
      $region75: #{resnet_block_forward.1} parent=5 // pred_region
        %s428 = ssub.s32 %s23, 1
        %p429 = scmp.lt.s32.totalorder %s28, 1
        %s430 = scalar_select %p429, %s28, 1
        %s431 = smul.addr %s430, 32
        %s432 = smul.addr %s431, 8
        %s433 = scalar_lea.vmem %s0, %s432
        %p434 = pneg %p49
        %p435 = pneg %p46
        %p436 = pneg %p70
        %p437 = pneg %p67
        %p438 = pneg %p91
        %p439 = pneg %p88
        %p440 = pneg %p112
        %p441 = pneg %p109
        %p442 = pneg %p133
        %p443 = pneg %p130
        %p444 = pneg %p154
        %p445 = pneg %p151
        %p446 = scmp.lt.s32.totalorder %s28, 1
        %s447 = scalar_select %p446, %s28, 1
        %s448 = scalar_lea.vmem %s6, %s447
        %p449 = pneg %p180
        %p450 = pneg %p177
        %p451 = pneg %p201
        %p452 = pneg %p198
        %p453 = pneg %p222
        %p454 = pneg %p219
        %p455 = pneg %p243
        %p456 = pneg %p240
        %p457 = pneg %p264
        %p458 = pneg %p261
        %p459 = pneg %p285
        %p460 = pneg %p282
        %p461 = pneg %p306
        %p462 = pneg %p303
        %p463 = pneg %p327
        %p464 = pneg %p324
        %p465 = pneg %p353
        %p466 = pneg %p350
        %s467 = sand.u32 %s340, 1
        %s468 = scalar_lea.sflag [#allocation5], %s467
        %s469 = sand.u32 %s340, 1
        %s470 = smul.addr %s469, 256
        %s471 = scalar_lea.vmem [#allocation4], %s470
        %p472 = scmp.lt.s32.totalorder %s28, 1
        %s473 = scalar_select %p472, %s28, 1
        %s474 = smul.addr %s473, 32
        %s475 = smul.addr %s474, 8
        %s476 = scalar_lea.vmem %s0, %s475
        %p477 = scmp.lt.s32.totalorder %s28, 1
        %s478 = scalar_select %p477, %s28, 1
        %s479 = scalar_lea.vmem %s6, %s478
        %v481 = vld [vmem:[%s476] sm:$0xff]
        %v482 = vld [vmem:[%s476 + $0x8] sm:$0xff]
        %v483 = vld [vmem:[%s476 + $0x10] sm:$0xff]
        %v484 = vld [vmem:[%s476 + $0x18] sm:$0xff]
        %v485 = vld [vmem:[%s476 + $0x20] sm:$0xff]
        %v486 = vld [vmem:[%s476 + $0x28] sm:$0xff]
        %v487 = vld [vmem:[%s476 + $0x30] sm:$0xff]
        %v488 = vld [vmem:[%s476 + $0x38] sm:$0xff]
        %v489 = vld [vmem:[%s476 + $0x40] sm:$0xff]
        %v490 = vld [vmem:[%s476 + $0x48] sm:$0xff]
        %v491 = vld [vmem:[%s476 + $0x50] sm:$0xff]
        %v492 = vld [vmem:[%s476 + $0x58] sm:$0xff]
        %v493 = vld [vmem:[%s476 + $0x60] sm:$0xff]
        %v494 = vld [vmem:[%s476 + $0x68] sm:$0xff]
        %v495 = vld [vmem:[%s476 + $0x70] sm:$0xff]
        %v496 = vld [vmem:[%s476 + $0x78] sm:$0xff]
        %v497 = vld [vmem:[%s476 + $0x80] sm:$0xff]
        %v498 = vld [vmem:[%s476 + $0x88] sm:$0xff]
        %v499 = vld [vmem:[%s476 + $0x90] sm:$0xff]
        %v500 = vld [vmem:[%s476 + $0x98] sm:$0xff]
        %v501 = vld [vmem:[%s476 + $0xa0] sm:$0xff]
        %v502 = vld [vmem:[%s476 + $0xa8] sm:$0xff]
        %v503 = vld [vmem:[%s476 + $0xb0] sm:$0xff]
        %v504 = vld [vmem:[%s476 + $0xb8] sm:$0xff]
        %v505 = vld [vmem:[%s476 + $0xc0] sm:$0xff]
        %v506 = vld [vmem:[%s476 + $0xc8] sm:$0xff]
        %v507 = vld [vmem:[%s476 + $0xd0] sm:$0xff]
        %v508 = vld [vmem:[%s476 + $0xd8] sm:$0xff]
        %v509 = vld [vmem:[%s476 + $0xe0] sm:$0xff]
        %v510 = vld [vmem:[%s476 + $0xe8] sm:$0xff]
        %v511 = vld [vmem:[%s476 + $0xf0] sm:$0xff]
        %v512 = vld [vmem:[%s476 + $0xf8] sm:$0xff]
        %v513 = vlaneseq
        %v514 = vshrl.u32 %v513, 7
        %v515 = vadd.s32 %v514, 8
        %v516 = vadd.s32 %v514, 16
        %v517 = vadd.s32 %v514, 24
        %v518 = vadd.s32 %v514, 32
        %v519 = vadd.s32 %v514, 40
        %v520 = vadd.s32 %v514, 48
        %v521 = vadd.s32 %v514, 56
        %v522 = vadd.s32 %v514, 64
        %v523 = vadd.s32 %v514, 72
        %v524 = vadd.s32 %v514, 80
        %v525 = vadd.s32 %v514, 88
        %v526 = vadd.s32 %v514, 96
        %v527 = vadd.s32 %v514, 104
        %v528 = vadd.s32 %v514, 112
        %v529 = vadd.s32 %v514, 120
        %v530 = vadd.s32 %v514, 128
        %v531 = vadd.s32 %v514, 136
        %v532 = vadd.s32 %v514, 144
        %v533 = vadd.s32 %v514, 152
        %v534 = vadd.s32 %v514, 160
        %v535 = vadd.s32 %v514, 168
        %v536 = vadd.s32 %v514, 176
        %v537 = vadd.s32 %v514, 184
        %v538 = vadd.s32 %v514, 192
        %v539 = vadd.s32 %v514, 200
        %v540 = vadd.s32 %v514, 208
        %v541 = vadd.s32 %v514, 216
        %v542 = vadd.s32 %v514, 224
        %v543 = vadd.s32 %v514, 232
        %v544 = vadd.s32 %v514, 240
        %v545 = vadd.s32 %v514, 248
        %vm546 = vcmp.lt.s32.totalorder %v514, 0
        %v547 = vsub.s32 0, %v514
        %v548 = vsel %vm546, %v547, %v514
        %v549 = vshrl.u32 %v548, 4
        %v550 = vand.u32 %v548, 15
        %v551 = vsub.s32 0, %v550
        %v552 = vsel %vm546, %v551, %v550
        %vm553 = vcmp.lt.s32.totalorder %v515, 0
        %v554 = vsub.s32 0, %v515
        %v555 = vsel %vm553, %v554, %v515
        %v556 = vshrl.u32 %v555, 4
        %v557 = vand.u32 %v555, 15
        %v558 = vsub.s32 0, %v557
        %v559 = vsel %vm553, %v558, %v557
        %vm560 = vcmp.lt.s32.totalorder %v516, 0
        %v561 = vsub.s32 0, %v516
        %v562 = vsel %vm560, %v561, %v516
        %v563 = vshrl.u32 %v562, 4
        %v564 = vand.u32 %v562, 15
        %v565 = vsub.s32 0, %v564
        %v566 = vsel %vm560, %v565, %v564
        %vm567 = vcmp.lt.s32.totalorder %v517, 0
        %v568 = vsub.s32 0, %v517
        %v569 = vsel %vm567, %v568, %v517
        %v570 = vshrl.u32 %v569, 4
        %v571 = vand.u32 %v569, 15
        %v572 = vsub.s32 0, %v571
        %v573 = vsel %vm567, %v572, %v571
        %vm574 = vcmp.lt.s32.totalorder %v518, 0
        %v575 = vsub.s32 0, %v518
        %v576 = vsel %vm574, %v575, %v518
        %v577 = vshrl.u32 %v576, 4
        %v578 = vand.u32 %v576, 15
        %v579 = vsub.s32 0, %v578
        %v580 = vsel %vm574, %v579, %v578
        %vm581 = vcmp.lt.s32.totalorder %v519, 0
        %v582 = vsub.s32 0, %v519
        %v583 = vsel %vm581, %v582, %v519
        %v584 = vshrl.u32 %v583, 4
        %v585 = vand.u32 %v583, 15
        %v586 = vsub.s32 0, %v585
        %v587 = vsel %vm581, %v586, %v585
        %vm588 = vcmp.lt.s32.totalorder %v520, 0
        %v589 = vsub.s32 0, %v520
        %v590 = vsel %vm588, %v589, %v520
        %v591 = vshrl.u32 %v590, 4
        %v592 = vand.u32 %v590, 15
        %v593 = vsub.s32 0, %v592
        %v594 = vsel %vm588, %v593, %v592
        %vm595 = vcmp.lt.s32.totalorder %v521, 0
        %v596 = vsub.s32 0, %v521
        %v597 = vsel %vm595, %v596, %v521
        %v598 = vshrl.u32 %v597, 4
        %v599 = vand.u32 %v597, 15
        %v600 = vsub.s32 0, %v599
        %v601 = vsel %vm595, %v600, %v599
        %vm602 = vcmp.lt.s32.totalorder %v522, 0
        %v603 = vsub.s32 0, %v522
        %v604 = vsel %vm602, %v603, %v522
        %v605 = vshrl.u32 %v604, 4
        %v606 = vand.u32 %v604, 15
        %v607 = vsub.s32 0, %v606
        %v608 = vsel %vm602, %v607, %v606
        %vm609 = vcmp.lt.s32.totalorder %v523, 0
        %v610 = vsub.s32 0, %v523
        %v611 = vsel %vm609, %v610, %v523
        %v612 = vshrl.u32 %v611, 4
        %v613 = vand.u32 %v611, 15
        %v614 = vsub.s32 0, %v613
        %v615 = vsel %vm609, %v614, %v613
        %vm616 = vcmp.lt.s32.totalorder %v524, 0
        %v617 = vsub.s32 0, %v524
        %v618 = vsel %vm616, %v617, %v524
        %v619 = vshrl.u32 %v618, 4
        %v620 = vand.u32 %v618, 15
        %v621 = vsub.s32 0, %v620
        %v622 = vsel %vm616, %v621, %v620
        %vm623 = vcmp.lt.s32.totalorder %v525, 0
        %v624 = vsub.s32 0, %v525
        %v625 = vsel %vm623, %v624, %v525
        %v626 = vshrl.u32 %v625, 4
        %v627 = vand.u32 %v625, 15
        %v628 = vsub.s32 0, %v627
        %v629 = vsel %vm623, %v628, %v627
        %vm630 = vcmp.lt.s32.totalorder %v526, 0
        %v631 = vsub.s32 0, %v526
        %v632 = vsel %vm630, %v631, %v526
        %v633 = vshrl.u32 %v632, 4
        %v634 = vand.u32 %v632, 15
        %v635 = vsub.s32 0, %v634
        %v636 = vsel %vm630, %v635, %v634
        %vm637 = vcmp.lt.s32.totalorder %v527, 0
        %v638 = vsub.s32 0, %v527
        %v639 = vsel %vm637, %v638, %v527
        %v640 = vshrl.u32 %v639, 4
        %v641 = vand.u32 %v639, 15
        %v642 = vsub.s32 0, %v641
        %v643 = vsel %vm637, %v642, %v641
        %vm644 = vcmp.lt.s32.totalorder %v528, 0
        %v645 = vsub.s32 0, %v528
        %v646 = vsel %vm644, %v645, %v528
        %v647 = vshrl.u32 %v646, 4
        %v648 = vand.u32 %v646, 15
        %v649 = vsub.s32 0, %v648
        %v650 = vsel %vm644, %v649, %v648
        %vm651 = vcmp.lt.s32.totalorder %v529, 0
        %v652 = vsub.s32 0, %v529
        %v653 = vsel %vm651, %v652, %v529
        %v654 = vshrl.u32 %v653, 4
        %v655 = vand.u32 %v653, 15
        %v656 = vsub.s32 0, %v655
        %v657 = vsel %vm651, %v656, %v655
        %vm658 = vcmp.lt.s32.totalorder %v530, 0
        %v659 = vsub.s32 0, %v530
        %v660 = vsel %vm658, %v659, %v530
        %v661 = vshrl.u32 %v660, 4
        %v662 = vand.u32 %v660, 15
        %v663 = vsub.s32 0, %v662
        %v664 = vsel %vm658, %v663, %v662
        %vm665 = vcmp.lt.s32.totalorder %v531, 0
        %v666 = vsub.s32 0, %v531
        %v667 = vsel %vm665, %v666, %v531
        %v668 = vshrl.u32 %v667, 4
        %v669 = vand.u32 %v667, 15
        %v670 = vsub.s32 0, %v669
        %v671 = vsel %vm665, %v670, %v669
        %vm672 = vcmp.lt.s32.totalorder %v532, 0
        %v673 = vsub.s32 0, %v532
        %v674 = vsel %vm672, %v673, %v532
        %v675 = vshrl.u32 %v674, 4
        %v676 = vand.u32 %v674, 15
        %v677 = vsub.s32 0, %v676
        %v678 = vsel %vm672, %v677, %v676
        %vm679 = vcmp.lt.s32.totalorder %v533, 0
        %v680 = vsub.s32 0, %v533
        %v681 = vsel %vm679, %v680, %v533
        %v682 = vshrl.u32 %v681, 4
        %v683 = vand.u32 %v681, 15
        %v684 = vsub.s32 0, %v683
        %v685 = vsel %vm679, %v684, %v683
        %vm686 = vcmp.lt.s32.totalorder %v534, 0
        %v687 = vsub.s32 0, %v534
        %v688 = vsel %vm686, %v687, %v534
        %v689 = vshrl.u32 %v688, 4
        %v690 = vand.u32 %v688, 15
        %v691 = vsub.s32 0, %v690
        %v692 = vsel %vm686, %v691, %v690
        %vm693 = vcmp.lt.s32.totalorder %v535, 0
        %v694 = vsub.s32 0, %v535
        %v695 = vsel %vm693, %v694, %v535
        %v696 = vshrl.u32 %v695, 4
        %v697 = vand.u32 %v695, 15
        %v698 = vsub.s32 0, %v697
        %v699 = vsel %vm693, %v698, %v697
        %vm700 = vcmp.lt.s32.totalorder %v536, 0
        %v701 = vsub.s32 0, %v536
        %v702 = vsel %vm700, %v701, %v536
        %v703 = vshrl.u32 %v702, 4
        %v704 = vand.u32 %v702, 15
        %v705 = vsub.s32 0, %v704
        %v706 = vsel %vm700, %v705, %v704
        %vm707 = vcmp.lt.s32.totalorder %v537, 0
        %v708 = vsub.s32 0, %v537
        %v709 = vsel %vm707, %v708, %v537
        %v710 = vshrl.u32 %v709, 4
        %v711 = vand.u32 %v709, 15
        %v712 = vsub.s32 0, %v711
        %v713 = vsel %vm707, %v712, %v711
        %vm714 = vcmp.lt.s32.totalorder %v538, 0
        %v715 = vsub.s32 0, %v538
        %v716 = vsel %vm714, %v715, %v538
        %v717 = vshrl.u32 %v716, 4
        %v718 = vand.u32 %v716, 15
        %v719 = vsub.s32 0, %v718
        %v720 = vsel %vm714, %v719, %v718
        %vm721 = vcmp.lt.s32.totalorder %v539, 0
        %v722 = vsub.s32 0, %v539
        %v723 = vsel %vm721, %v722, %v539
        %v724 = vshrl.u32 %v723, 4
        %v725 = vand.u32 %v723, 15
        %v726 = vsub.s32 0, %v725
        %v727 = vsel %vm721, %v726, %v725
        %vm728 = vcmp.lt.s32.totalorder %v540, 0
        %v729 = vsub.s32 0, %v540
        %v730 = vsel %vm728, %v729, %v540
        %v731 = vshrl.u32 %v730, 4
        %v732 = vand.u32 %v730, 15
        %v733 = vsub.s32 0, %v732
        %v734 = vsel %vm728, %v733, %v732
        %vm735 = vcmp.lt.s32.totalorder %v541, 0
        %v736 = vsub.s32 0, %v541
        %v737 = vsel %vm735, %v736, %v541
        %v738 = vshrl.u32 %v737, 4
        %v739 = vand.u32 %v737, 15
        %v740 = vsub.s32 0, %v739
        %v741 = vsel %vm735, %v740, %v739
        %vm742 = vcmp.lt.s32.totalorder %v542, 0
        %v743 = vsub.s32 0, %v542
        %v744 = vsel %vm742, %v743, %v542
        %v745 = vshrl.u32 %v744, 4
        %v746 = vand.u32 %v744, 15
        %v747 = vsub.s32 0, %v746
        %v748 = vsel %vm742, %v747, %v746
        %vm749 = vcmp.lt.s32.totalorder %v543, 0
        %v750 = vsub.s32 0, %v543
        %v751 = vsel %vm749, %v750, %v543
        %v752 = vshrl.u32 %v751, 4
        %v753 = vand.u32 %v751, 15
        %v754 = vsub.s32 0, %v753
        %v755 = vsel %vm749, %v754, %v753
        %vm756 = vcmp.lt.s32.totalorder %v544, 0
        %v757 = vsub.s32 0, %v544
        %v758 = vsel %vm756, %v757, %v544
        %v759 = vshrl.u32 %v758, 4
        %v760 = vand.u32 %v758, 15
        %v761 = vsub.s32 0, %v760
        %v762 = vsel %vm756, %v761, %v760
        %vm763 = vcmp.lt.s32.totalorder %v545, 0
        %v764 = vsub.s32 0, %v545
        %v765 = vsel %vm763, %v764, %v545
        %v766 = vshrl.u32 %v765, 4
        %v767 = vand.u32 %v765, 15
        %v768 = vsub.s32 0, %v767
        %v769 = vsel %vm763, %v768, %v767
        %vm770 = vcmp.ne.s32.totalorder %v552, 0
        %vm771 = vcmp.ne.s32.totalorder %v559, 0
        %vm772 = vcmp.ne.s32.totalorder %v566, 0
        %vm773 = vcmp.ne.s32.totalorder %v573, 0
        %vm774 = vcmp.ne.s32.totalorder %v580, 0
        %vm775 = vcmp.ne.s32.totalorder %v587, 0
        %vm776 = vcmp.ne.s32.totalorder %v594, 0
        %vm777 = vcmp.ne.s32.totalorder %v601, 0
        %vm778 = vcmp.ne.s32.totalorder %v608, 0
        %vm779 = vcmp.ne.s32.totalorder %v615, 0
        %vm780 = vcmp.ne.s32.totalorder %v622, 0
        %vm781 = vcmp.ne.s32.totalorder %v629, 0
        %vm782 = vcmp.ne.s32.totalorder %v636, 0
        %vm783 = vcmp.ne.s32.totalorder %v643, 0
        %vm784 = vcmp.ne.s32.totalorder %v650, 0
        %vm785 = vcmp.ne.s32.totalorder %v657, 0
        %vm786 = vcmp.ne.s32.totalorder %v664, 0
        %vm787 = vcmp.ne.s32.totalorder %v671, 0
        %vm788 = vcmp.ne.s32.totalorder %v678, 0
        %vm789 = vcmp.ne.s32.totalorder %v685, 0
        %vm790 = vcmp.ne.s32.totalorder %v692, 0
        %vm791 = vcmp.ne.s32.totalorder %v699, 0
        %vm792 = vcmp.ne.s32.totalorder %v706, 0
        %vm793 = vcmp.ne.s32.totalorder %v713, 0
        %vm794 = vcmp.ne.s32.totalorder %v720, 0
        %vm795 = vcmp.ne.s32.totalorder %v727, 0
        %vm796 = vcmp.ne.s32.totalorder %v734, 0
        %vm797 = vcmp.ne.s32.totalorder %v741, 0
        %vm798 = vcmp.ne.s32.totalorder %v748, 0
        %vm799 = vcmp.ne.s32.totalorder %v755, 0
        %vm800 = vcmp.ne.s32.totalorder %v762, 0
        %vm801 = vcmp.ne.s32.totalorder %v769, 0
        %vm802 = vcmp.lt.s32.totalorder %v552, 0
        %vm803 = vcmp.lt.s32.totalorder %v559, 0
        %vm804 = vcmp.lt.s32.totalorder %v566, 0
        %vm805 = vcmp.lt.s32.totalorder %v573, 0
        %vm806 = vcmp.lt.s32.totalorder %v580, 0
        %vm807 = vcmp.lt.s32.totalorder %v587, 0
        %vm808 = vcmp.lt.s32.totalorder %v594, 0
        %vm809 = vcmp.lt.s32.totalorder %v601, 0
        %vm810 = vcmp.lt.s32.totalorder %v608, 0
        %vm811 = vcmp.lt.s32.totalorder %v615, 0
        %vm812 = vcmp.lt.s32.totalorder %v622, 0
        %vm813 = vcmp.lt.s32.totalorder %v629, 0
        %vm814 = vcmp.lt.s32.totalorder %v636, 0
        %vm815 = vcmp.lt.s32.totalorder %v643, 0
        %vm816 = vcmp.lt.s32.totalorder %v650, 0
        %vm817 = vcmp.lt.s32.totalorder %v657, 0
        %vm818 = vcmp.lt.s32.totalorder %v664, 0
        %vm819 = vcmp.lt.s32.totalorder %v671, 0
        %vm820 = vcmp.lt.s32.totalorder %v678, 0
        %vm821 = vcmp.lt.s32.totalorder %v685, 0
        %vm822 = vcmp.lt.s32.totalorder %v692, 0
        %vm823 = vcmp.lt.s32.totalorder %v699, 0
        %vm824 = vcmp.lt.s32.totalorder %v706, 0
        %vm825 = vcmp.lt.s32.totalorder %v713, 0
        %vm826 = vcmp.lt.s32.totalorder %v720, 0
        %vm827 = vcmp.lt.s32.totalorder %v727, 0
        %vm828 = vcmp.lt.s32.totalorder %v734, 0
        %vm829 = vcmp.lt.s32.totalorder %v741, 0
        %vm830 = vcmp.lt.s32.totalorder %v748, 0
        %vm831 = vcmp.lt.s32.totalorder %v755, 0
        %vm832 = vcmp.lt.s32.totalorder %v762, 0
        %vm833 = vcmp.lt.s32.totalorder %v769, 0
        %vm834 = vmand %vm802, %vm770
        %vm835 = vmand %vm803, %vm771
        %vm836 = vmand %vm804, %vm772
        %vm837 = vmand %vm805, %vm773
        %vm838 = vmand %vm806, %vm774
        %vm839 = vmand %vm807, %vm775
        %vm840 = vmand %vm808, %vm776
        %vm841 = vmand %vm809, %vm777
        %vm842 = vmand %vm810, %vm778
        %vm843 = vmand %vm811, %vm779
        %vm844 = vmand %vm812, %vm780
        %vm845 = vmand %vm813, %vm781
        %vm846 = vmand %vm814, %vm782
        %vm847 = vmand %vm815, %vm783
        %vm848 = vmand %vm816, %vm784
        %vm849 = vmand %vm817, %vm785
        %vm850 = vmand %vm818, %vm786
        %vm851 = vmand %vm819, %vm787
        %vm852 = vmand %vm820, %vm788
        %vm853 = vmand %vm821, %vm789
        %vm854 = vmand %vm822, %vm790
        %vm855 = vmand %vm823, %vm791
        %vm856 = vmand %vm824, %vm792
        %vm857 = vmand %vm825, %vm793
        %vm858 = vmand %vm826, %vm794
        %vm859 = vmand %vm827, %vm795
        %vm860 = vmand %vm828, %vm796
        %vm861 = vmand %vm829, %vm797
        %vm862 = vmand %vm830, %vm798
        %vm863 = vmand %vm831, %vm799
        %vm864 = vmand %vm832, %vm800
        %vm865 = vmand %vm833, %vm801
        %v866 = vadd.s32 %v552, 16
        %v867 = vadd.s32 %v559, 16
        %v868 = vadd.s32 %v566, 16
        %v869 = vadd.s32 %v573, 16
        %v870 = vadd.s32 %v580, 16
        %v871 = vadd.s32 %v587, 16
        %v872 = vadd.s32 %v594, 16
        %v873 = vadd.s32 %v601, 16
        %v874 = vadd.s32 %v608, 16
        %v875 = vadd.s32 %v615, 16
        %v876 = vadd.s32 %v622, 16
        %v877 = vadd.s32 %v629, 16
        %v878 = vadd.s32 %v636, 16
        %v879 = vadd.s32 %v643, 16
        %v880 = vadd.s32 %v650, 16
        %v881 = vadd.s32 %v657, 16
        %v882 = vadd.s32 %v664, 16
        %v883 = vadd.s32 %v671, 16
        %v884 = vadd.s32 %v678, 16
        %v885 = vadd.s32 %v685, 16
        %v886 = vadd.s32 %v692, 16
        %v887 = vadd.s32 %v699, 16
        %v888 = vadd.s32 %v706, 16
        %v889 = vadd.s32 %v713, 16
        %v890 = vadd.s32 %v720, 16
        %v891 = vadd.s32 %v727, 16
        %v892 = vadd.s32 %v734, 16
        %v893 = vadd.s32 %v741, 16
        %v894 = vadd.s32 %v748, 16
        %v895 = vadd.s32 %v755, 16
        %v896 = vadd.s32 %v762, 16
        %v897 = vadd.s32 %v769, 16
        %v898 = vsel %vm834, %v866, %v552
        %v899 = vsel %vm835, %v867, %v559
        %v900 = vsel %vm836, %v868, %v566
        %v901 = vsel %vm837, %v869, %v573
        %v902 = vsel %vm838, %v870, %v580
        %v903 = vsel %vm839, %v871, %v587
        %v904 = vsel %vm840, %v872, %v594
        %v905 = vsel %vm841, %v873, %v601
        %v906 = vsel %vm842, %v874, %v608
        %v907 = vsel %vm843, %v875, %v615
        %v908 = vsel %vm844, %v876, %v622
        %v909 = vsel %vm845, %v877, %v629
        %v910 = vsel %vm846, %v878, %v636
        %v911 = vsel %vm847, %v879, %v643
        %v912 = vsel %vm848, %v880, %v650
        %v913 = vsel %vm849, %v881, %v657
        %v914 = vsel %vm850, %v882, %v664
        %v915 = vsel %vm851, %v883, %v671
        %v916 = vsel %vm852, %v884, %v678
        %v917 = vsel %vm853, %v885, %v685
        %v918 = vsel %vm854, %v886, %v692
        %v919 = vsel %vm855, %v887, %v699
        %v920 = vsel %vm856, %v888, %v706
        %v921 = vsel %vm857, %v889, %v713
        %v922 = vsel %vm858, %v890, %v720
        %v923 = vsel %vm859, %v891, %v727
        %v924 = vsel %vm860, %v892, %v734
        %v925 = vsel %vm861, %v893, %v741
        %v926 = vsel %vm862, %v894, %v748
        %v927 = vsel %vm863, %v895, %v755
        %v928 = vsel %vm864, %v896, %v762
        %v929 = vsel %vm865, %v897, %v769
        %vm930 = vcmp.ne.s32.totalorder %v898, 0
        %vm931 = vcmp.ne.s32.totalorder %v899, 0
        %vm932 = vcmp.ne.s32.totalorder %v900, 0
        %vm933 = vcmp.ne.s32.totalorder %v901, 0
        %vm934 = vcmp.ne.s32.totalorder %v902, 0
        %vm935 = vcmp.ne.s32.totalorder %v903, 0
        %vm936 = vcmp.ne.s32.totalorder %v904, 0
        %vm937 = vcmp.ne.s32.totalorder %v905, 0
        %vm938 = vcmp.ne.s32.totalorder %v906, 0
        %vm939 = vcmp.ne.s32.totalorder %v907, 0
        %vm940 = vcmp.ne.s32.totalorder %v908, 0
        %vm941 = vcmp.ne.s32.totalorder %v909, 0
        %vm942 = vcmp.ne.s32.totalorder %v910, 0
        %vm943 = vcmp.ne.s32.totalorder %v911, 0
        %vm944 = vcmp.ne.s32.totalorder %v912, 0
        %vm945 = vcmp.ne.s32.totalorder %v913, 0
        %vm946 = vcmp.ne.s32.totalorder %v914, 0
        %vm947 = vcmp.ne.s32.totalorder %v915, 0
        %vm948 = vcmp.ne.s32.totalorder %v916, 0
        %vm949 = vcmp.ne.s32.totalorder %v917, 0
        %vm950 = vcmp.ne.s32.totalorder %v918, 0
        %vm951 = vcmp.ne.s32.totalorder %v919, 0
        %vm952 = vcmp.ne.s32.totalorder %v920, 0
        %vm953 = vcmp.ne.s32.totalorder %v921, 0
        %vm954 = vcmp.ne.s32.totalorder %v922, 0
        %vm955 = vcmp.ne.s32.totalorder %v923, 0
        %vm956 = vcmp.ne.s32.totalorder %v924, 0
        %vm957 = vcmp.ne.s32.totalorder %v925, 0
        %vm958 = vcmp.ne.s32.totalorder %v926, 0
        %vm959 = vcmp.ne.s32.totalorder %v927, 0
        %vm960 = vcmp.ne.s32.totalorder %v928, 0
        %vm961 = vcmp.ne.s32.totalorder %v929, 0
        %vm962 = vcmp.ne.s32.totalorder %v898, 15
        %vm963 = vcmp.ne.s32.totalorder %v899, 15
        %vm964 = vcmp.ne.s32.totalorder %v900, 15
        %vm965 = vcmp.ne.s32.totalorder %v901, 15
        %vm966 = vcmp.ne.s32.totalorder %v902, 15
        %vm967 = vcmp.ne.s32.totalorder %v903, 15
        %vm968 = vcmp.ne.s32.totalorder %v904, 15
        %vm969 = vcmp.ne.s32.totalorder %v905, 15
        %vm970 = vcmp.ne.s32.totalorder %v906, 15
        %vm971 = vcmp.ne.s32.totalorder %v907, 15
        %vm972 = vcmp.ne.s32.totalorder %v908, 15
        %vm973 = vcmp.ne.s32.totalorder %v909, 15
        %vm974 = vcmp.ne.s32.totalorder %v910, 15
        %vm975 = vcmp.ne.s32.totalorder %v911, 15
        %vm976 = vcmp.ne.s32.totalorder %v912, 15
        %vm977 = vcmp.ne.s32.totalorder %v913, 15
        %vm978 = vcmp.ne.s32.totalorder %v914, 15
        %vm979 = vcmp.ne.s32.totalorder %v915, 15
        %vm980 = vcmp.ne.s32.totalorder %v916, 15
        %vm981 = vcmp.ne.s32.totalorder %v917, 15
        %vm982 = vcmp.ne.s32.totalorder %v918, 15
        %vm983 = vcmp.ne.s32.totalorder %v919, 15
        %vm984 = vcmp.ne.s32.totalorder %v920, 15
        %vm985 = vcmp.ne.s32.totalorder %v921, 15
        %vm986 = vcmp.ne.s32.totalorder %v922, 15
        %vm987 = vcmp.ne.s32.totalorder %v923, 15
        %vm988 = vcmp.ne.s32.totalorder %v924, 15
        %vm989 = vcmp.ne.s32.totalorder %v925, 15
        %vm990 = vcmp.ne.s32.totalorder %v926, 15
        %vm991 = vcmp.ne.s32.totalorder %v927, 15
        %vm992 = vcmp.ne.s32.totalorder %v928, 15
        %vm993 = vcmp.ne.s32.totalorder %v929, 15
        %v994 = vld [vmem:[%s1] sm:$0xff]
        %v995 = vld [vmem:[%s1 + $0x8] sm:$0xff]
        %v996 = vld [vmem:[%s2] sm:$0xff]
        %v997 = vld [vmem:[%s3] sm:$0x1]
        %v998 = vld [vmem:[%s4] sm:$0x1]
        %vm999 = vcmask 130048
        %v1000 = vsel %vm999, %v481, 0.0
        %v1001 = vsel %vm999, %v482, 0.0
        %v1002 = vadd.f32 %v1000, %v1001
        %v1003 = vsel %vm999, %v483, 0.0
        %v1004 = vadd.f32 %v1002, %v1003
        %v1005 = vsel %vm999, %v484, 0.0
        %v1006 = vadd.f32 %v1004, %v1005
        %v1007 = vsel %vm999, %v485, 0.0
        %v1008 = vadd.f32 %v1006, %v1007
        %v1009 = vsel %vm999, %v486, 0.0
        %v1010 = vadd.f32 %v1008, %v1009
        %v1011 = vsel %vm999, %v487, 0.0
        %v1012 = vadd.f32 %v1010, %v1011
        %v1013 = vsel %vm999, %v488, 0.0
        %v1014 = vadd.f32 %v1012, %v1013
        %v1015 = vsel %vm999, %v489, 0.0
        %v1016 = vadd.f32 %v1014, %v1015
        %v1017 = vsel %vm999, %v490, 0.0
        %v1018 = vadd.f32 %v1016, %v1017
        %v1019 = vsel %vm999, %v491, 0.0
        %v1020 = vadd.f32 %v1018, %v1019
        %v1021 = vsel %vm999, %v492, 0.0
        %v1022 = vadd.f32 %v1020, %v1021
        %v1023 = vsel %vm999, %v493, 0.0
        %v1024 = vadd.f32 %v1022, %v1023
        %v1025 = vsel %vm999, %v494, 0.0
        %v1026 = vadd.f32 %v1024, %v1025
        %v1027 = vsel %vm999, %v495, 0.0
        %v1028 = vadd.f32 %v1026, %v1027
        %v1029 = vsel %vm999, %v496, 0.0
        %v1030 = vadd.f32 %v1028, %v1029
        %v1031 = vsel %vm999, %v497, 0.0
        %v1032 = vadd.f32 %v1030, %v1031
        %v1033 = vsel %vm999, %v498, 0.0
        %v1034 = vadd.f32 %v1032, %v1033
        %v1035 = vsel %vm999, %v499, 0.0
        %v1036 = vadd.f32 %v1034, %v1035
        %v1037 = vsel %vm999, %v500, 0.0
        %v1038 = vadd.f32 %v1036, %v1037
        %v1039 = vsel %vm999, %v501, 0.0
        %v1040 = vadd.f32 %v1038, %v1039
        %v1041 = vsel %vm999, %v502, 0.0
        %v1042 = vadd.f32 %v1040, %v1041
        %v1043 = vsel %vm999, %v503, 0.0
        %v1044 = vadd.f32 %v1042, %v1043
        %v1045 = vsel %vm999, %v504, 0.0
        %v1046 = vadd.f32 %v1044, %v1045
        %v1047 = vsel %vm999, %v505, 0.0
        %v1048 = vadd.f32 %v1046, %v1047
        %v1049 = vsel %vm999, %v506, 0.0
        %v1050 = vadd.f32 %v1048, %v1049
        %v1051 = vsel %vm999, %v507, 0.0
        %v1052 = vadd.f32 %v1050, %v1051
        %v1053 = vsel %vm999, %v508, 0.0
        %v1054 = vadd.f32 %v1052, %v1053
        %v1055 = vsel %vm999, %v509, 0.0
        %v1056 = vadd.f32 %v1054, %v1055
        %v1057 = vsel %vm999, %v510, 0.0
        %v1058 = vadd.f32 %v1056, %v1057
        %v1059 = vsel %vm999, %v511, 0.0
        %v1060 = vadd.f32 %v1058, %v1059
        %v1061 = vsel %vm999, %v512, 0.0
        %v1062 = vadd.f32 %v1060, %v1061
        %v1063 = vrot.slane %v1062, 4
        %v1064 = vadd.f32 %v1062, %v1063
        %v1065 = vrot.slane %v1064, 2
        %v1066 = vadd.f32 %v1064, %v1065
        %v1067 = vrot.slane %v1066, 1
        %v1068 = vadd.f32 %v1066, %v1067
        %v1070 = vsel %vm999, %v1068, 0
        %1072 = vmatprep.subr.mxu0 0.0
        %1073 = vmatpush1.msra.mxu0 %v994
        %1074 = vmatprep.subr.mxu0 0.0
        %1075 = vmatpush1.msra.mxu0 %v995
        %1076 = vmatprep.subr.mxu0 0.0
        %1077 = vmatpush1.msra.mxu0 0.0
        %1078 = vmatprep.subr.mxu0 0.0
        %1079 = vmatpush1.msra.mxu0 0.0
        %1080 = vmatprep.subr.mxu0 0.0
        %1081 = vmatpush1.msra.mxu0 0.0
        %1082 = vmatprep.subr.mxu0 0.0
        %1083 = vmatpush1.msra.mxu0 0.0
        %1084 = vmatprep.subr.mxu0 0.0
        %1085 = vmatpush1.msra.mxu0 0.0
        %1086 = vmatprep.subr.mxu0 0.0
        %1087 = vmatpush1.msra.mxu0 0.0
        %1088 = vmatprep.subr.mxu0 0.0
        %1089 = vmatpush1.msra.mxu0 0.0
        %1090 = vmatprep.subr.mxu0 0.0
        %1091 = vmatpush1.msra.mxu0 0.0
        %1092 = vmatprep.subr.mxu0 0.0
        %1093 = vmatpush1.msra.mxu0 0.0
        %1094 = vmatprep.subr.mxu0 0.0
        %1095 = vmatpush1.msra.mxu0 0.0
        %1096 = vmatprep.subr.mxu0 0.0
        %1097 = vmatpush1.msra.mxu0 0.0
        %1098 = vmatprep.subr.mxu0 0.0
        %1099 = vmatpush1.msra.mxu0 0.0
        %1100 = vmatprep.subr.mxu0 0.0
        %1101 = vmatpush1.msra.mxu0 0.0
        %1102 = vmatprep.subr.mxu0 0.0
        %1103 = vmatpush1.msra.mxu0 0.0
        %1104 = vmatprep.subr.mxu0 0.0
        %1105 = vmatpush1.msra.mxu0 0.0
        %1106 = vmatprep.subr.mxu0 0.0
        %1107 = vmatpush1.msra.mxu0 0.0
        %1108 = vmatprep.subr.mxu0 0.0
        %1109 = vmatpush1.msra.mxu0 0.0
        %1110 = vmatprep.subr.mxu0 0.0
        %1111 = vmatpush1.msra.mxu0 0.0
        %1112 = vmatprep.subr.mxu0 0.0
        %1113 = vmatpush1.msra.mxu0 0.0
        %1114 = vmatprep.subr.mxu0 0.0
        %1115 = vmatpush1.msra.mxu0 0.0
        %1116 = vmatprep.subr.mxu0 0.0
        %1117 = vmatpush1.msra.mxu0 0.0
        %1118 = vmatprep.subr.mxu0 0.0
        %1119 = vmatpush1.msra.mxu0 0.0
        %1120 = vmatprep.subr.mxu0 0.0
        %1121 = vmatpush1.msra.mxu0 0.0
        %1122 = vmatprep.subr.mxu0 0.0
        %1123 = vmatpush1.msra.mxu0 0.0
        %1124 = vmatprep.subr.mxu0 0.0
        %1125 = vmatpush1.msra.mxu0 0.0
        %1126 = vmatprep.subr.mxu0 0.0
        %1127 = vmatpush1.msra.mxu0 0.0
        %1128 = vmatprep.subr.mxu0 0.0
        %1129 = vmatpush1.msra.mxu0 0.0
        %1130 = vmatprep.subr.mxu0 0.0
        %1131 = vmatpush1.msra.mxu0 0.0
        %1132 = vmatprep.subr.mxu0 0.0
        %1133 = vmatpush1.msra.mxu0 0.0
        %1134 = vmatprep.subr.mxu0 0.0
        %1135 = vmatpush1.msra.mxu0 0.0
        %1136 = vmatprep.mubr.f32.mxu0 0.0
        %1137 = vmatmul.mubr.f32.gmra.mrb[0].mxu0 %v1070
        %v1138 = vpop.f32.mrb[0].mxu0
        %v1139 = vadd.f32 0.0, %v1138
        %v1140 = vpop.f32.mrb[0].mxu0
        %1141 = vdwg.mxu0
        %v1142 = vmul.f32 %v1139, 0.001953125
        %vm1143 = vcmask 64512
        %v1145 = vsel %vm1143, %v1142, 0
        %1147 = vmatprep.subr.mxu0 0.0
        %1148 = vmatpush1.msra.mxu0 %v996
        %1149 = vmatprep.subr.mxu0 0.0
        %1150 = vmatpush1.msra.mxu0 0.0
        %1151 = vmatprep.subr.mxu0 0.0
        %1152 = vmatpush1.msra.mxu0 0.0
        %1153 = vmatprep.subr.mxu0 0.0
        %1154 = vmatpush1.msra.mxu0 0.0
        %1155 = vmatprep.subr.mxu0 0.0
        %1156 = vmatpush1.msra.mxu0 0.0
        %1157 = vmatprep.subr.mxu0 0.0
        %1158 = vmatpush1.msra.mxu0 0.0
        %1159 = vmatprep.subr.mxu0 0.0
        %1160 = vmatpush1.msra.mxu0 0.0
        %1161 = vmatprep.subr.mxu0 0.0
        %1162 = vmatpush1.msra.mxu0 0.0
        %1163 = vmatprep.subr.mxu0 0.0
        %1164 = vmatpush1.msra.mxu0 0.0
        %1165 = vmatprep.subr.mxu0 0.0
        %1166 = vmatpush1.msra.mxu0 0.0
        %1167 = vmatprep.subr.mxu0 0.0
        %1168 = vmatpush1.msra.mxu0 0.0
        %1169 = vmatprep.subr.mxu0 0.0
        %1170 = vmatpush1.msra.mxu0 0.0
        %1171 = vmatprep.subr.mxu0 0.0
        %1172 = vmatpush1.msra.mxu0 0.0
        %1173 = vmatprep.subr.mxu0 0.0
        %1174 = vmatpush1.msra.mxu0 0.0
        %1175 = vmatprep.subr.mxu0 0.0
        %1176 = vmatpush1.msra.mxu0 0.0
        %1177 = vmatprep.subr.mxu0 0.0
        %1178 = vmatpush1.msra.mxu0 0.0
        %1179 = vmatprep.subr.mxu0 0.0
        %1180 = vmatpush1.msra.mxu0 0.0
        %1181 = vmatprep.subr.mxu0 0.0
        %1182 = vmatpush1.msra.mxu0 0.0
        %1183 = vmatprep.subr.mxu0 0.0
        %1184 = vmatpush1.msra.mxu0 0.0
        %1185 = vmatprep.subr.mxu0 0.0
        %1186 = vmatpush1.msra.mxu0 0.0
        %1187 = vmatprep.subr.mxu0 0.0
        %1188 = vmatpush1.msra.mxu0 0.0
        %1189 = vmatprep.subr.mxu0 0.0
        %1190 = vmatpush1.msra.mxu0 0.0
        %1191 = vmatprep.subr.mxu0 0.0
        %1192 = vmatpush1.msra.mxu0 0.0
        %1193 = vmatprep.subr.mxu0 0.0
        %1194 = vmatpush1.msra.mxu0 0.0
        %1195 = vmatprep.subr.mxu0 0.0
        %1196 = vmatpush1.msra.mxu0 0.0
        %1197 = vmatprep.subr.mxu0 0.0
        %1198 = vmatpush1.msra.mxu0 0.0
        %1199 = vmatprep.subr.mxu0 0.0
        %1200 = vmatpush1.msra.mxu0 0.0
        %1201 = vmatprep.subr.mxu0 0.0
        %1202 = vmatpush1.msra.mxu0 0.0
        %1203 = vmatprep.subr.mxu0 0.0
        %1204 = vmatpush1.msra.mxu0 0.0
        %1205 = vmatprep.subr.mxu0 0.0
        %1206 = vmatpush1.msra.mxu0 0.0
        %1207 = vmatprep.subr.mxu0 0.0
        %1208 = vmatpush1.msra.mxu0 0.0
        %1209 = vmatprep.subr.mxu0 0.0
        %1210 = vmatpush1.msra.mxu0 0.0
        %1211 = vmatprep.mubr.f32.mxu0 0.0
        %1212 = vmatmul.mubr.f32.gmra.mrb[0].mxu0 %v1145
        %v1213 = vpop.f32.mrb[0].mxu0
        %v1214 = vadd.f32 0.0, %v1213
        %v1215 = vpop.f32.mrb[0].mxu0
        %1216 = vdwg.mxu0
        %v1217 = vlaneseq
        %v1218 = vshrl.u32 %v1217, 7
        %v1219 = vsub.s32 0, %v1218
        %v1220 = vrot.slane %v1214, %v1219
        %v1221 = vsub.f32 %v481, %v1220
        %v1222 = vsub.f32 %v482, %v1220
        %v1223 = vsub.f32 %v483, %v1220
        %v1224 = vsub.f32 %v484, %v1220
        %v1225 = vsub.f32 %v485, %v1220
        %v1226 = vsub.f32 %v486, %v1220
        %v1227 = vsub.f32 %v487, %v1220
        %v1228 = vsub.f32 %v488, %v1220
        %v1229 = vsub.f32 %v489, %v1220
        %v1230 = vsub.f32 %v490, %v1220
        %v1231 = vsub.f32 %v491, %v1220
        %v1232 = vsub.f32 %v492, %v1220
        %v1233 = vsub.f32 %v493, %v1220
        %v1234 = vsub.f32 %v494, %v1220
        %v1235 = vsub.f32 %v495, %v1220
        %v1236 = vsub.f32 %v496, %v1220
        %v1237 = vsub.f32 %v497, %v1220
        %v1238 = vsub.f32 %v498, %v1220
        %v1239 = vsub.f32 %v499, %v1220
        %v1240 = vsub.f32 %v500, %v1220
        %v1241 = vsub.f32 %v501, %v1220
        %v1242 = vsub.f32 %v502, %v1220
        %v1243 = vsub.f32 %v503, %v1220
        %v1244 = vsub.f32 %v504, %v1220
        %v1245 = vsub.f32 %v505, %v1220
        %v1246 = vsub.f32 %v506, %v1220
        %v1247 = vsub.f32 %v507, %v1220
        %v1248 = vsub.f32 %v508, %v1220
        %v1249 = vsub.f32 %v509, %v1220
        %v1250 = vsub.f32 %v510, %v1220
        %v1251 = vsub.f32 %v511, %v1220
        %v1252 = vsub.f32 %v512, %v1220
        %v1253 = vmul.f32 %v1221, %v1221
        %v1254 = vmul.f32 %v1222, %v1222
        %v1255 = vmul.f32 %v1223, %v1223
        %v1256 = vmul.f32 %v1224, %v1224
        %v1257 = vmul.f32 %v1225, %v1225
        %v1258 = vmul.f32 %v1226, %v1226
        %v1259 = vmul.f32 %v1227, %v1227
        %v1260 = vmul.f32 %v1228, %v1228
        %v1261 = vmul.f32 %v1229, %v1229
        %v1262 = vmul.f32 %v1230, %v1230
        %v1263 = vmul.f32 %v1231, %v1231
        %v1264 = vmul.f32 %v1232, %v1232
        %v1265 = vmul.f32 %v1233, %v1233
        %v1266 = vmul.f32 %v1234, %v1234
        %v1267 = vmul.f32 %v1235, %v1235
        %v1268 = vmul.f32 %v1236, %v1236
        %v1269 = vmul.f32 %v1237, %v1237
        %v1270 = vmul.f32 %v1238, %v1238
        %v1271 = vmul.f32 %v1239, %v1239
        %v1272 = vmul.f32 %v1240, %v1240
        %v1273 = vmul.f32 %v1241, %v1241
        %v1274 = vmul.f32 %v1242, %v1242
        %v1275 = vmul.f32 %v1243, %v1243
        %v1276 = vmul.f32 %v1244, %v1244
        %v1277 = vmul.f32 %v1245, %v1245
        %v1278 = vmul.f32 %v1246, %v1246
        %v1279 = vmul.f32 %v1247, %v1247
        %v1280 = vmul.f32 %v1248, %v1248
        %v1281 = vmul.f32 %v1249, %v1249
        %v1282 = vmul.f32 %v1250, %v1250
        %v1283 = vmul.f32 %v1251, %v1251
        %v1284 = vmul.f32 %v1252, %v1252
        %v1285 = vsel %vm999, %v1253, 0.0
        %v1286 = vsel %vm999, %v1254, 0.0
        %v1287 = vadd.f32 %v1285, %v1286
        %v1288 = vsel %vm999, %v1255, 0.0
        %v1289 = vadd.f32 %v1287, %v1288
        %v1290 = vsel %vm999, %v1256, 0.0
        %v1291 = vadd.f32 %v1289, %v1290
        %v1292 = vsel %vm999, %v1257, 0.0
        %v1293 = vadd.f32 %v1291, %v1292
        %v1294 = vsel %vm999, %v1258, 0.0
        %v1295 = vadd.f32 %v1293, %v1294
        %v1296 = vsel %vm999, %v1259, 0.0
        %v1297 = vadd.f32 %v1295, %v1296
        %v1298 = vsel %vm999, %v1260, 0.0
        %v1299 = vadd.f32 %v1297, %v1298
        %v1300 = vsel %vm999, %v1261, 0.0
        %v1301 = vadd.f32 %v1299, %v1300
        %v1302 = vsel %vm999, %v1262, 0.0
        %v1303 = vadd.f32 %v1301, %v1302
        %v1304 = vsel %vm999, %v1263, 0.0
        %v1305 = vadd.f32 %v1303, %v1304
        %v1306 = vsel %vm999, %v1264, 0.0
        %v1307 = vadd.f32 %v1305, %v1306
        %v1308 = vsel %vm999, %v1265, 0.0
        %v1309 = vadd.f32 %v1307, %v1308
        %v1310 = vsel %vm999, %v1266, 0.0
        %v1311 = vadd.f32 %v1309, %v1310
        %v1312 = vsel %vm999, %v1267, 0.0
        %v1313 = vadd.f32 %v1311, %v1312
        %v1314 = vsel %vm999, %v1268, 0.0
        %v1315 = vadd.f32 %v1313, %v1314
        %v1316 = vsel %vm999, %v1269, 0.0
        %v1317 = vadd.f32 %v1315, %v1316
        %v1318 = vsel %vm999, %v1270, 0.0
        %v1319 = vadd.f32 %v1317, %v1318
        %v1320 = vsel %vm999, %v1271, 0.0
        %v1321 = vadd.f32 %v1319, %v1320
        %v1322 = vsel %vm999, %v1272, 0.0
        %v1323 = vadd.f32 %v1321, %v1322
        %v1324 = vsel %vm999, %v1273, 0.0
        %v1325 = vadd.f32 %v1323, %v1324
        %v1326 = vsel %vm999, %v1274, 0.0
        %v1327 = vadd.f32 %v1325, %v1326
        %v1328 = vsel %vm999, %v1275, 0.0
        %v1329 = vadd.f32 %v1327, %v1328
        %v1330 = vsel %vm999, %v1276, 0.0
        %v1331 = vadd.f32 %v1329, %v1330
        %v1332 = vsel %vm999, %v1277, 0.0
        %v1333 = vadd.f32 %v1331, %v1332
        %v1334 = vsel %vm999, %v1278, 0.0
        %v1335 = vadd.f32 %v1333, %v1334
        %v1336 = vsel %vm999, %v1279, 0.0
        %v1337 = vadd.f32 %v1335, %v1336
        %v1338 = vsel %vm999, %v1280, 0.0
        %v1339 = vadd.f32 %v1337, %v1338
        %v1340 = vsel %vm999, %v1281, 0.0
        %v1341 = vadd.f32 %v1339, %v1340
        %v1342 = vsel %vm999, %v1282, 0.0
        %v1343 = vadd.f32 %v1341, %v1342
        %v1344 = vsel %vm999, %v1283, 0.0
        %v1345 = vadd.f32 %v1343, %v1344
        %v1346 = vsel %vm999, %v1284, 0.0
        %v1347 = vadd.f32 %v1345, %v1346
        %v1348 = vrot.slane %v1347, 4
        %v1349 = vadd.f32 %v1347, %v1348
        %v1350 = vrot.slane %v1349, 2
        %v1351 = vadd.f32 %v1349, %v1350
        %v1352 = vrot.slane %v1351, 1
        %v1353 = vadd.f32 %v1351, %v1352
        %v1355 = vsel %vm999, %v1353, 0
        %1357 = vmatprep.subr.mxu0 0.0
        %1358 = vmatpush1.msra.mxu0 %v994
        %1359 = vmatprep.subr.mxu0 0.0
        %1360 = vmatpush1.msra.mxu0 %v995
        %1361 = vmatprep.subr.mxu0 0.0
        %1362 = vmatpush1.msra.mxu0 0.0
        %1363 = vmatprep.subr.mxu0 0.0
        %1364 = vmatpush1.msra.mxu0 0.0
        %1365 = vmatprep.subr.mxu0 0.0
        %1366 = vmatpush1.msra.mxu0 0.0
        %1367 = vmatprep.subr.mxu0 0.0
        %1368 = vmatpush1.msra.mxu0 0.0
        %1369 = vmatprep.subr.mxu0 0.0
        %1370 = vmatpush1.msra.mxu0 0.0
        %1371 = vmatprep.subr.mxu0 0.0
        %1372 = vmatpush1.msra.mxu0 0.0
        %1373 = vmatprep.subr.mxu0 0.0
        %1374 = vmatpush1.msra.mxu0 0.0
        %1375 = vmatprep.subr.mxu0 0.0
        %1376 = vmatpush1.msra.mxu0 0.0
        %1377 = vmatprep.subr.mxu0 0.0
        %1378 = vmatpush1.msra.mxu0 0.0
        %1379 = vmatprep.subr.mxu0 0.0
        %1380 = vmatpush1.msra.mxu0 0.0
        %1381 = vmatprep.subr.mxu0 0.0
        %1382 = vmatpush1.msra.mxu0 0.0
        %1383 = vmatprep.subr.mxu0 0.0
        %1384 = vmatpush1.msra.mxu0 0.0
        %1385 = vmatprep.subr.mxu0 0.0
        %1386 = vmatpush1.msra.mxu0 0.0
        %1387 = vmatprep.subr.mxu0 0.0
        %1388 = vmatpush1.msra.mxu0 0.0
        %1389 = vmatprep.subr.mxu0 0.0
        %1390 = vmatpush1.msra.mxu0 0.0
        %1391 = vmatprep.subr.mxu0 0.0
        %1392 = vmatpush1.msra.mxu0 0.0
        %1393 = vmatprep.subr.mxu0 0.0
        %1394 = vmatpush1.msra.mxu0 0.0
        %1395 = vmatprep.subr.mxu0 0.0
        %1396 = vmatpush1.msra.mxu0 0.0
        %1397 = vmatprep.subr.mxu0 0.0
        %1398 = vmatpush1.msra.mxu0 0.0
        %1399 = vmatprep.subr.mxu0 0.0
        %1400 = vmatpush1.msra.mxu0 0.0
        %1401 = vmatprep.subr.mxu0 0.0
        %1402 = vmatpush1.msra.mxu0 0.0
        %1403 = vmatprep.subr.mxu0 0.0
        %1404 = vmatpush1.msra.mxu0 0.0
        %1405 = vmatprep.subr.mxu0 0.0
        %1406 = vmatpush1.msra.mxu0 0.0
        %1407 = vmatprep.subr.mxu0 0.0
        %1408 = vmatpush1.msra.mxu0 0.0
        %1409 = vmatprep.subr.mxu0 0.0
        %1410 = vmatpush1.msra.mxu0 0.0
        %1411 = vmatprep.subr.mxu0 0.0
        %1412 = vmatpush1.msra.mxu0 0.0
        %1413 = vmatprep.subr.mxu0 0.0
        %1414 = vmatpush1.msra.mxu0 0.0
        %1415 = vmatprep.subr.mxu0 0.0
        %1416 = vmatpush1.msra.mxu0 0.0
        %1417 = vmatprep.subr.mxu0 0.0
        %1418 = vmatpush1.msra.mxu0 0.0
        %1419 = vmatprep.subr.mxu0 0.0
        %1420 = vmatpush1.msra.mxu0 0.0
        %1421 = vmatprep.mubr.f32.mxu0 0.0
        %1422 = vmatmul.mubr.f32.gmra.mrb[0].mxu0 %v1355
        %v1423 = vpop.f32.mrb[0].mxu0
        %v1424 = vadd.f32 0.0, %v1423
        %v1425 = vpop.f32.mrb[0].mxu0
        %1426 = vdwg.mxu0
        %v1427 = vmul.f32 %v1424, 0.001953125
        %v1429 = vsel %vm1143, %v1427, 0
        %1431 = vmatprep.subr.mxu0 0.0
        %1432 = vmatpush1.msra.mxu0 %v996
        %1433 = vmatprep.subr.mxu0 0.0
        %1434 = vmatpush1.msra.mxu0 0.0
        %1435 = vmatprep.subr.mxu0 0.0
        %1436 = vmatpush1.msra.mxu0 0.0
        %1437 = vmatprep.subr.mxu0 0.0
        %1438 = vmatpush1.msra.mxu0 0.0
        %1439 = vmatprep.subr.mxu0 0.0
        %1440 = vmatpush1.msra.mxu0 0.0
        %1441 = vmatprep.subr.mxu0 0.0
        %1442 = vmatpush1.msra.mxu0 0.0
        %1443 = vmatprep.subr.mxu0 0.0
        %1444 = vmatpush1.msra.mxu0 0.0
        %1445 = vmatprep.subr.mxu0 0.0
        %1446 = vmatpush1.msra.mxu0 0.0
        %1447 = vmatprep.subr.mxu0 0.0
        %1448 = vmatpush1.msra.mxu0 0.0
        %1449 = vmatprep.subr.mxu0 0.0
        %1450 = vmatpush1.msra.mxu0 0.0
        %1451 = vmatprep.subr.mxu0 0.0
        %1452 = vmatpush1.msra.mxu0 0.0
        %1453 = vmatprep.subr.mxu0 0.0
        %1454 = vmatpush1.msra.mxu0 0.0
        %1455 = vmatprep.subr.mxu0 0.0
        %1456 = vmatpush1.msra.mxu0 0.0
        %1457 = vmatprep.subr.mxu0 0.0
        %1458 = vmatpush1.msra.mxu0 0.0
        %1459 = vmatprep.subr.mxu0 0.0
        %1460 = vmatpush1.msra.mxu0 0.0
        %1461 = vmatprep.subr.mxu0 0.0
        %1462 = vmatpush1.msra.mxu0 0.0
        %1463 = vmatprep.subr.mxu0 0.0
        %1464 = vmatpush1.msra.mxu0 0.0
        %1465 = vmatprep.subr.mxu0 0.0
        %1466 = vmatpush1.msra.mxu0 0.0
        %1467 = vmatprep.subr.mxu0 0.0
        %1468 = vmatpush1.msra.mxu0 0.0
        %1469 = vmatprep.subr.mxu0 0.0
        %1470 = vmatpush1.msra.mxu0 0.0
        %1471 = vmatprep.subr.mxu0 0.0
        %1472 = vmatpush1.msra.mxu0 0.0
        %1473 = vmatprep.subr.mxu0 0.0
        %1474 = vmatpush1.msra.mxu0 0.0
        %1475 = vmatprep.subr.mxu0 0.0
        %1476 = vmatpush1.msra.mxu0 0.0
        %1477 = vmatprep.subr.mxu0 0.0
        %1478 = vmatpush1.msra.mxu0 0.0
        %1479 = vmatprep.subr.mxu0 0.0
        %1480 = vmatpush1.msra.mxu0 0.0
        %1481 = vmatprep.subr.mxu0 0.0
        %1482 = vmatpush1.msra.mxu0 0.0
        %1483 = vmatprep.subr.mxu0 0.0
        %1484 = vmatpush1.msra.mxu0 0.0
        %1485 = vmatprep.subr.mxu0 0.0
        %1486 = vmatpush1.msra.mxu0 0.0
        %1487 = vmatprep.subr.mxu0 0.0
        %1488 = vmatpush1.msra.mxu0 0.0
        %1489 = vmatprep.subr.mxu0 0.0
        %1490 = vmatpush1.msra.mxu0 0.0
        %1491 = vmatprep.subr.mxu0 0.0
        %1492 = vmatpush1.msra.mxu0 0.0
        %1493 = vmatprep.subr.mxu0 0.0
        %1494 = vmatpush1.msra.mxu0 0.0
        %1495 = vmatprep.mubr.f32.mxu0 0.0
        %1496 = vmatmul.mubr.f32.gmra.mrb[0].mxu0 %v1429
        %v1497 = vpop.f32.mrb[0].mxu0
        %v1498 = vadd.f32 1e-06, %v1497
        %v1499 = vpop.f32.mrb[0].mxu0
        %1500 = vdwg.mxu0
        %v1501 = vrsqrt.pop %v1498
        %v1502 = vlaneseq
        %v1503 = vshrl.u32 %v1502, 7
        %v1504 = vsub.s32 0, %v1503
        %v1505 = vrot.slane %v1501, %v1504
        %v1506 = vmul.f32 %v1221, %v1505
        %v1507 = vmul.f32 %v1222, %v1505
        %v1508 = vmul.f32 %v1223, %v1505
        %v1509 = vmul.f32 %v1224, %v1505
        %v1510 = vmul.f32 %v1225, %v1505
        %v1511 = vmul.f32 %v1226, %v1505
        %v1512 = vmul.f32 %v1227, %v1505
        %v1513 = vmul.f32 %v1228, %v1505
        %v1514 = vmul.f32 %v1229, %v1505
        %v1515 = vmul.f32 %v1230, %v1505
        %v1516 = vmul.f32 %v1231, %v1505
        %v1517 = vmul.f32 %v1232, %v1505
        %v1518 = vmul.f32 %v1233, %v1505
        %v1519 = vmul.f32 %v1234, %v1505
        %v1520 = vmul.f32 %v1235, %v1505
        %v1521 = vmul.f32 %v1236, %v1505
        %v1522 = vmul.f32 %v1237, %v1505
        %v1523 = vmul.f32 %v1238, %v1505
        %v1524 = vmul.f32 %v1239, %v1505
        %v1525 = vmul.f32 %v1240, %v1505
        %v1526 = vmul.f32 %v1241, %v1505
        %v1527 = vmul.f32 %v1242, %v1505
        %v1528 = vmul.f32 %v1243, %v1505
        %v1529 = vmul.f32 %v1244, %v1505
        %v1530 = vmul.f32 %v1245, %v1505
        %v1531 = vmul.f32 %v1246, %v1505
        %v1532 = vmul.f32 %v1247, %v1505
        %v1533 = vmul.f32 %v1248, %v1505
        %v1534 = vmul.f32 %v1249, %v1505
        %v1535 = vmul.f32 %v1250, %v1505
        %v1536 = vmul.f32 %v1251, %v1505
        %v1537 = vmul.f32 %v1252, %v1505
        %v1539 = vlaneseq
        %v1540 = vshrl.u32 %v1539, 7
        %v1541 = vsub.s32 0, %v1540
        %v1542 = vrot.slane %v997, %v1541
        %v1544 = vmul.f32 %v1506, %v1542
        %v1545 = vmul.f32 %v1507, %v1542
        %v1546 = vmul.f32 %v1508, %v1542
        %v1547 = vmul.f32 %v1509, %v1542
        %v1548 = vmul.f32 %v1510, %v1542
        %v1549 = vmul.f32 %v1511, %v1542
        %v1550 = vmul.f32 %v1512, %v1542
        %v1551 = vmul.f32 %v1513, %v1542
        %v1552 = vmul.f32 %v1514, %v1542
        %v1553 = vmul.f32 %v1515, %v1542
        %v1554 = vmul.f32 %v1516, %v1542
        %v1555 = vmul.f32 %v1517, %v1542
        %v1556 = vmul.f32 %v1518, %v1542
        %v1557 = vmul.f32 %v1519, %v1542
        %v1558 = vmul.f32 %v1520, %v1542
        %v1559 = vmul.f32 %v1521, %v1542
        %v1560 = vmul.f32 %v1522, %v1542
        %v1561 = vmul.f32 %v1523, %v1542
        %v1562 = vmul.f32 %v1524, %v1542
        %v1563 = vmul.f32 %v1525, %v1542
        %v1564 = vmul.f32 %v1526, %v1542
        %v1565 = vmul.f32 %v1527, %v1542
        %v1566 = vmul.f32 %v1528, %v1542
        %v1567 = vmul.f32 %v1529, %v1542
        %v1568 = vmul.f32 %v1530, %v1542
        %v1569 = vmul.f32 %v1531, %v1542
        %v1570 = vmul.f32 %v1532, %v1542
        %v1571 = vmul.f32 %v1533, %v1542
        %v1572 = vmul.f32 %v1534, %v1542
        %v1573 = vmul.f32 %v1535, %v1542
        %v1574 = vmul.f32 %v1536, %v1542
        %v1575 = vmul.f32 %v1537, %v1542
        %v1577 = vlaneseq
        %v1578 = vshrl.u32 %v1577, 7
        %v1579 = vsub.s32 0, %v1578
        %v1580 = vrot.slane %v998, %v1579
        %v1582 = vadd.f32 %v1544, %v1580
        %v1583 = vadd.f32 %v1545, %v1580
        %v1584 = vadd.f32 %v1546, %v1580
        %v1585 = vadd.f32 %v1547, %v1580
        %v1586 = vadd.f32 %v1548, %v1580
        %v1587 = vadd.f32 %v1549, %v1580
        %v1588 = vadd.f32 %v1550, %v1580
        %v1589 = vadd.f32 %v1551, %v1580
        %v1590 = vadd.f32 %v1552, %v1580
        %v1591 = vadd.f32 %v1553, %v1580
        %v1592 = vadd.f32 %v1554, %v1580
        %v1593 = vadd.f32 %v1555, %v1580
        %v1594 = vadd.f32 %v1556, %v1580
        %v1595 = vadd.f32 %v1557, %v1580
        %v1596 = vadd.f32 %v1558, %v1580
        %v1597 = vadd.f32 %v1559, %v1580
        %v1598 = vadd.f32 %v1560, %v1580
        %v1599 = vadd.f32 %v1561, %v1580
        %v1600 = vadd.f32 %v1562, %v1580
        %v1601 = vadd.f32 %v1563, %v1580
        %v1602 = vadd.f32 %v1564, %v1580
        %v1603 = vadd.f32 %v1565, %v1580
        %v1604 = vadd.f32 %v1566, %v1580
        %v1605 = vadd.f32 %v1567, %v1580
        %v1606 = vadd.f32 %v1568, %v1580
        %v1607 = vadd.f32 %v1569, %v1580
        %v1608 = vadd.f32 %v1570, %v1580
        %v1609 = vadd.f32 %v1571, %v1580
        %v1610 = vadd.f32 %v1572, %v1580
        %v1611 = vadd.f32 %v1573, %v1580
        %v1612 = vadd.f32 %v1574, %v1580
        %v1613 = vadd.f32 %v1575, %v1580
        %v1614 = vxor.u32 %v1582, 2147483648
        %v1615 = vxor.u32 %v1583, 2147483648
        %v1616 = vxor.u32 %v1584, 2147483648
        %v1617 = vxor.u32 %v1585, 2147483648
        %v1618 = vxor.u32 %v1586, 2147483648
        %v1619 = vxor.u32 %v1587, 2147483648
        %v1620 = vxor.u32 %v1588, 2147483648
        %v1621 = vxor.u32 %v1589, 2147483648
        %v1622 = vxor.u32 %v1590, 2147483648
        %v1623 = vxor.u32 %v1591, 2147483648
        %v1624 = vxor.u32 %v1592, 2147483648
        %v1625 = vxor.u32 %v1593, 2147483648
        %v1626 = vxor.u32 %v1594, 2147483648
        %v1627 = vxor.u32 %v1595, 2147483648
        %v1628 = vxor.u32 %v1596, 2147483648
        %v1629 = vxor.u32 %v1597, 2147483648
        %v1630 = vxor.u32 %v1598, 2147483648
        %v1631 = vxor.u32 %v1599, 2147483648
        %v1632 = vxor.u32 %v1600, 2147483648
        %v1633 = vxor.u32 %v1601, 2147483648
        %v1634 = vxor.u32 %v1602, 2147483648
        %v1635 = vxor.u32 %v1603, 2147483648
        %v1636 = vxor.u32 %v1604, 2147483648
        %v1637 = vxor.u32 %v1605, 2147483648
        %v1638 = vxor.u32 %v1606, 2147483648
        %v1639 = vxor.u32 %v1607, 2147483648
        %v1640 = vxor.u32 %v1608, 2147483648
        %v1641 = vxor.u32 %v1609, 2147483648
        %v1642 = vxor.u32 %v1610, 2147483648
        %v1643 = vxor.u32 %v1611, 2147483648
        %v1644 = vxor.u32 %v1612, 2147483648
        %v1645 = vxor.u32 %v1613, 2147483648
        %v1646 = vmul.f32 %v1614, 1.442695
        %v1647 = vpow.pop %v1646
        %v1648 = vmul.f32 %v1615, 1.442695
        %v1649 = vpow.pop %v1648
        %v1650 = vmul.f32 %v1616, 1.442695
        %v1651 = vpow.pop %v1650
        %v1652 = vmul.f32 %v1617, 1.442695
        %v1653 = vpow.pop %v1652
        %v1654 = vmul.f32 %v1618, 1.442695
        %v1655 = vpow.pop %v1654
        %v1656 = vmul.f32 %v1619, 1.442695
        %v1657 = vpow.pop %v1656
        %v1658 = vmul.f32 %v1620, 1.442695
        %v1659 = vpow.pop %v1658
        %v1660 = vmul.f32 %v1621, 1.442695
        %v1661 = vpow.pop %v1660
        %v1662 = vmul.f32 %v1622, 1.442695
        %v1663 = vpow.pop %v1662
        %v1664 = vmul.f32 %v1623, 1.442695
        %v1665 = vpow.pop %v1664
        %v1666 = vmul.f32 %v1624, 1.442695
        %v1667 = vpow.pop %v1666
        %v1668 = vmul.f32 %v1625, 1.442695
        %v1669 = vpow.pop %v1668
        %v1670 = vmul.f32 %v1626, 1.442695
        %v1671 = vpow.pop %v1670
        %v1672 = vmul.f32 %v1627, 1.442695
        %v1673 = vpow.pop %v1672
        %v1674 = vmul.f32 %v1628, 1.442695
        %v1675 = vpow.pop %v1674
        %v1676 = vmul.f32 %v1629, 1.442695
        %v1677 = vpow.pop %v1676
        %v1678 = vmul.f32 %v1630, 1.442695
        %v1679 = vpow.pop %v1678
        %v1680 = vmul.f32 %v1631, 1.442695
        %v1681 = vpow.pop %v1680
        %v1682 = vmul.f32 %v1632, 1.442695
        %v1683 = vpow.pop %v1682
        %v1684 = vmul.f32 %v1633, 1.442695
        %v1685 = vpow.pop %v1684
        %v1686 = vmul.f32 %v1634, 1.442695
        %v1687 = vpow.pop %v1686
        %v1688 = vmul.f32 %v1635, 1.442695
        %v1689 = vpow.pop %v1688
        %v1690 = vmul.f32 %v1636, 1.442695
        %v1691 = vpow.pop %v1690
        %v1692 = vmul.f32 %v1637, 1.442695
        %v1693 = vpow.pop %v1692
        %v1694 = vmul.f32 %v1638, 1.442695
        %v1695 = vpow.pop %v1694
        %v1696 = vmul.f32 %v1639, 1.442695
        %v1697 = vpow.pop %v1696
        %v1698 = vmul.f32 %v1640, 1.442695
        %v1699 = vpow.pop %v1698
        %v1700 = vmul.f32 %v1641, 1.442695
        %v1701 = vpow.pop %v1700
        %v1702 = vmul.f32 %v1642, 1.442695
        %v1703 = vpow.pop %v1702
        %v1704 = vmul.f32 %v1643, 1.442695
        %v1705 = vpow.pop %v1704
        %v1706 = vmul.f32 %v1644, 1.442695
        %v1707 = vpow.pop %v1706
        %v1708 = vmul.f32 %v1645, 1.442695
        %v1709 = vpow.pop %v1708
        %v1710 = vadd.f32 %v1647, 1.0
        %v1711 = vadd.f32 %v1649, 1.0
        %v1712 = vadd.f32 %v1651, 1.0
        %v1713 = vadd.f32 %v1653, 1.0
        %v1714 = vadd.f32 %v1655, 1.0
        %v1715 = vadd.f32 %v1657, 1.0
        %v1716 = vadd.f32 %v1659, 1.0
        %v1717 = vadd.f32 %v1661, 1.0
        %v1718 = vadd.f32 %v1663, 1.0
        %v1719 = vadd.f32 %v1665, 1.0
        %v1720 = vadd.f32 %v1667, 1.0
        %v1721 = vadd.f32 %v1669, 1.0
        %v1722 = vadd.f32 %v1671, 1.0
        %v1723 = vadd.f32 %v1673, 1.0
        %v1724 = vadd.f32 %v1675, 1.0
        %v1725 = vadd.f32 %v1677, 1.0
        %v1726 = vadd.f32 %v1679, 1.0
        %v1727 = vadd.f32 %v1681, 1.0
        %v1728 = vadd.f32 %v1683, 1.0
        %v1729 = vadd.f32 %v1685, 1.0
        %v1730 = vadd.f32 %v1687, 1.0
        %v1731 = vadd.f32 %v1689, 1.0
        %v1732 = vadd.f32 %v1691, 1.0
        %v1733 = vadd.f32 %v1693, 1.0
        %v1734 = vadd.f32 %v1695, 1.0
        %v1735 = vadd.f32 %v1697, 1.0
        %v1736 = vadd.f32 %v1699, 1.0
        %v1737 = vadd.f32 %v1701, 1.0
        %v1738 = vadd.f32 %v1703, 1.0
        %v1739 = vadd.f32 %v1705, 1.0
        %v1740 = vadd.f32 %v1707, 1.0
        %v1741 = vadd.f32 %v1709, 1.0
        %v1742 = vrcp.pop %v1710
        %v1743 = vmul.f32 1.0, %v1742
        %v1744 = vrcp.pop %v1711
        %v1745 = vmul.f32 1.0, %v1744
        %v1746 = vrcp.pop %v1712
        %v1747 = vmul.f32 1.0, %v1746
        %v1748 = vrcp.pop %v1713
        %v1749 = vmul.f32 1.0, %v1748
        %v1750 = vrcp.pop %v1714
        %v1751 = vmul.f32 1.0, %v1750
        %v1752 = vrcp.pop %v1715
        %v1753 = vmul.f32 1.0, %v1752
        %v1754 = vrcp.pop %v1716
        %v1755 = vmul.f32 1.0, %v1754
        %v1756 = vrcp.pop %v1717
        %v1757 = vmul.f32 1.0, %v1756
        %v1758 = vrcp.pop %v1718
        %v1759 = vmul.f32 1.0, %v1758
        %v1760 = vrcp.pop %v1719
        %v1761 = vmul.f32 1.0, %v1760
        %v1762 = vrcp.pop %v1720
        %v1763 = vmul.f32 1.0, %v1762
        %v1764 = vrcp.pop %v1721
        %v1765 = vmul.f32 1.0, %v1764
        %v1766 = vrcp.pop %v1722
        %v1767 = vmul.f32 1.0, %v1766
        %v1768 = vrcp.pop %v1723
        %v1769 = vmul.f32 1.0, %v1768
        %v1770 = vrcp.pop %v1724
        %v1771 = vmul.f32 1.0, %v1770
        %v1772 = vrcp.pop %v1725
        %v1773 = vmul.f32 1.0, %v1772
        %v1774 = vrcp.pop %v1726
        %v1775 = vmul.f32 1.0, %v1774
        %v1776 = vrcp.pop %v1727
        %v1777 = vmul.f32 1.0, %v1776
        %v1778 = vrcp.pop %v1728
        %v1779 = vmul.f32 1.0, %v1778
        %v1780 = vrcp.pop %v1729
        %v1781 = vmul.f32 1.0, %v1780
        %v1782 = vrcp.pop %v1730
        %v1783 = vmul.f32 1.0, %v1782
        %v1784 = vrcp.pop %v1731
        %v1785 = vmul.f32 1.0, %v1784
        %v1786 = vrcp.pop %v1732
        %v1787 = vmul.f32 1.0, %v1786
        %v1788 = vrcp.pop %v1733
        %v1789 = vmul.f32 1.0, %v1788
        %v1790 = vrcp.pop %v1734
        %v1791 = vmul.f32 1.0, %v1790
        %v1792 = vrcp.pop %v1735
        %v1793 = vmul.f32 1.0, %v1792
        %v1794 = vrcp.pop %v1736
        %v1795 = vmul.f32 1.0, %v1794
        %v1796 = vrcp.pop %v1737
        %v1797 = vmul.f32 1.0, %v1796
        %v1798 = vrcp.pop %v1738
        %v1799 = vmul.f32 1.0, %v1798
        %v1800 = vrcp.pop %v1739
        %v1801 = vmul.f32 1.0, %v1800
        %v1802 = vrcp.pop %v1740
        %v1803 = vmul.f32 1.0, %v1802
        %v1804 = vrcp.pop %v1741
        %v1805 = vmul.f32 1.0, %v1804
        %v1806 = vmul.f32 %v1582, %v1743
        %v1807 = vmul.f32 %v1583, %v1745
        %v1808 = vmul.f32 %v1584, %v1747
        %v1809 = vmul.f32 %v1585, %v1749
        %v1810 = vmul.f32 %v1586, %v1751
        %v1811 = vmul.f32 %v1587, %v1753
        %v1812 = vmul.f32 %v1588, %v1755
        %v1813 = vmul.f32 %v1589, %v1757
        %v1814 = vmul.f32 %v1590, %v1759
        %v1815 = vmul.f32 %v1591, %v1761
        %v1816 = vmul.f32 %v1592, %v1763
        %v1817 = vmul.f32 %v1593, %v1765
        %v1818 = vmul.f32 %v1594, %v1767
        %v1819 = vmul.f32 %v1595, %v1769
        %v1820 = vmul.f32 %v1596, %v1771
        %v1821 = vmul.f32 %v1597, %v1773
        %v1822 = vmul.f32 %v1598, %v1775
        %v1823 = vmul.f32 %v1599, %v1777
        %v1824 = vmul.f32 %v1600, %v1779
        %v1825 = vmul.f32 %v1601, %v1781
        %v1826 = vmul.f32 %v1602, %v1783
        %v1827 = vmul.f32 %v1603, %v1785
        %v1828 = vmul.f32 %v1604, %v1787
        %v1829 = vmul.f32 %v1605, %v1789
        %v1830 = vmul.f32 %v1606, %v1791
        %v1831 = vmul.f32 %v1607, %v1793
        %v1832 = vmul.f32 %v1608, %v1795
        %v1833 = vmul.f32 %v1609, %v1797
        %v1834 = vmul.f32 %v1610, %v1799
        %v1835 = vmul.f32 %v1611, %v1801
        %v1836 = vmul.f32 %v1612, %v1803
        %v1837 = vmul.f32 %v1613, %v1805
        %vm1838 = vcmask 392192
        %1839 = vst.msk [vmem:[#allocation2] sm:$0xff] %vm1838, 0
        %1840 = vst.msk [vmem:[#allocation2 + $0x88] sm:$0xff] %vm1838, 0
        %v1841 = vrot.slane %v1806, 7
        %v1842 = vrot.slane %v1807, 7
        %v1843 = vrot.slane %v1808, 7
        %v1844 = vrot.slane %v1809, 7
        %v1845 = vrot.slane %v1810, 7
        %v1846 = vrot.slane %v1811, 7
        %v1847 = vrot.slane %v1812, 7
        %v1848 = vrot.slane %v1813, 7
        %v1849 = vrot.slane %v1814, 7
        %v1850 = vrot.slane %v1815, 7
        %v1851 = vrot.slane %v1816, 7
        %v1852 = vrot.slane %v1817, 7
        %v1853 = vrot.slane %v1818, 7
        %v1854 = vrot.slane %v1819, 7
        %v1855 = vrot.slane %v1820, 7
        %v1856 = vrot.slane %v1821, 7
        %v1857 = vrot.slane %v1822, 7
        %v1858 = vrot.slane %v1823, 7
        %v1859 = vrot.slane %v1824, 7
        %v1860 = vrot.slane %v1825, 7
        %v1861 = vrot.slane %v1826, 7
        %v1862 = vrot.slane %v1827, 7
        %v1863 = vrot.slane %v1828, 7
        %v1864 = vrot.slane %v1829, 7
        %v1865 = vrot.slane %v1830, 7
        %v1866 = vrot.slane %v1831, 7
        %v1867 = vrot.slane %v1832, 7
        %v1868 = vrot.slane %v1833, 7
        %v1869 = vrot.slane %v1834, 7
        %v1870 = vrot.slane %v1835, 7
        %v1871 = vrot.slane %v1836, 7
        %v1872 = vrot.slane %v1837, 7
        %vm1873 = vcmp.lt.s32.totalorder %v514, 1
        %v1874 = vsel %vm1873, %v1871, %v1872
        %v1875 = vsel %vm1873, %v1870, %v1871
        %v1876 = vsel %vm1873, %v1869, %v1870
        %v1877 = vsel %vm1873, %v1868, %v1869
        %v1878 = vsel %vm1873, %v1867, %v1868
        %v1879 = vsel %vm1873, %v1866, %v1867
        %v1880 = vsel %vm1873, %v1865, %v1866
        %v1881 = vsel %vm1873, %v1864, %v1865
        %v1882 = vsel %vm1873, %v1863, %v1864
        %v1883 = vsel %vm1873, %v1862, %v1863
        %v1884 = vsel %vm1873, %v1861, %v1862
        %v1885 = vsel %vm1873, %v1860, %v1861
        %v1886 = vsel %vm1873, %v1859, %v1860
        %v1887 = vsel %vm1873, %v1858, %v1859
        %v1888 = vsel %vm1873, %v1857, %v1858
        %v1889 = vsel %vm1873, %v1856, %v1857
        %v1890 = vsel %vm1873, %v1855, %v1856
        %v1891 = vsel %vm1873, %v1854, %v1855
        %v1892 = vsel %vm1873, %v1853, %v1854
        %v1893 = vsel %vm1873, %v1852, %v1853
        %v1894 = vsel %vm1873, %v1851, %v1852
        %v1895 = vsel %vm1873, %v1850, %v1851
        %v1896 = vsel %vm1873, %v1849, %v1850
        %v1897 = vsel %vm1873, %v1848, %v1849
        %v1898 = vsel %vm1873, %v1847, %v1848
        %v1899 = vsel %vm1873, %v1846, %v1847
        %v1900 = vsel %vm1873, %v1845, %v1846
        %v1901 = vsel %vm1873, %v1844, %v1845
        %v1902 = vsel %vm1873, %v1843, %v1844
        %v1903 = vsel %vm1873, %v1842, %v1843
        %v1904 = vsel %vm1873, %v1841, %v1842
        %v1905 = vsel %vm1873, %v1872, %v1841
        %v1906 = vsel %vm930, 1, 0
        %v1907 = vsel %vm931, 1, 0
        %v1908 = vsel %vm932, 1, 0
        %v1909 = vsel %vm933, 1, 0
        %v1910 = vsel %vm934, 1, 0
        %v1911 = vsel %vm935, 1, 0
        %v1912 = vsel %vm936, 1, 0
        %v1913 = vsel %vm937, 1, 0
        %v1914 = vsel %vm938, 1, 0
        %v1915 = vsel %vm939, 1, 0
        %v1916 = vsel %vm940, 1, 0
        %v1917 = vsel %vm941, 1, 0
        %v1918 = vsel %vm942, 1, 0
        %v1919 = vsel %vm943, 1, 0
        %v1920 = vsel %vm944, 1, 0
        %v1921 = vsel %vm945, 1, 0
        %v1922 = vsel %vm946, 1, 0
        %v1923 = vsel %vm947, 1, 0
        %v1924 = vsel %vm948, 1, 0
        %v1925 = vsel %vm949, 1, 0
        %v1926 = vsel %vm950, 1, 0
        %v1927 = vsel %vm951, 1, 0
        %v1928 = vsel %vm952, 1, 0
        %v1929 = vsel %vm953, 1, 0
        %v1930 = vsel %vm954, 1, 0
        %v1931 = vsel %vm955, 1, 0
        %v1932 = vsel %vm956, 1, 0
        %v1933 = vsel %vm957, 1, 0
        %v1934 = vsel %vm958, 1, 0
        %v1935 = vsel %vm959, 1, 0
        %v1936 = vsel %vm960, 1, 0
        %v1937 = vsel %vm961, 1, 0
        %vm1938 = vcmp.eq.s32.totalorder %v1906, 1
        %vm1939 = vcmp.eq.s32.totalorder %v1907, 1
        %vm1940 = vcmp.eq.s32.totalorder %v1908, 1
        %vm1941 = vcmp.eq.s32.totalorder %v1909, 1
        %vm1942 = vcmp.eq.s32.totalorder %v1910, 1
        %vm1943 = vcmp.eq.s32.totalorder %v1911, 1
        %vm1944 = vcmp.eq.s32.totalorder %v1912, 1
        %vm1945 = vcmp.eq.s32.totalorder %v1913, 1
        %vm1946 = vcmp.eq.s32.totalorder %v1914, 1
        %vm1947 = vcmp.eq.s32.totalorder %v1915, 1
        %vm1948 = vcmp.eq.s32.totalorder %v1916, 1
        %vm1949 = vcmp.eq.s32.totalorder %v1917, 1
        %vm1950 = vcmp.eq.s32.totalorder %v1918, 1
        %vm1951 = vcmp.eq.s32.totalorder %v1919, 1
        %vm1952 = vcmp.eq.s32.totalorder %v1920, 1
        %vm1953 = vcmp.eq.s32.totalorder %v1921, 1
        %vm1954 = vcmp.eq.s32.totalorder %v1922, 1
        %vm1955 = vcmp.eq.s32.totalorder %v1923, 1
        %vm1956 = vcmp.eq.s32.totalorder %v1924, 1
        %vm1957 = vcmp.eq.s32.totalorder %v1925, 1
        %vm1958 = vcmp.eq.s32.totalorder %v1926, 1
        %vm1959 = vcmp.eq.s32.totalorder %v1927, 1
        %vm1960 = vcmp.eq.s32.totalorder %v1928, 1
        %vm1961 = vcmp.eq.s32.totalorder %v1929, 1
        %vm1962 = vcmp.eq.s32.totalorder %v1930, 1
        %vm1963 = vcmp.eq.s32.totalorder %v1931, 1
        %vm1964 = vcmp.eq.s32.totalorder %v1932, 1
        %vm1965 = vcmp.eq.s32.totalorder %v1933, 1
        %vm1966 = vcmp.eq.s32.totalorder %v1934, 1
        %vm1967 = vcmp.eq.s32.totalorder %v1935, 1
        %vm1968 = vcmp.eq.s32.totalorder %v1936, 1
        %vm1969 = vcmp.eq.s32.totalorder %v1937, 1
        %v1970 = vsel %vm1938, %v1905, 0.0
        %v1971 = vsel %vm1939, %v1904, 0.0
        %v1972 = vsel %vm1940, %v1903, 0.0
        %v1973 = vsel %vm1941, %v1902, 0.0
        %v1974 = vsel %vm1942, %v1901, 0.0
        %v1975 = vsel %vm1943, %v1900, 0.0
        %v1976 = vsel %vm1944, %v1899, 0.0
        %v1977 = vsel %vm1945, %v1898, 0.0
        %v1978 = vsel %vm1946, %v1897, 0.0
        %v1979 = vsel %vm1947, %v1896, 0.0
        %v1980 = vsel %vm1948, %v1895, 0.0
        %v1981 = vsel %vm1949, %v1894, 0.0
        %v1982 = vsel %vm1950, %v1893, 0.0
        %v1983 = vsel %vm1951, %v1892, 0.0
        %v1984 = vsel %vm1952, %v1891, 0.0
        %v1985 = vsel %vm1953, %v1890, 0.0
        %v1986 = vsel %vm1954, %v1889, 0.0
        %v1987 = vsel %vm1955, %v1888, 0.0
        %v1988 = vsel %vm1956, %v1887, 0.0
        %v1989 = vsel %vm1957, %v1886, 0.0
        %v1990 = vsel %vm1958, %v1885, 0.0
        %v1991 = vsel %vm1959, %v1884, 0.0
        %v1992 = vsel %vm1960, %v1883, 0.0
        %v1993 = vsel %vm1961, %v1882, 0.0
        %v1994 = vsel %vm1962, %v1881, 0.0
        %v1995 = vsel %vm1963, %v1880, 0.0
        %v1996 = vsel %vm1964, %v1879, 0.0
        %v1997 = vsel %vm1965, %v1878, 0.0
        %v1998 = vsel %vm1966, %v1877, 0.0
        %v1999 = vsel %vm1967, %v1876, 0.0
        %v2000 = vsel %vm1968, %v1875, 0.0
        %v2001 = vsel %vm1969, %v1874, 0.0
        %v2002 = vrot.slane %v1806, 1
        %v2003 = vrot.slane %v1807, 1
        %v2004 = vrot.slane %v1808, 1
        %v2005 = vrot.slane %v1809, 1
        %v2006 = vrot.slane %v1810, 1
        %v2007 = vrot.slane %v1811, 1
        %v2008 = vrot.slane %v1812, 1
        %v2009 = vrot.slane %v1813, 1
        %v2010 = vrot.slane %v1814, 1
        %v2011 = vrot.slane %v1815, 1
        %v2012 = vrot.slane %v1816, 1
        %v2013 = vrot.slane %v1817, 1
        %v2014 = vrot.slane %v1818, 1
        %v2015 = vrot.slane %v1819, 1
        %v2016 = vrot.slane %v1820, 1
        %v2017 = vrot.slane %v1821, 1
        %v2018 = vrot.slane %v1822, 1
        %v2019 = vrot.slane %v1823, 1
        %v2020 = vrot.slane %v1824, 1
        %v2021 = vrot.slane %v1825, 1
        %v2022 = vrot.slane %v1826, 1
        %v2023 = vrot.slane %v1827, 1
        %v2024 = vrot.slane %v1828, 1
        %v2025 = vrot.slane %v1829, 1
        %v2026 = vrot.slane %v1830, 1
        %v2027 = vrot.slane %v1831, 1
        %v2028 = vrot.slane %v1832, 1
        %v2029 = vrot.slane %v1833, 1
        %v2030 = vrot.slane %v1834, 1
        %v2031 = vrot.slane %v1835, 1
        %v2032 = vrot.slane %v1836, 1
        %v2033 = vrot.slane %v1837, 1
        %vm2034 = vcmp.lt.s32.totalorder %v514, 7
        %v2035 = vsel %vm2034, %v2032, %v2033
        %v2036 = vsel %vm2034, %v2031, %v2032
        %v2037 = vsel %vm2034, %v2030, %v2031
        %v2038 = vsel %vm2034, %v2029, %v2030
        %v2039 = vsel %vm2034, %v2028, %v2029
        %v2040 = vsel %vm2034, %v2027, %v2028
        %v2041 = vsel %vm2034, %v2026, %v2027
        %v2042 = vsel %vm2034, %v2025, %v2026
        %v2043 = vsel %vm2034, %v2024, %v2025
        %v2044 = vsel %vm2034, %v2023, %v2024
        %v2045 = vsel %vm2034, %v2022, %v2023
        %v2046 = vsel %vm2034, %v2021, %v2022
        %v2047 = vsel %vm2034, %v2020, %v2021
        %v2048 = vsel %vm2034, %v2019, %v2020
        %v2049 = vsel %vm2034, %v2018, %v2019
        %v2050 = vsel %vm2034, %v2017, %v2018
        %v2051 = vsel %vm2034, %v2016, %v2017
        %v2052 = vsel %vm2034, %v2015, %v2016
        %v2053 = vsel %vm2034, %v2014, %v2015
        %v2054 = vsel %vm2034, %v2013, %v2014
        %v2055 = vsel %vm2034, %v2012, %v2013
        %v2056 = vsel %vm2034, %v2011, %v2012
        %v2057 = vsel %vm2034, %v2010, %v2011
        %v2058 = vsel %vm2034, %v2009, %v2010
        %v2059 = vsel %vm2034, %v2008, %v2009
        %v2060 = vsel %vm2034, %v2007, %v2008
        %v2061 = vsel %vm2034, %v2006, %v2007
        %v2062 = vsel %vm2034, %v2005, %v2006
        %v2063 = vsel %vm2034, %v2004, %v2005
        %v2064 = vsel %vm2034, %v2003, %v2004
        %v2065 = vsel %vm2034, %v2002, %v2003
        %v2066 = vsel %vm2034, %v2033, %v2002
        %v2067 = vsel %vm962, 1, 0
        %v2068 = vsel %vm963, 1, 0
        %v2069 = vsel %vm964, 1, 0
        %v2070 = vsel %vm965, 1, 0
        %v2071 = vsel %vm966, 1, 0
        %v2072 = vsel %vm967, 1, 0
        %v2073 = vsel %vm968, 1, 0
        %v2074 = vsel %vm969, 1, 0
        %v2075 = vsel %vm970, 1, 0
        %v2076 = vsel %vm971, 1, 0
        %v2077 = vsel %vm972, 1, 0
        %v2078 = vsel %vm973, 1, 0
        %v2079 = vsel %vm974, 1, 0
        %v2080 = vsel %vm975, 1, 0
        %v2081 = vsel %vm976, 1, 0
        %v2082 = vsel %vm977, 1, 0
        %v2083 = vsel %vm978, 1, 0
        %v2084 = vsel %vm979, 1, 0
        %v2085 = vsel %vm980, 1, 0
        %v2086 = vsel %vm981, 1, 0
        %v2087 = vsel %vm982, 1, 0
        %v2088 = vsel %vm983, 1, 0
        %v2089 = vsel %vm984, 1, 0
        %v2090 = vsel %vm985, 1, 0
        %v2091 = vsel %vm986, 1, 0
        %v2092 = vsel %vm987, 1, 0
        %v2093 = vsel %vm988, 1, 0
        %v2094 = vsel %vm989, 1, 0
        %v2095 = vsel %vm990, 1, 0
        %v2096 = vsel %vm991, 1, 0
        %v2097 = vsel %vm992, 1, 0
        %v2098 = vsel %vm993, 1, 0
        %vm2099 = vcmp.eq.s32.totalorder %v2067, 1
        %vm2100 = vcmp.eq.s32.totalorder %v2068, 1
        %vm2101 = vcmp.eq.s32.totalorder %v2069, 1
        %vm2102 = vcmp.eq.s32.totalorder %v2070, 1
        %vm2103 = vcmp.eq.s32.totalorder %v2071, 1
        %vm2104 = vcmp.eq.s32.totalorder %v2072, 1
        %vm2105 = vcmp.eq.s32.totalorder %v2073, 1
        %vm2106 = vcmp.eq.s32.totalorder %v2074, 1
        %vm2107 = vcmp.eq.s32.totalorder %v2075, 1
        %vm2108 = vcmp.eq.s32.totalorder %v2076, 1
        %vm2109 = vcmp.eq.s32.totalorder %v2077, 1
        %vm2110 = vcmp.eq.s32.totalorder %v2078, 1
        %vm2111 = vcmp.eq.s32.totalorder %v2079, 1
        %vm2112 = vcmp.eq.s32.totalorder %v2080, 1
        %vm2113 = vcmp.eq.s32.totalorder %v2081, 1
        %vm2114 = vcmp.eq.s32.totalorder %v2082, 1
        %vm2115 = vcmp.eq.s32.totalorder %v2083, 1
        %vm2116 = vcmp.eq.s32.totalorder %v2084, 1
        %vm2117 = vcmp.eq.s32.totalorder %v2085, 1
        %vm2118 = vcmp.eq.s32.totalorder %v2086, 1
        %vm2119 = vcmp.eq.s32.totalorder %v2087, 1
        %vm2120 = vcmp.eq.s32.totalorder %v2088, 1
        %vm2121 = vcmp.eq.s32.totalorder %v2089, 1
        %vm2122 = vcmp.eq.s32.totalorder %v2090, 1
        %vm2123 = vcmp.eq.s32.totalorder %v2091, 1
        %vm2124 = vcmp.eq.s32.totalorder %v2092, 1
        %vm2125 = vcmp.eq.s32.totalorder %v2093, 1
        %vm2126 = vcmp.eq.s32.totalorder %v2094, 1
        %vm2127 = vcmp.eq.s32.totalorder %v2095, 1
        %vm2128 = vcmp.eq.s32.totalorder %v2096, 1
        %vm2129 = vcmp.eq.s32.totalorder %v2097, 1
        %vm2130 = vcmp.eq.s32.totalorder %v2098, 1
        %v2131 = vsel %vm2099, %v2065, 0.0
        %v2132 = vsel %vm2100, %v2064, 0.0
        %v2133 = vsel %vm2101, %v2063, 0.0
        %v2134 = vsel %vm2102, %v2062, 0.0
        %v2135 = vsel %vm2103, %v2061, 0.0
        %v2136 = vsel %vm2104, %v2060, 0.0
        %v2137 = vsel %vm2105, %v2059, 0.0
        %v2138 = vsel %vm2106, %v2058, 0.0
        %v2139 = vsel %vm2107, %v2057, 0.0
        %v2140 = vsel %vm2108, %v2056, 0.0
        %v2141 = vsel %vm2109, %v2055, 0.0
        %v2142 = vsel %vm2110, %v2054, 0.0
        %v2143 = vsel %vm2111, %v2053, 0.0
        %v2144 = vsel %vm2112, %v2052, 0.0
        %v2145 = vsel %vm2113, %v2051, 0.0
        %v2146 = vsel %vm2114, %v2050, 0.0
        %v2147 = vsel %vm2115, %v2049, 0.0
        %v2148 = vsel %vm2116, %v2048, 0.0
        %v2149 = vsel %vm2117, %v2047, 0.0
        %v2150 = vsel %vm2118, %v2046, 0.0
        %v2151 = vsel %vm2119, %v2045, 0.0
        %v2152 = vsel %vm2120, %v2044, 0.0
        %v2153 = vsel %vm2121, %v2043, 0.0
        %v2154 = vsel %vm2122, %v2042, 0.0
        %v2155 = vsel %vm2123, %v2041, 0.0
        %v2156 = vsel %vm2124, %v2040, 0.0
        %v2157 = vsel %vm2125, %v2039, 0.0
        %v2158 = vsel %vm2126, %v2038, 0.0
        %v2159 = vsel %vm2127, %v2037, 0.0
        %v2160 = vsel %vm2128, %v2036, 0.0
        %v2161 = vsel %vm2129, %v2035, 0.0
        %v2162 = vsel %vm2130, %v2066, 0.0
        %v2163 = vpack.c.bf16 %v1971, %v1970
        %v2164 = vpack.c.bf16 %v1973, %v1972
        %v2165 = vpack.c.bf16 %v1975, %v1974
        %v2166 = vpack.c.bf16 %v1977, %v1976
        %v2167 = vpack.c.bf16 %v1979, %v1978
        %v2168 = vpack.c.bf16 %v1981, %v1980
        %v2169 = vpack.c.bf16 %v1983, %v1982
        %v2170 = vpack.c.bf16 %v1985, %v1984
        %v2171 = vpack.c.bf16 %v1987, %v1986
        %v2172 = vpack.c.bf16 %v1989, %v1988
        %v2173 = vpack.c.bf16 %v1991, %v1990
        %v2174 = vpack.c.bf16 %v1993, %v1992
        %v2175 = vpack.c.bf16 %v1995, %v1994
        %v2176 = vpack.c.bf16 %v1997, %v1996
        %v2177 = vpack.c.bf16 %v1999, %v1998
        %v2178 = vpack.c.bf16 %v2001, %v2000
        %2179 = vst.msk [vmem:[#allocation2 + $0x8] sm:$0xff] %vm999, %v2163
        %2180 = vst.msk [vmem:[#allocation2 + $0x10] sm:$0xff] %vm999, %v2164
        %2181 = vst.msk [vmem:[#allocation2 + $0x18] sm:$0xff] %vm999, %v2165
        %2182 = vst.msk [vmem:[#allocation2 + $0x20] sm:$0xff] %vm999, %v2166
        %2183 = vst.msk [vmem:[#allocation2 + $0x28] sm:$0xff] %vm999, %v2167
        %2184 = vst.msk [vmem:[#allocation2 + $0x30] sm:$0xff] %vm999, %v2168
        %2185 = vst.msk [vmem:[#allocation2 + $0x38] sm:$0xff] %vm999, %v2169
        %2186 = vst.msk [vmem:[#allocation2 + $0x40] sm:$0xff] %vm999, %v2170
        %2187 = vst.msk [vmem:[#allocation2 + $0x48] sm:$0xff] %vm999, %v2171
        %2188 = vst.msk [vmem:[#allocation2 + $0x50] sm:$0xff] %vm999, %v2172
        %2189 = vst.msk [vmem:[#allocation2 + $0x58] sm:$0xff] %vm999, %v2173
        %2190 = vst.msk [vmem:[#allocation2 + $0x60] sm:$0xff] %vm999, %v2174
        %2191 = vst.msk [vmem:[#allocation2 + $0x68] sm:$0xff] %vm999, %v2175
        %2192 = vst.msk [vmem:[#allocation2 + $0x70] sm:$0xff] %vm999, %v2176
        %2193 = vst.msk [vmem:[#allocation2 + $0x78] sm:$0xff] %vm999, %v2177
        %2194 = vst.msk [vmem:[#allocation2 + $0x80] sm:$0xff] %vm999, %v2178
        %v2195 = vpack.c.bf16 %v1807, %v1806
        %v2196 = vpack.c.bf16 %v1809, %v1808
        %v2197 = vpack.c.bf16 %v1811, %v1810
        %v2198 = vpack.c.bf16 %v1813, %v1812
        %v2199 = vpack.c.bf16 %v1815, %v1814
        %v2200 = vpack.c.bf16 %v1817, %v1816
        %v2201 = vpack.c.bf16 %v1819, %v1818
        %v2202 = vpack.c.bf16 %v1821, %v1820
        %v2203 = vpack.c.bf16 %v1823, %v1822
        %v2204 = vpack.c.bf16 %v1825, %v1824
        %v2205 = vpack.c.bf16 %v1827, %v1826
        %v2206 = vpack.c.bf16 %v1829, %v1828
        %v2207 = vpack.c.bf16 %v1831, %v1830
        %v2208 = vpack.c.bf16 %v1833, %v1832
        %v2209 = vpack.c.bf16 %v1835, %v1834
        %v2210 = vpack.c.bf16 %v1837, %v1836
        %2227 = vrot.lane.b32.xlu0 %v2195, 16
        %v2228 = vpop.permute.xlu0 %2227
        %2229 = vrot.lane.b32.xlu0 %v2196, 16
        %v2230 = vpop.permute.xlu0 %2229
        %2231 = vrot.lane.b32.xlu0 %v2197, 16
        %v2232 = vpop.permute.xlu0 %2231
        %2233 = vrot.lane.b32.xlu0 %v2198, 16
        %v2234 = vpop.permute.xlu0 %2233
        %2235 = vrot.lane.b32.xlu0 %v2199, 16
        %v2236 = vpop.permute.xlu0 %2235
        %2237 = vrot.lane.b32.xlu0 %v2200, 16
        %v2238 = vpop.permute.xlu0 %2237
        %2239 = vrot.lane.b32.xlu0 %v2201, 16
        %v2240 = vpop.permute.xlu0 %2239
        %2241 = vrot.lane.b32.xlu0 %v2202, 16
        %v2242 = vpop.permute.xlu0 %2241
        %2243 = vrot.lane.b32.xlu0 %v2203, 16
        %v2244 = vpop.permute.xlu0 %2243
        %2245 = vrot.lane.b32.xlu0 %v2204, 16
        %v2246 = vpop.permute.xlu0 %2245
        %2247 = vrot.lane.b32.xlu0 %v2205, 16
        %v2248 = vpop.permute.xlu0 %2247
        %2249 = vrot.lane.b32.xlu0 %v2206, 16
        %v2250 = vpop.permute.xlu0 %2249
        %2251 = vrot.lane.b32.xlu0 %v2207, 16
        %v2252 = vpop.permute.xlu0 %2251
        %2253 = vrot.lane.b32.xlu0 %v2208, 16
        %v2254 = vpop.permute.xlu0 %2253
        %2255 = vrot.lane.b32.xlu0 %v2209, 16
        %v2256 = vpop.permute.xlu0 %2255
        %2257 = vrot.lane.b32.xlu0 %v2210, 16
        %v2258 = vpop.permute.xlu0 %2257
        %vm2275 = vcmask 261248
        %2276 = vst.msk [vmem:[#allocation2 + $0x8] sm:$0xff] %vm2275, %v2228
        %2277 = vst.msk [vmem:[#allocation2 + $0x10] sm:$0xff] %vm2275, %v2230
        %2278 = vst.msk [vmem:[#allocation2 + $0x18] sm:$0xff] %vm2275, %v2232
        %2279 = vst.msk [vmem:[#allocation2 + $0x20] sm:$0xff] %vm2275, %v2234
        %2280 = vst.msk [vmem:[#allocation2 + $0x28] sm:$0xff] %vm2275, %v2236
        %2281 = vst.msk [vmem:[#allocation2 + $0x30] sm:$0xff] %vm2275, %v2238
        %2282 = vst.msk [vmem:[#allocation2 + $0x38] sm:$0xff] %vm2275, %v2240
        %2283 = vst.msk [vmem:[#allocation2 + $0x40] sm:$0xff] %vm2275, %v2242
        %2284 = vst.msk [vmem:[#allocation2 + $0x48] sm:$0xff] %vm2275, %v2244
        %2285 = vst.msk [vmem:[#allocation2 + $0x50] sm:$0xff] %vm2275, %v2246
        %2286 = vst.msk [vmem:[#allocation2 + $0x58] sm:$0xff] %vm2275, %v2248
        %2287 = vst.msk [vmem:[#allocation2 + $0x60] sm:$0xff] %vm2275, %v2250
        %2288 = vst.msk [vmem:[#allocation2 + $0x68] sm:$0xff] %vm2275, %v2252
        %2289 = vst.msk [vmem:[#allocation2 + $0x70] sm:$0xff] %vm2275, %v2254
        %2290 = vst.msk [vmem:[#allocation2 + $0x78] sm:$0xff] %vm2275, %v2256
        %2291 = vst.msk [vmem:[#allocation2 + $0x80] sm:$0xff] %vm2275, %v2258
        %v2292 = vpack.c.bf16 %v2132, %v2131
        %v2293 = vpack.c.bf16 %v2134, %v2133
        %v2294 = vpack.c.bf16 %v2136, %v2135
        %v2295 = vpack.c.bf16 %v2138, %v2137
        %v2296 = vpack.c.bf16 %v2140, %v2139
        %v2297 = vpack.c.bf16 %v2142, %v2141
        %v2298 = vpack.c.bf16 %v2144, %v2143
        %v2299 = vpack.c.bf16 %v2146, %v2145
        %v2300 = vpack.c.bf16 %v2148, %v2147
        %v2301 = vpack.c.bf16 %v2150, %v2149
        %v2302 = vpack.c.bf16 %v2152, %v2151
        %v2303 = vpack.c.bf16 %v2154, %v2153
        %v2304 = vpack.c.bf16 %v2156, %v2155
        %v2305 = vpack.c.bf16 %v2158, %v2157
        %v2306 = vpack.c.bf16 %v2160, %v2159
        %v2307 = vpack.c.bf16 %v2162, %v2161
        %2324 = vrot.lane.b32.xlu0 %v2292, 32
        %v2325 = vpop.permute.xlu0 %2324
        %2326 = vrot.lane.b32.xlu0 %v2293, 32
        %v2327 = vpop.permute.xlu0 %2326
        %2328 = vrot.lane.b32.xlu0 %v2294, 32
        %v2329 = vpop.permute.xlu0 %2328
        %2330 = vrot.lane.b32.xlu0 %v2295, 32
        %v2331 = vpop.permute.xlu0 %2330
        %2332 = vrot.lane.b32.xlu0 %v2296, 32
        %v2333 = vpop.permute.xlu0 %2332
        %2334 = vrot.lane.b32.xlu0 %v2297, 32
        %v2335 = vpop.permute.xlu0 %2334
        %2336 = vrot.lane.b32.xlu0 %v2298, 32
        %v2337 = vpop.permute.xlu0 %2336
        %2338 = vrot.lane.b32.xlu0 %v2299, 32
        %v2339 = vpop.permute.xlu0 %2338
        %2340 = vrot.lane.b32.xlu0 %v2300, 32
        %v2341 = vpop.permute.xlu0 %2340
        %2342 = vrot.lane.b32.xlu0 %v2301, 32
        %v2343 = vpop.permute.xlu0 %2342
        %2344 = vrot.lane.b32.xlu0 %v2302, 32
        %v2345 = vpop.permute.xlu0 %2344
        %2346 = vrot.lane.b32.xlu0 %v2303, 32
        %v2347 = vpop.permute.xlu0 %2346
        %2348 = vrot.lane.b32.xlu0 %v2304, 32
        %v2349 = vpop.permute.xlu0 %2348
        %2350 = vrot.lane.b32.xlu0 %v2305, 32
        %v2351 = vpop.permute.xlu0 %2350
        %2352 = vrot.lane.b32.xlu0 %v2306, 32
        %v2353 = vpop.permute.xlu0 %2352
        %2354 = vrot.lane.b32.xlu0 %v2307, 32
        %v2355 = vpop.permute.xlu0 %2354
        %vm2372 = vcmask 392448
        %2373 = vst.msk [vmem:[#allocation2 + $0x8] sm:$0xff] %vm2372, %v2325
        %2374 = vst.msk [vmem:[#allocation2 + $0x10] sm:$0xff] %vm2372, %v2327
        %2375 = vst.msk [vmem:[#allocation2 + $0x18] sm:$0xff] %vm2372, %v2329
        %2376 = vst.msk [vmem:[#allocation2 + $0x20] sm:$0xff] %vm2372, %v2331
        %2377 = vst.msk [vmem:[#allocation2 + $0x28] sm:$0xff] %vm2372, %v2333
        %2378 = vst.msk [vmem:[#allocation2 + $0x30] sm:$0xff] %vm2372, %v2335
        %2379 = vst.msk [vmem:[#allocation2 + $0x38] sm:$0xff] %vm2372, %v2337
        %2380 = vst.msk [vmem:[#allocation2 + $0x40] sm:$0xff] %vm2372, %v2339
        %2381 = vst.msk [vmem:[#allocation2 + $0x48] sm:$0xff] %vm2372, %v2341
        %2382 = vst.msk [vmem:[#allocation2 + $0x50] sm:$0xff] %vm2372, %v2343
        %2383 = vst.msk [vmem:[#allocation2 + $0x58] sm:$0xff] %vm2372, %v2345
        %2384 = vst.msk [vmem:[#allocation2 + $0x60] sm:$0xff] %vm2372, %v2347
        %2385 = vst.msk [vmem:[#allocation2 + $0x68] sm:$0xff] %vm2372, %v2349
        %2386 = vst.msk [vmem:[#allocation2 + $0x70] sm:$0xff] %vm2372, %v2351
        %2387 = vst.msk [vmem:[#allocation2 + $0x78] sm:$0xff] %vm2372, %v2353
        %2388 = vst.msk [vmem:[#allocation2 + $0x80] sm:$0xff] %vm2372, %v2355
        %v2389 = vld [vmem:[#allocation2] sm:$0xff]
        %v2390 = vld [vmem:[#allocation2 + $0x8] sm:$0xff]
        %v2391 = vld [vmem:[#allocation2 + $0x10] sm:$0xff]
        %v2392 = vld [vmem:[#allocation2 + $0x18] sm:$0xff]
        %v2393 = vld [vmem:[#allocation2 + $0x20] sm:$0xff]
        %v2394 = vld [vmem:[#allocation2 + $0x28] sm:$0xff]
        %v2395 = vld [vmem:[#allocation2 + $0x30] sm:$0xff]
        %v2396 = vld [vmem:[#allocation2 + $0x38] sm:$0xff]
        %v2397 = vld [vmem:[#allocation2 + $0x40] sm:$0xff]
        %v2398 = vld [vmem:[#allocation2 + $0x48] sm:$0xff]
        %v2399 = vld [vmem:[#allocation2 + $0x50] sm:$0xff]
        %v2400 = vld [vmem:[#allocation2 + $0x58] sm:$0xff]
        %v2401 = vld [vmem:[#allocation2 + $0x60] sm:$0xff]
        %v2402 = vld [vmem:[#allocation2 + $0x68] sm:$0xff]
        %v2403 = vld [vmem:[#allocation2 + $0x70] sm:$0xff]
        %v2404 = vld [vmem:[#allocation2 + $0x78] sm:$0xff]
        %v2405 = vld [vmem:[%s5] sm:$0xf]
        %v2406 = vld [vmem:[%s5 + $0x4] sm:$0xf]
        %v2407 = vld [vmem:[%s5 + $0x8] sm:$0xf]
        %v2408 = vld [vmem:[%s5 + $0xc] sm:$0xf]
        %v2409 = vld [vmem:[%s5 + $0x10] sm:$0xf]
        %v2410 = vld [vmem:[%s5 + $0x14] sm:$0xf]
        %v2411 = vld [vmem:[#allocation2 + $0x80] sm:$0xff]
        %s2412 = scalar_lea.vmem %s5, 24
        %v2413 = vld [vmem:[%s2412] sm:$0xf]
        %v2414 = vld [vmem:[%s2412 + $0x4] sm:$0xf]
        %v2415 = vld [vmem:[%s2412 + $0x8] sm:$0xf]
        %v2416 = vld [vmem:[%s2412 + $0xc] sm:$0xf]
        %v2417 = vld [vmem:[%s2412 + $0x10] sm:$0xf]
        %v2418 = vld [vmem:[%s2412 + $0x14] sm:$0xf]
        %v2425 = vunpack.c.l.b16 %v2413
        %v2426 = vunpack.c.l.b16 %v2414
        %v2427 = vunpack.c.l.b16 %v2415
        %v2428 = vunpack.c.l.b16 %v2416
        %v2429 = vunpack.c.l.b16 %v2417
        %v2430 = vunpack.c.l.b16 %v2418
        %v2431 = vpack.c.b16 %v2426, %v2425
        %v2432 = vpack.c.b16 %v2428, %v2427
        %v2433 = vpack.c.b16 %v2430, %v2429
        %v2438 = vsel %vm1838, %v2390, 0
        %v2441 = vsel %vm1838, %v2391, 0
        %v2444 = vsel %vm1838, %v2392, 0
        %v2447 = vsel %vm1838, %v2393, 0
        %v2450 = vsel %vm1838, %v2394, 0
        %v2453 = vsel %vm1838, %v2395, 0
        %v2456 = vsel %vm1838, %v2396, 0
        %v2459 = vsel %vm1838, %v2397, 0
        %v2462 = vsel %vm1838, %v2398, 0
        %v2465 = vsel %vm1838, %v2399, 0
        %v2468 = vsel %vm1838, %v2400, 0
        %v2471 = vsel %vm1838, %v2401, 0
        %v2474 = vsel %vm1838, %v2402, 0
        %v2477 = vsel %vm1838, %v2403, 0
        %v2480 = vsel %vm1838, %v2404, 0
        %v2483 = vsel %vm1838, %v2411, 0
        %2485 = vmatprep.subr.bf16.mxu0 0
        %2486 = vmatpush1.bf16.msra.mxu0 %v2431
        %2487 = vmatprep.subr.bf16.mxu0 0
        %2488 = vmatpush1.bf16.msra.mxu0 %v2432
        %2489 = vmatprep.subr.bf16.mxu0 0
        %2490 = vmatpush1.bf16.msra.mxu0 %v2433
        %2491 = vmatprep.subr.bf16.mxu0 0
        %2492 = vmatpush1.bf16.msra.mxu0 0
        %2493 = vmatprep.subr.bf16.mxu0 0
        %2494 = vmatpush1.bf16.msra.mxu0 0
        %2495 = vmatprep.subr.bf16.mxu0 0
        %2496 = vmatpush1.bf16.msra.mxu0 0
        %2497 = vmatprep.subr.bf16.mxu0 0
        %2498 = vmatpush1.bf16.msra.mxu0 0
        %2499 = vmatprep.subr.bf16.mxu0 0
        %2500 = vmatpush1.bf16.msra.mxu0 0
        %2501 = vmatprep.subr.bf16.mxu0 0
        %2502 = vmatpush1.bf16.msra.mxu0 0
        %2503 = vmatprep.subr.bf16.mxu0 0
        %2504 = vmatpush1.bf16.msra.mxu0 0
        %2505 = vmatprep.subr.bf16.mxu0 0
        %2506 = vmatpush1.bf16.msra.mxu0 0
        %2507 = vmatprep.subr.bf16.mxu0 0
        %2508 = vmatpush1.bf16.msra.mxu0 0
        %2509 = vmatprep.subr.bf16.mxu0 0
        %2510 = vmatpush1.bf16.msra.mxu0 0
        %2511 = vmatprep.subr.bf16.mxu0 0
        %2512 = vmatpush1.bf16.msra.mxu0 0
        %2513 = vmatprep.subr.bf16.mxu0 0
        %2514 = vmatpush1.bf16.msra.mxu0 0
        %2515 = vmatprep.subr.bf16.mxu0 0
        %2516 = vmatpush1.bf16.msra.mxu0 0
        %2517 = vmatprep.mubr.bf16.mxu0 0
        %2518 = vmatmul.mubr.bf16.gmra.mrb[0].mxu0 %v2438
        %v2519 = vpop.f32.mrb[0].mxu0
        %v2520 = vadd.f32 0.0, %v2519
        %v2521 = vpop.f32.mrb[0].mxu0
        %v2522 = vpop.f32.mrb[0].mxu0
        %v2523 = vadd.f32 0.0, %v2522
        %v2524 = vpop.f32.mrb[0].mxu0
        %2525 = vmatprep.mubr.bf16.mxu0 0
        %2526 = vmatmul.mubr.bf16.gmra.mrb[0].mxu0 %v2441
        %v2527 = vpop.f32.mrb[0].mxu0
        %v2528 = vadd.f32 0.0, %v2527
        %v2529 = vpop.f32.mrb[0].mxu0
        %v2530 = vpop.f32.mrb[0].mxu0
        %v2531 = vadd.f32 0.0, %v2530
        %v2532 = vpop.f32.mrb[0].mxu0
        %2533 = vmatprep.mubr.bf16.mxu0 0
        %2534 = vmatmul.mubr.bf16.gmra.mrb[0].mxu0 %v2444
        %v2535 = vpop.f32.mrb[0].mxu0
        %v2536 = vadd.f32 0.0, %v2535
        %v2537 = vpop.f32.mrb[0].mxu0
        %v2538 = vpop.f32.mrb[0].mxu0
        %v2539 = vadd.f32 0.0, %v2538
        %v2540 = vpop.f32.mrb[0].mxu0
        %2541 = vmatprep.mubr.bf16.mxu0 0
        %2542 = vmatmul.mubr.bf16.gmra.mrb[0].mxu0 %v2447
        %v2543 = vpop.f32.mrb[0].mxu0
        %v2544 = vadd.f32 0.0, %v2543
        %v2545 = vpop.f32.mrb[0].mxu0
        %v2546 = vpop.f32.mrb[0].mxu0
        %v2547 = vadd.f32 0.0, %v2546
        %v2548 = vpop.f32.mrb[0].mxu0
        %2549 = vmatprep.mubr.bf16.mxu0 0
        %2550 = vmatmul.mubr.bf16.gmra.mrb[0].mxu0 %v2450
        %v2551 = vpop.f32.mrb[0].mxu0
        %v2552 = vadd.f32 0.0, %v2551
        %v2553 = vpop.f32.mrb[0].mxu0
        %v2554 = vpop.f32.mrb[0].mxu0
        %v2555 = vadd.f32 0.0, %v2554
        %v2556 = vpop.f32.mrb[0].mxu0
        %2557 = vmatprep.mubr.bf16.mxu0 0
        %2558 = vmatmul.mubr.bf16.gmra.mrb[0].mxu0 %v2453
        %v2559 = vpop.f32.mrb[0].mxu0
        %v2560 = vadd.f32 0.0, %v2559
        %v2561 = vpop.f32.mrb[0].mxu0
        %v2562 = vpop.f32.mrb[0].mxu0
        %v2563 = vadd.f32 0.0, %v2562
        %v2564 = vpop.f32.mrb[0].mxu0
        %2565 = vmatprep.mubr.bf16.mxu0 0
        %2566 = vmatmul.mubr.bf16.gmra.mrb[0].mxu0 %v2456
        %v2567 = vpop.f32.mrb[0].mxu0
        %v2568 = vadd.f32 0.0, %v2567
        %v2569 = vpop.f32.mrb[0].mxu0
        %v2570 = vpop.f32.mrb[0].mxu0
        %v2571 = vadd.f32 0.0, %v2570
        %v2572 = vpop.f32.mrb[0].mxu0
        %2573 = vmatprep.mubr.bf16.mxu0 0
        %2574 = vmatmul.mubr.bf16.gmra.mrb[0].mxu0 %v2459
        %v2575 = vpop.f32.mrb[0].mxu0
        %v2576 = vadd.f32 0.0, %v2575
        %v2577 = vpop.f32.mrb[0].mxu0
        %v2578 = vpop.f32.mrb[0].mxu0
        %v2579 = vadd.f32 0.0, %v2578
        %v2580 = vpop.f32.mrb[0].mxu0
        %2581 = vmatprep.mubr.bf16.mxu0 0
        %2582 = vmatmul.mubr.bf16.gmra.mrb[0].mxu0 %v2462
        %v2583 = vpop.f32.mrb[0].mxu0
        %v2584 = vadd.f32 0.0, %v2583
        %v2585 = vpop.f32.mrb[0].mxu0
        %v2586 = vpop.f32.mrb[0].mxu0
        %v2587 = vadd.f32 0.0, %v2586
        %v2588 = vpop.f32.mrb[0].mxu0
        %2589 = vmatprep.mubr.bf16.mxu0 0
        %2590 = vmatmul.mubr.bf16.gmra.mrb[0].mxu0 %v2465
        %v2591 = vpop.f32.mrb[0].mxu0
        %v2592 = vadd.f32 0.0, %v2591
        %v2593 = vpop.f32.mrb[0].mxu0
        %v2594 = vpop.f32.mrb[0].mxu0
        %v2595 = vadd.f32 0.0, %v2594
        %v2596 = vpop.f32.mrb[0].mxu0
        %2597 = vmatprep.mubr.bf16.mxu0 0
        %2598 = vmatmul.mubr.bf16.gmra.mrb[0].mxu0 %v2468
        %v2599 = vpop.f32.mrb[0].mxu0
        %v2600 = vadd.f32 0.0, %v2599
        %v2601 = vpop.f32.mrb[0].mxu0
        %v2602 = vpop.f32.mrb[0].mxu0
        %v2603 = vadd.f32 0.0, %v2602
        %v2604 = vpop.f32.mrb[0].mxu0
        %2605 = vmatprep.mubr.bf16.mxu0 0
        %2606 = vmatmul.mubr.bf16.gmra.mrb[0].mxu0 %v2471
        %v2607 = vpop.f32.mrb[0].mxu0
        %v2608 = vadd.f32 0.0, %v2607
        %v2609 = vpop.f32.mrb[0].mxu0
        %v2610 = vpop.f32.mrb[0].mxu0
        %v2611 = vadd.f32 0.0, %v2610
        %v2612 = vpop.f32.mrb[0].mxu0
        %2613 = vmatprep.mubr.bf16.mxu0 0
        %2614 = vmatmul.mubr.bf16.gmra.mrb[0].mxu0 %v2474
        %v2615 = vpop.f32.mrb[0].mxu0
        %v2616 = vadd.f32 0.0, %v2615
        %v2617 = vpop.f32.mrb[0].mxu0
        %v2618 = vpop.f32.mrb[0].mxu0
        %v2619 = vadd.f32 0.0, %v2618
        %v2620 = vpop.f32.mrb[0].mxu0
        %2621 = vmatprep.mubr.bf16.mxu0 0
        %2622 = vmatmul.mubr.bf16.gmra.mrb[0].mxu0 %v2477
        %v2623 = vpop.f32.mrb[0].mxu0
        %v2624 = vadd.f32 0.0, %v2623
        %v2625 = vpop.f32.mrb[0].mxu0
        %v2626 = vpop.f32.mrb[0].mxu0
        %v2627 = vadd.f32 0.0, %v2626
        %v2628 = vpop.f32.mrb[0].mxu0
        %2629 = vmatprep.mubr.bf16.mxu0 0
        %2630 = vmatmul.mubr.bf16.gmra.mrb[0].mxu0 %v2480
        %v2631 = vpop.f32.mrb[0].mxu0
        %v2632 = vadd.f32 0.0, %v2631
        %v2633 = vpop.f32.mrb[0].mxu0
        %v2634 = vpop.f32.mrb[0].mxu0
        %v2635 = vadd.f32 0.0, %v2634
        %v2636 = vpop.f32.mrb[0].mxu0
        %2637 = vmatprep.mubr.bf16.mxu0 0
        %2638 = vmatmul.mubr.bf16.gmra.mrb[0].mxu0 %v2483
        %v2639 = vpop.f32.mrb[0].mxu0
        %v2640 = vadd.f32 0.0, %v2639
        %v2641 = vpop.f32.mrb[0].mxu0
        %v2642 = vpop.f32.mrb[0].mxu0
        %v2643 = vadd.f32 0.0, %v2642
        %v2644 = vpop.f32.mrb[0].mxu0
        %2645 = vdwg.mxu0
        %v2652 = vunpack.c.l.b16 %v2405
        %v2653 = vunpack.c.l.b16 %v2406
        %v2654 = vunpack.c.l.b16 %v2407
        %v2655 = vunpack.c.l.b16 %v2408
        %v2656 = vunpack.c.l.b16 %v2409
        %v2657 = vunpack.c.l.b16 %v2410
        %v2658 = vpack.c.b16 %v2653, %v2652
        %v2659 = vpack.c.b16 %v2655, %v2654
        %v2660 = vpack.c.b16 %v2657, %v2656
        %v2665 = vsel %vm1838, %v2389, 0
        %2667 = vmatprep.subr.bf16.mxu0 0
        %2668 = vmatpush1.bf16.msra.mxu0 %v2658
        %2669 = vmatprep.subr.bf16.mxu0 0
        %2670 = vmatpush1.bf16.msra.mxu0 %v2659
        %2671 = vmatprep.subr.bf16.mxu0 0
        %2672 = vmatpush1.bf16.msra.mxu0 %v2660
        %2673 = vmatprep.subr.bf16.mxu0 0
        %2674 = vmatpush1.bf16.msra.mxu0 0
        %2675 = vmatprep.subr.bf16.mxu0 0
        %2676 = vmatpush1.bf16.msra.mxu0 0
        %2677 = vmatprep.subr.bf16.mxu0 0
        %2678 = vmatpush1.bf16.msra.mxu0 0
        %2679 = vmatprep.subr.bf16.mxu0 0
        %2680 = vmatpush1.bf16.msra.mxu0 0
        %2681 = vmatprep.subr.bf16.mxu0 0
        %2682 = vmatpush1.bf16.msra.mxu0 0
        %2683 = vmatprep.subr.bf16.mxu0 0
        %2684 = vmatpush1.bf16.msra.mxu0 0
        %2685 = vmatprep.subr.bf16.mxu0 0
        %2686 = vmatpush1.bf16.msra.mxu0 0
        %2687 = vmatprep.subr.bf16.mxu0 0
        %2688 = vmatpush1.bf16.msra.mxu0 0
        %2689 = vmatprep.subr.bf16.mxu0 0
        %2690 = vmatpush1.bf16.msra.mxu0 0
        %2691 = vmatprep.subr.bf16.mxu0 0
        %2692 = vmatpush1.bf16.msra.mxu0 0
        %2693 = vmatprep.subr.bf16.mxu0 0
        %2694 = vmatpush1.bf16.msra.mxu0 0
        %2695 = vmatprep.subr.bf16.mxu0 0
        %2696 = vmatpush1.bf16.msra.mxu0 0
        %2697 = vmatprep.subr.bf16.mxu0 0
        %2698 = vmatpush1.bf16.msra.mxu0 0
        %2699 = vmatprep.mubr.bf16.mxu0 0
        %2700 = vmatmul.mubr.bf16.gmra.mrb[0].mxu0 %v2665
        %v2701 = vpop.f32.mrb[0].mxu0
        %v2702 = vadd.f32 %v2520, %v2701
        %v2703 = vpop.f32.mrb[0].mxu0
        %v2704 = vpop.f32.mrb[0].mxu0
        %v2705 = vadd.f32 %v2523, %v2704
        %v2706 = vpop.f32.mrb[0].mxu0
        %2707 = vmatprep.mubr.bf16.mxu0 0
        %2708 = vmatmul.mubr.bf16.gmra.mrb[0].mxu0 %v2438
        %v2709 = vpop.f32.mrb[0].mxu0
        %v2710 = vadd.f32 %v2528, %v2709
        %v2711 = vpop.f32.mrb[0].mxu0
        %v2712 = vpop.f32.mrb[0].mxu0
        %v2713 = vadd.f32 %v2531, %v2712
        %v2714 = vpop.f32.mrb[0].mxu0
        %2715 = vmatprep.mubr.bf16.mxu0 0
        %2716 = vmatmul.mubr.bf16.gmra.mrb[0].mxu0 %v2441
        %v2717 = vpop.f32.mrb[0].mxu0
        %v2718 = vadd.f32 %v2536, %v2717
        %v2719 = vpop.f32.mrb[0].mxu0
        %v2720 = vpop.f32.mrb[0].mxu0
        %v2721 = vadd.f32 %v2539, %v2720
        %v2722 = vpop.f32.mrb[0].mxu0
        %2723 = vmatprep.mubr.bf16.mxu0 0
        %2724 = vmatmul.mubr.bf16.gmra.mrb[0].mxu0 %v2444
        %v2725 = vpop.f32.mrb[0].mxu0
        %v2726 = vadd.f32 %v2544, %v2725
        %v2727 = vpop.f32.mrb[0].mxu0
        %v2728 = vpop.f32.mrb[0].mxu0
        %v2729 = vadd.f32 %v2547, %v2728
        %v2730 = vpop.f32.mrb[0].mxu0
        %2731 = vmatprep.mubr.bf16.mxu0 0
        %2732 = vmatmul.mubr.bf16.gmra.mrb[0].mxu0 %v2447
        %v2733 = vpop.f32.mrb[0].mxu0
        %v2734 = vadd.f32 %v2552, %v2733
        %v2735 = vpop.f32.mrb[0].mxu0
        %v2736 = vpop.f32.mrb[0].mxu0
        %v2737 = vadd.f32 %v2555, %v2736
        %v2738 = vpop.f32.mrb[0].mxu0
        %2739 = vmatprep.mubr.bf16.mxu0 0
        %2740 = vmatmul.mubr.bf16.gmra.mrb[0].mxu0 %v2450
        %v2741 = vpop.f32.mrb[0].mxu0
        %v2742 = vadd.f32 %v2560, %v2741
        %v2743 = vpop.f32.mrb[0].mxu0
        %v2744 = vpop.f32.mrb[0].mxu0
        %v2745 = vadd.f32 %v2563, %v2744
        %v2746 = vpop.f32.mrb[0].mxu0
        %2747 = vmatprep.mubr.bf16.mxu0 0
        %2748 = vmatmul.mubr.bf16.gmra.mrb[0].mxu0 %v2453
        %v2749 = vpop.f32.mrb[0].mxu0
        %v2750 = vadd.f32 %v2568, %v2749
        %v2751 = vpop.f32.mrb[0].mxu0
        %v2752 = vpop.f32.mrb[0].mxu0
        %v2753 = vadd.f32 %v2571, %v2752
        %v2754 = vpop.f32.mrb[0].mxu0
        %2755 = vmatprep.mubr.bf16.mxu0 0
        %2756 = vmatmul.mubr.bf16.gmra.mrb[0].mxu0 %v2456
        %v2757 = vpop.f32.mrb[0].mxu0
        %v2758 = vadd.f32 %v2576, %v2757
        %v2759 = vpop.f32.mrb[0].mxu0
        %v2760 = vpop.f32.mrb[0].mxu0
        %v2761 = vadd.f32 %v2579, %v2760
        %v2762 = vpop.f32.mrb[0].mxu0
        %2763 = vmatprep.mubr.bf16.mxu0 0
        %2764 = vmatmul.mubr.bf16.gmra.mrb[0].mxu0 %v2459
        %v2765 = vpop.f32.mrb[0].mxu0
        %v2766 = vadd.f32 %v2584, %v2765
        %v2767 = vpop.f32.mrb[0].mxu0
        %v2768 = vpop.f32.mrb[0].mxu0
        %v2769 = vadd.f32 %v2587, %v2768
        %v2770 = vpop.f32.mrb[0].mxu0
        %2771 = vmatprep.mubr.bf16.mxu0 0
        %2772 = vmatmul.mubr.bf16.gmra.mrb[0].mxu0 %v2462
        %v2773 = vpop.f32.mrb[0].mxu0
        %v2774 = vadd.f32 %v2592, %v2773
        %v2775 = vpop.f32.mrb[0].mxu0
        %v2776 = vpop.f32.mrb[0].mxu0
        %v2777 = vadd.f32 %v2595, %v2776
        %v2778 = vpop.f32.mrb[0].mxu0
        %2779 = vmatprep.mubr.bf16.mxu0 0
        %2780 = vmatmul.mubr.bf16.gmra.mrb[0].mxu0 %v2465
        %v2781 = vpop.f32.mrb[0].mxu0
        %v2782 = vadd.f32 %v2600, %v2781
        %v2783 = vpop.f32.mrb[0].mxu0
        %v2784 = vpop.f32.mrb[0].mxu0
        %v2785 = vadd.f32 %v2603, %v2784
        %v2786 = vpop.f32.mrb[0].mxu0
        %2787 = vmatprep.mubr.bf16.mxu0 0
        %2788 = vmatmul.mubr.bf16.gmra.mrb[0].mxu0 %v2468
        %v2789 = vpop.f32.mrb[0].mxu0
        %v2790 = vadd.f32 %v2608, %v2789
        %v2791 = vpop.f32.mrb[0].mxu0
        %v2792 = vpop.f32.mrb[0].mxu0
        %v2793 = vadd.f32 %v2611, %v2792
        %v2794 = vpop.f32.mrb[0].mxu0
        %2795 = vmatprep.mubr.bf16.mxu0 0
        %2796 = vmatmul.mubr.bf16.gmra.mrb[0].mxu0 %v2471
        %v2797 = vpop.f32.mrb[0].mxu0
        %v2798 = vadd.f32 %v2616, %v2797
        %v2799 = vpop.f32.mrb[0].mxu0
        %v2800 = vpop.f32.mrb[0].mxu0
        %v2801 = vadd.f32 %v2619, %v2800
        %v2802 = vpop.f32.mrb[0].mxu0
        %2803 = vmatprep.mubr.bf16.mxu0 0
        %2804 = vmatmul.mubr.bf16.gmra.mrb[0].mxu0 %v2474
        %v2805 = vpop.f32.mrb[0].mxu0
        %v2806 = vadd.f32 %v2624, %v2805
        %v2807 = vpop.f32.mrb[0].mxu0
        %v2808 = vpop.f32.mrb[0].mxu0
        %v2809 = vadd.f32 %v2627, %v2808
        %v2810 = vpop.f32.mrb[0].mxu0
        %2811 = vmatprep.mubr.bf16.mxu0 0
        %2812 = vmatmul.mubr.bf16.gmra.mrb[0].mxu0 %v2477
        %v2813 = vpop.f32.mrb[0].mxu0
        %v2814 = vadd.f32 %v2632, %v2813
        %v2815 = vpop.f32.mrb[0].mxu0
        %v2816 = vpop.f32.mrb[0].mxu0
        %v2817 = vadd.f32 %v2635, %v2816
        %v2818 = vpop.f32.mrb[0].mxu0
        %2819 = vmatprep.mubr.bf16.mxu0 0
        %2820 = vmatmul.mubr.bf16.gmra.mrb[0].mxu0 %v2480
        %v2821 = vpop.f32.mrb[0].mxu0
        %v2822 = vadd.f32 %v2640, %v2821
        %v2823 = vpop.f32.mrb[0].mxu0
        %v2824 = vpop.f32.mrb[0].mxu0
        %v2825 = vadd.f32 %v2643, %v2824
        %v2826 = vpop.f32.mrb[0].mxu0
        %2827 = vdwg.mxu0
        %v2828 = vld [vmem:[#allocation2 + $0x10] sm:$0xff]
        %v2829 = vld [vmem:[#allocation2 + $0x18] sm:$0xff]
        %v2830 = vld [vmem:[#allocation2 + $0x20] sm:$0xff]
        %v2831 = vld [vmem:[#allocation2 + $0x28] sm:$0xff]
        %v2832 = vld [vmem:[#allocation2 + $0x30] sm:$0xff]
        %v2833 = vld [vmem:[#allocation2 + $0x38] sm:$0xff]
        %v2834 = vld [vmem:[#allocation2 + $0x40] sm:$0xff]
        %v2835 = vld [vmem:[#allocation2 + $0x48] sm:$0xff]
        %v2836 = vld [vmem:[#allocation2 + $0x50] sm:$0xff]
        %v2837 = vld [vmem:[#allocation2 + $0x58] sm:$0xff]
        %v2838 = vld [vmem:[#allocation2 + $0x60] sm:$0xff]
        %v2839 = vld [vmem:[#allocation2 + $0x68] sm:$0xff]
        %v2840 = vld [vmem:[#allocation2 + $0x70] sm:$0xff]
        %v2841 = vld [vmem:[#allocation2 + $0x78] sm:$0xff]
        %v2842 = vld [vmem:[#allocation2 + $0x80] sm:$0xff]
        %v2843 = vld [vmem:[#allocation2 + $0x88] sm:$0xff]
        %s2844 = scalar_lea.vmem %s5, 48
        %v2845 = vld [vmem:[%s2844] sm:$0xf]
        %v2846 = vld [vmem:[%s2844 + $0x4] sm:$0xf]
        %v2847 = vld [vmem:[%s2844 + $0x8] sm:$0xf]
        %v2848 = vld [vmem:[%s2844 + $0xc] sm:$0xf]
        %v2849 = vld [vmem:[%s2844 + $0x10] sm:$0xf]
        %v2850 = vld [vmem:[%s2844 + $0x14] sm:$0xf]
        %v2857 = vunpack.c.l.b16 %v2845
        %v2858 = vunpack.c.l.b16 %v2846
        %v2859 = vunpack.c.l.b16 %v2847
        %v2860 = vunpack.c.l.b16 %v2848
        %v2861 = vunpack.c.l.b16 %v2849
        %v2862 = vunpack.c.l.b16 %v2850
        %v2863 = vpack.c.b16 %v2858, %v2857
        %v2864 = vpack.c.b16 %v2860, %v2859
        %v2865 = vpack.c.b16 %v2862, %v2861
        %v2870 = vsel %vm1838, %v2828, 0
        %v2873 = vsel %vm1838, %v2829, 0
        %v2876 = vsel %vm1838, %v2830, 0
        %v2879 = vsel %vm1838, %v2831, 0
        %v2882 = vsel %vm1838, %v2832, 0
        %v2885 = vsel %vm1838, %v2833, 0
        %v2888 = vsel %vm1838, %v2834, 0
        %v2891 = vsel %vm1838, %v2835, 0
        %v2894 = vsel %vm1838, %v2836, 0
        %v2897 = vsel %vm1838, %v2837, 0
        %v2900 = vsel %vm1838, %v2838, 0
        %v2903 = vsel %vm1838, %v2839, 0
        %v2906 = vsel %vm1838, %v2840, 0
        %v2909 = vsel %vm1838, %v2841, 0
        %v2912 = vsel %vm1838, %v2842, 0
        %v2915 = vsel %vm1838, %v2843, 0
        %2917 = vmatprep.subr.bf16.mxu0 0
        %2918 = vmatpush1.bf16.msra.mxu0 %v2863
        %2919 = vmatprep.subr.bf16.mxu0 0
        %2920 = vmatpush1.bf16.msra.mxu0 %v2864
        %2921 = vmatprep.subr.bf16.mxu0 0
        %2922 = vmatpush1.bf16.msra.mxu0 %v2865
        %2923 = vmatprep.subr.bf16.mxu0 0
        %2924 = vmatpush1.bf16.msra.mxu0 0
        %2925 = vmatprep.subr.bf16.mxu0 0
        %2926 = vmatpush1.bf16.msra.mxu0 0
        %2927 = vmatprep.subr.bf16.mxu0 0
        %2928 = vmatpush1.bf16.msra.mxu0 0
        %2929 = vmatprep.subr.bf16.mxu0 0
        %2930 = vmatpush1.bf16.msra.mxu0 0
        %2931 = vmatprep.subr.bf16.mxu0 0
        %2932 = vmatpush1.bf16.msra.mxu0 0
        %2933 = vmatprep.subr.bf16.mxu0 0
        %2934 = vmatpush1.bf16.msra.mxu0 0
        %2935 = vmatprep.subr.bf16.mxu0 0
        %2936 = vmatpush1.bf16.msra.mxu0 0
        %2937 = vmatprep.subr.bf16.mxu0 0
        %2938 = vmatpush1.bf16.msra.mxu0 0
        %2939 = vmatprep.subr.bf16.mxu0 0
        %2940 = vmatpush1.bf16.msra.mxu0 0
        %2941 = vmatprep.subr.bf16.mxu0 0
        %2942 = vmatpush1.bf16.msra.mxu0 0
        %2943 = vmatprep.subr.bf16.mxu0 0
        %2944 = vmatpush1.bf16.msra.mxu0 0
        %2945 = vmatprep.subr.bf16.mxu0 0
        %2946 = vmatpush1.bf16.msra.mxu0 0
        %2947 = vmatprep.subr.bf16.mxu0 0
        %2948 = vmatpush1.bf16.msra.mxu0 0
        %2949 = vmatprep.mubr.bf16.mxu0 0
        %2950 = vmatmul.mubr.bf16.gmra.mrb[0].mxu0 %v2870
        %v2951 = vpop.f32.mrb[0].mxu0
        %v2952 = vadd.f32 0.0, %v2951
        %v2953 = vpop.f32.mrb[0].mxu0
        %v2954 = vpop.f32.mrb[0].mxu0
        %v2955 = vadd.f32 0.0, %v2954
        %v2956 = vpop.f32.mrb[0].mxu0
        %2957 = vmatprep.mubr.bf16.mxu0 0
        %2958 = vmatmul.mubr.bf16.gmra.mrb[0].mxu0 %v2873
        %v2959 = vpop.f32.mrb[0].mxu0
        %v2960 = vadd.f32 0.0, %v2959
        %v2961 = vpop.f32.mrb[0].mxu0
        %v2962 = vpop.f32.mrb[0].mxu0
        %v2963 = vadd.f32 0.0, %v2962
        %v2964 = vpop.f32.mrb[0].mxu0
        %2965 = vmatprep.mubr.bf16.mxu0 0
        %2966 = vmatmul.mubr.bf16.gmra.mrb[0].mxu0 %v2876
        %v2967 = vpop.f32.mrb[0].mxu0
        %v2968 = vadd.f32 0.0, %v2967
        %v2969 = vpop.f32.mrb[0].mxu0
        %v2970 = vpop.f32.mrb[0].mxu0
        %v2971 = vadd.f32 0.0, %v2970
        %v2972 = vpop.f32.mrb[0].mxu0
        %2973 = vmatprep.mubr.bf16.mxu0 0
        %2974 = vmatmul.mubr.bf16.gmra.mrb[0].mxu0 %v2879
        %v2975 = vpop.f32.mrb[0].mxu0
        %v2976 = vadd.f32 0.0, %v2975
        %v2977 = vpop.f32.mrb[0].mxu0
        %v2978 = vpop.f32.mrb[0].mxu0
        %v2979 = vadd.f32 0.0, %v2978
        %v2980 = vpop.f32.mrb[0].mxu0
        %2981 = vmatprep.mubr.bf16.mxu0 0
        %2982 = vmatmul.mubr.bf16.gmra.mrb[0].mxu0 %v2882
        %v2983 = vpop.f32.mrb[0].mxu0
        %v2984 = vadd.f32 0.0, %v2983
        %v2985 = vpop.f32.mrb[0].mxu0
        %v2986 = vpop.f32.mrb[0].mxu0
        %v2987 = vadd.f32 0.0, %v2986
        %v2988 = vpop.f32.mrb[0].mxu0
        %2989 = vmatprep.mubr.bf16.mxu0 0
        %2990 = vmatmul.mubr.bf16.gmra.mrb[0].mxu0 %v2885
        %v2991 = vpop.f32.mrb[0].mxu0
        %v2992 = vadd.f32 0.0, %v2991
        %v2993 = vpop.f32.mrb[0].mxu0
        %v2994 = vpop.f32.mrb[0].mxu0
        %v2995 = vadd.f32 0.0, %v2994
        %v2996 = vpop.f32.mrb[0].mxu0
        %2997 = vmatprep.mubr.bf16.mxu0 0
        %2998 = vmatmul.mubr.bf16.gmra.mrb[0].mxu0 %v2888
        %v2999 = vpop.f32.mrb[0].mxu0
        %v3000 = vadd.f32 0.0, %v2999
        %v3001 = vpop.f32.mrb[0].mxu0
        %v3002 = vpop.f32.mrb[0].mxu0
        %v3003 = vadd.f32 0.0, %v3002
        %v3004 = vpop.f32.mrb[0].mxu0
        %3005 = vmatprep.mubr.bf16.mxu0 0
        %3006 = vmatmul.mubr.bf16.gmra.mrb[0].mxu0 %v2891
        %v3007 = vpop.f32.mrb[0].mxu0
        %v3008 = vadd.f32 0.0, %v3007
        %v3009 = vpop.f32.mrb[0].mxu0
        %v3010 = vpop.f32.mrb[0].mxu0
        %v3011 = vadd.f32 0.0, %v3010
        %v3012 = vpop.f32.mrb[0].mxu0
        %3013 = vmatprep.mubr.bf16.mxu0 0
        %3014 = vmatmul.mubr.bf16.gmra.mrb[0].mxu0 %v2894
        %v3015 = vpop.f32.mrb[0].mxu0
        %v3016 = vadd.f32 0.0, %v3015
        %v3017 = vpop.f32.mrb[0].mxu0
        %v3018 = vpop.f32.mrb[0].mxu0
        %v3019 = vadd.f32 0.0, %v3018
        %v3020 = vpop.f32.mrb[0].mxu0
        %3021 = vmatprep.mubr.bf16.mxu0 0
        %3022 = vmatmul.mubr.bf16.gmra.mrb[0].mxu0 %v2897
        %v3023 = vpop.f32.mrb[0].mxu0
        %v3024 = vadd.f32 0.0, %v3023
        %v3025 = vpop.f32.mrb[0].mxu0
        %v3026 = vpop.f32.mrb[0].mxu0
        %v3027 = vadd.f32 0.0, %v3026
        %v3028 = vpop.f32.mrb[0].mxu0
        %3029 = vmatprep.mubr.bf16.mxu0 0
        %3030 = vmatmul.mubr.bf16.gmra.mrb[0].mxu0 %v2900
        %v3031 = vpop.f32.mrb[0].mxu0
        %v3032 = vadd.f32 0.0, %v3031
        %v3033 = vpop.f32.mrb[0].mxu0
        %v3034 = vpop.f32.mrb[0].mxu0
        %v3035 = vadd.f32 0.0, %v3034
        %v3036 = vpop.f32.mrb[0].mxu0
        %3037 = vmatprep.mubr.bf16.mxu0 0
        %3038 = vmatmul.mubr.bf16.gmra.mrb[0].mxu0 %v2903
        %v3039 = vpop.f32.mrb[0].mxu0
        %v3040 = vadd.f32 0.0, %v3039
        %v3041 = vpop.f32.mrb[0].mxu0
        %v3042 = vpop.f32.mrb[0].mxu0
        %v3043 = vadd.f32 0.0, %v3042
        %v3044 = vpop.f32.mrb[0].mxu0
        %3045 = vmatprep.mubr.bf16.mxu0 0
        %3046 = vmatmul.mubr.bf16.gmra.mrb[0].mxu0 %v2906
        %v3047 = vpop.f32.mrb[0].mxu0
        %v3048 = vadd.f32 0.0, %v3047
        %v3049 = vpop.f32.mrb[0].mxu0
        %v3050 = vpop.f32.mrb[0].mxu0
        %v3051 = vadd.f32 0.0, %v3050
        %v3052 = vpop.f32.mrb[0].mxu0
        %3053 = vmatprep.mubr.bf16.mxu0 0
        %3054 = vmatmul.mubr.bf16.gmra.mrb[0].mxu0 %v2909
        %v3055 = vpop.f32.mrb[0].mxu0
        %v3056 = vadd.f32 0.0, %v3055
        %v3057 = vpop.f32.mrb[0].mxu0
        %v3058 = vpop.f32.mrb[0].mxu0
        %v3059 = vadd.f32 0.0, %v3058
        %v3060 = vpop.f32.mrb[0].mxu0
        %3061 = vmatprep.mubr.bf16.mxu0 0
        %3062 = vmatmul.mubr.bf16.gmra.mrb[0].mxu0 %v2912
        %v3063 = vpop.f32.mrb[0].mxu0
        %v3064 = vadd.f32 0.0, %v3063
        %v3065 = vpop.f32.mrb[0].mxu0
        %v3066 = vpop.f32.mrb[0].mxu0
        %v3067 = vadd.f32 0.0, %v3066
        %v3068 = vpop.f32.mrb[0].mxu0
        %3069 = vmatprep.mubr.bf16.mxu0 0
        %3070 = vmatmul.mubr.bf16.gmra.mrb[0].mxu0 %v2915
        %v3071 = vpop.f32.mrb[0].mxu0
        %v3072 = vadd.f32 0.0, %v3071
        %v3073 = vpop.f32.mrb[0].mxu0
        %v3074 = vpop.f32.mrb[0].mxu0
        %v3075 = vadd.f32 0.0, %v3074
        %v3076 = vpop.f32.mrb[0].mxu0
        %3077 = vdwg.mxu0
        %v3078 = vadd.f32 %v2702, %v2952
        %v3079 = vadd.f32 %v2705, %v2955
        %v3080 = vadd.f32 %v2710, %v2960
        %v3081 = vadd.f32 %v2713, %v2963
        %v3082 = vadd.f32 %v2718, %v2968
        %v3083 = vadd.f32 %v2721, %v2971
        %v3084 = vadd.f32 %v2726, %v2976
        %v3085 = vadd.f32 %v2729, %v2979
        %v3086 = vadd.f32 %v2734, %v2984
        %v3087 = vadd.f32 %v2737, %v2987
        %v3088 = vadd.f32 %v2742, %v2992
        %v3089 = vadd.f32 %v2745, %v2995
        %v3090 = vadd.f32 %v2750, %v3000
        %v3091 = vadd.f32 %v2753, %v3003
        %v3092 = vadd.f32 %v2758, %v3008
        %v3093 = vadd.f32 %v2761, %v3011
        %v3094 = vadd.f32 %v2766, %v3016
        %v3095 = vadd.f32 %v2769, %v3019
        %v3096 = vadd.f32 %v2774, %v3024
        %v3097 = vadd.f32 %v2777, %v3027
        %v3098 = vadd.f32 %v2782, %v3032
        %v3099 = vadd.f32 %v2785, %v3035
        %v3100 = vadd.f32 %v2790, %v3040
        %v3101 = vadd.f32 %v2793, %v3043
        %v3102 = vadd.f32 %v2798, %v3048
        %v3103 = vadd.f32 %v2801, %v3051
        %v3104 = vadd.f32 %v2806, %v3056
        %v3105 = vadd.f32 %v2809, %v3059
        %v3106 = vadd.f32 %v2814, %v3064
        %v3107 = vadd.f32 %v2817, %v3067
        %v3108 = vadd.f32 %v2822, %v3072
        %v3109 = vadd.f32 %v2825, %v3075
        %v3110 = vld [vmem:[%s479] sm:$0x1]
        %v3112 = vlaneseq
        %v3113 = vshrl.u32 %v3112, 7
        %v3114 = vsub.s32 0, %v3113
        %v3115 = vrot.slane %v3110, %v3114
        %v3117 = vadd.f32 %v3078, %v3115
        %v3118 = vadd.f32 %v3079, %v3115
        %v3119 = vadd.f32 %v3080, %v3115
        %v3120 = vadd.f32 %v3081, %v3115
        %v3121 = vadd.f32 %v3082, %v3115
        %v3122 = vadd.f32 %v3083, %v3115
        %v3123 = vadd.f32 %v3084, %v3115
        %v3124 = vadd.f32 %v3085, %v3115
        %v3125 = vadd.f32 %v3086, %v3115
        %v3126 = vadd.f32 %v3087, %v3115
        %v3127 = vadd.f32 %v3088, %v3115
        %v3128 = vadd.f32 %v3089, %v3115
        %v3129 = vadd.f32 %v3090, %v3115
        %v3130 = vadd.f32 %v3091, %v3115
        %v3131 = vadd.f32 %v3092, %v3115
        %v3132 = vadd.f32 %v3093, %v3115
        %v3133 = vadd.f32 %v3094, %v3115
        %v3134 = vadd.f32 %v3095, %v3115
        %v3135 = vadd.f32 %v3096, %v3115
        %v3136 = vadd.f32 %v3097, %v3115
        %v3137 = vadd.f32 %v3098, %v3115
        %v3138 = vadd.f32 %v3099, %v3115
        %v3139 = vadd.f32 %v3100, %v3115
        %v3140 = vadd.f32 %v3101, %v3115
        %v3141 = vadd.f32 %v3102, %v3115
        %v3142 = vadd.f32 %v3103, %v3115
        %v3143 = vadd.f32 %v3104, %v3115
        %v3144 = vadd.f32 %v3105, %v3115
        %v3145 = vadd.f32 %v3106, %v3115
        %v3146 = vadd.f32 %v3107, %v3115
        %v3147 = vadd.f32 %v3108, %v3115
        %v3148 = vadd.f32 %v3109, %v3115
        %v3149 = vld [vmem:[%s7] sm:$0xff]
        %v3150 = vld [vmem:[%s7 + $0x8] sm:$0xff]
        %v3151 = vld [vmem:[%s7 + $0x10] sm:$0xff]
        %v3152 = vld [vmem:[%s7 + $0x18] sm:$0xff]
        %v3153 = vld [vmem:[%s8] sm:$0xff]
        %v3154 = vld [vmem:[%s9] sm:$0x1]
        %v3155 = vld [vmem:[%s10] sm:$0x1]
        %vm3156 = vcmask 261120
        %v3157 = vsel %vm3156, %v3117, 0.0
        %v3158 = vsel %vm3156, %v3118, 0.0
        %v3159 = vadd.f32 %v3157, %v3158
        %v3160 = vsel %vm3156, %v3119, 0.0
        %v3161 = vadd.f32 %v3159, %v3160
        %v3162 = vsel %vm3156, %v3120, 0.0
        %v3163 = vadd.f32 %v3161, %v3162
        %v3164 = vsel %vm3156, %v3121, 0.0
        %v3165 = vadd.f32 %v3163, %v3164
        %v3166 = vsel %vm3156, %v3122, 0.0
        %v3167 = vadd.f32 %v3165, %v3166
        %v3168 = vsel %vm3156, %v3123, 0.0
        %v3169 = vadd.f32 %v3167, %v3168
        %v3170 = vsel %vm3156, %v3124, 0.0
        %v3171 = vadd.f32 %v3169, %v3170
        %v3172 = vsel %vm3156, %v3125, 0.0
        %v3173 = vadd.f32 %v3171, %v3172
        %v3174 = vsel %vm3156, %v3126, 0.0
        %v3175 = vadd.f32 %v3173, %v3174
        %v3176 = vsel %vm3156, %v3127, 0.0
        %v3177 = vadd.f32 %v3175, %v3176
        %v3178 = vsel %vm3156, %v3128, 0.0
        %v3179 = vadd.f32 %v3177, %v3178
        %v3180 = vsel %vm3156, %v3129, 0.0
        %v3181 = vadd.f32 %v3179, %v3180
        %v3182 = vsel %vm3156, %v3130, 0.0
        %v3183 = vadd.f32 %v3181, %v3182
        %v3184 = vsel %vm3156, %v3131, 0.0
        %v3185 = vadd.f32 %v3183, %v3184
        %v3186 = vsel %vm3156, %v3132, 0.0
        %v3187 = vadd.f32 %v3185, %v3186
        %v3188 = vsel %vm3156, %v3133, 0.0
        %v3189 = vadd.f32 %v3187, %v3188
        %v3190 = vsel %vm3156, %v3134, 0.0
        %v3191 = vadd.f32 %v3189, %v3190
        %v3192 = vsel %vm3156, %v3135, 0.0
        %v3193 = vadd.f32 %v3191, %v3192
        %v3194 = vsel %vm3156, %v3136, 0.0
        %v3195 = vadd.f32 %v3193, %v3194
        %v3196 = vsel %vm3156, %v3137, 0.0
        %v3197 = vadd.f32 %v3195, %v3196
        %v3198 = vsel %vm3156, %v3138, 0.0
        %v3199 = vadd.f32 %v3197, %v3198
        %v3200 = vsel %vm3156, %v3139, 0.0
        %v3201 = vadd.f32 %v3199, %v3200
        %v3202 = vsel %vm3156, %v3140, 0.0
        %v3203 = vadd.f32 %v3201, %v3202
        %v3204 = vsel %vm3156, %v3141, 0.0
        %v3205 = vadd.f32 %v3203, %v3204
        %v3206 = vsel %vm3156, %v3142, 0.0
        %v3207 = vadd.f32 %v3205, %v3206
        %v3208 = vsel %vm3156, %v3143, 0.0
        %v3209 = vadd.f32 %v3207, %v3208
        %v3210 = vsel %vm3156, %v3144, 0.0
        %v3211 = vadd.f32 %v3209, %v3210
        %v3212 = vsel %vm3156, %v3145, 0.0
        %v3213 = vadd.f32 %v3211, %v3212
        %v3214 = vsel %vm3156, %v3146, 0.0
        %v3215 = vadd.f32 %v3213, %v3214
        %v3216 = vsel %vm3156, %v3147, 0.0
        %v3217 = vadd.f32 %v3215, %v3216
        %v3218 = vsel %vm3156, %v3148, 0.0
        %v3219 = vadd.f32 %v3217, %v3218
        %v3220 = vrot.slane %v3219, 4
        %v3221 = vadd.f32 %v3219, %v3220
        %v3222 = vrot.slane %v3221, 2
        %v3223 = vadd.f32 %v3221, %v3222
        %v3224 = vrot.slane %v3223, 1
        %v3225 = vadd.f32 %v3223, %v3224
        %v3227 = vsel %vm3156, %v3225, 0
        %3229 = vmatprep.subr.mxu0 0.0
        %3230 = vmatpush1.msra.mxu0 %v3149
        %3231 = vmatprep.subr.mxu0 0.0
        %3232 = vmatpush1.msra.mxu0 %v3150
        %3233 = vmatprep.subr.mxu0 0.0
        %3234 = vmatpush1.msra.mxu0 %v3151
        %3235 = vmatprep.subr.mxu0 0.0
        %3236 = vmatpush1.msra.mxu0 %v3152
        %3237 = vmatprep.subr.mxu0 0.0
        %3238 = vmatpush1.msra.mxu0 0.0
        %3239 = vmatprep.subr.mxu0 0.0
        %3240 = vmatpush1.msra.mxu0 0.0
        %3241 = vmatprep.subr.mxu0 0.0
        %3242 = vmatpush1.msra.mxu0 0.0
        %3243 = vmatprep.subr.mxu0 0.0
        %3244 = vmatpush1.msra.mxu0 0.0
        %3245 = vmatprep.subr.mxu0 0.0
        %3246 = vmatpush1.msra.mxu0 0.0
        %3247 = vmatprep.subr.mxu0 0.0
        %3248 = vmatpush1.msra.mxu0 0.0
        %3249 = vmatprep.subr.mxu0 0.0
        %3250 = vmatpush1.msra.mxu0 0.0
        %3251 = vmatprep.subr.mxu0 0.0
        %3252 = vmatpush1.msra.mxu0 0.0
        %3253 = vmatprep.subr.mxu0 0.0
        %3254 = vmatpush1.msra.mxu0 0.0
        %3255 = vmatprep.subr.mxu0 0.0
        %3256 = vmatpush1.msra.mxu0 0.0
        %3257 = vmatprep.subr.mxu0 0.0
        %3258 = vmatpush1.msra.mxu0 0.0
        %3259 = vmatprep.subr.mxu0 0.0
        %3260 = vmatpush1.msra.mxu0 0.0
        %3261 = vmatprep.subr.mxu0 0.0
        %3262 = vmatpush1.msra.mxu0 0.0
        %3263 = vmatprep.subr.mxu0 0.0
        %3264 = vmatpush1.msra.mxu0 0.0
        %3265 = vmatprep.subr.mxu0 0.0
        %3266 = vmatpush1.msra.mxu0 0.0
        %3267 = vmatprep.subr.mxu0 0.0
        %3268 = vmatpush1.msra.mxu0 0.0
        %3269 = vmatprep.subr.mxu0 0.0
        %3270 = vmatpush1.msra.mxu0 0.0
        %3271 = vmatprep.subr.mxu0 0.0
        %3272 = vmatpush1.msra.mxu0 0.0
        %3273 = vmatprep.subr.mxu0 0.0
        %3274 = vmatpush1.msra.mxu0 0.0
        %3275 = vmatprep.subr.mxu0 0.0
        %3276 = vmatpush1.msra.mxu0 0.0
        %3277 = vmatprep.subr.mxu0 0.0
        %3278 = vmatpush1.msra.mxu0 0.0
        %3279 = vmatprep.subr.mxu0 0.0
        %3280 = vmatpush1.msra.mxu0 0.0
        %3281 = vmatprep.subr.mxu0 0.0
        %3282 = vmatpush1.msra.mxu0 0.0
        %3283 = vmatprep.subr.mxu0 0.0
        %3284 = vmatpush1.msra.mxu0 0.0
        %3285 = vmatprep.subr.mxu0 0.0
        %3286 = vmatpush1.msra.mxu0 0.0
        %3287 = vmatprep.subr.mxu0 0.0
        %3288 = vmatpush1.msra.mxu0 0.0
        %3289 = vmatprep.subr.mxu0 0.0
        %3290 = vmatpush1.msra.mxu0 0.0
        %3291 = vmatprep.subr.mxu0 0.0
        %3292 = vmatpush1.msra.mxu0 0.0
        %3293 = vmatprep.mubr.f32.mxu0 0.0
        %3294 = vmatmul.mubr.f32.gmra.mrb[0].mxu0 %v3227
        %v3295 = vpop.f32.mrb[0].mxu0
        %v3296 = vadd.f32 0.0, %v3295
        %v3297 = vpop.f32.mrb[0].mxu0
        %3298 = vdwg.mxu0
        %v3299 = vmul.f32 %v3296, 0.0009765625
        %v3301 = vsel %vm1143, %v3299, 0
        %3303 = vmatprep.subr.mxu0 0.0
        %3304 = vmatpush1.msra.mxu0 %v3153
        %3305 = vmatprep.subr.mxu0 0.0
        %3306 = vmatpush1.msra.mxu0 0.0
        %3307 = vmatprep.subr.mxu0 0.0
        %3308 = vmatpush1.msra.mxu0 0.0
        %3309 = vmatprep.subr.mxu0 0.0
        %3310 = vmatpush1.msra.mxu0 0.0
        %3311 = vmatprep.subr.mxu0 0.0
        %3312 = vmatpush1.msra.mxu0 0.0
        %3313 = vmatprep.subr.mxu0 0.0
        %3314 = vmatpush1.msra.mxu0 0.0
        %3315 = vmatprep.subr.mxu0 0.0
        %3316 = vmatpush1.msra.mxu0 0.0
        %3317 = vmatprep.subr.mxu0 0.0
        %3318 = vmatpush1.msra.mxu0 0.0
        %3319 = vmatprep.subr.mxu0 0.0
        %3320 = vmatpush1.msra.mxu0 0.0
        %3321 = vmatprep.subr.mxu0 0.0
        %3322 = vmatpush1.msra.mxu0 0.0
        %3323 = vmatprep.subr.mxu0 0.0
        %3324 = vmatpush1.msra.mxu0 0.0
        %3325 = vmatprep.subr.mxu0 0.0
        %3326 = vmatpush1.msra.mxu0 0.0
        %3327 = vmatprep.subr.mxu0 0.0
        %3328 = vmatpush1.msra.mxu0 0.0
        %3329 = vmatprep.subr.mxu0 0.0
        %3330 = vmatpush1.msra.mxu0 0.0
        %3331 = vmatprep.subr.mxu0 0.0
        %3332 = vmatpush1.msra.mxu0 0.0
        %3333 = vmatprep.subr.mxu0 0.0
        %3334 = vmatpush1.msra.mxu0 0.0
        %3335 = vmatprep.subr.mxu0 0.0
        %3336 = vmatpush1.msra.mxu0 0.0
        %3337 = vmatprep.subr.mxu0 0.0
        %3338 = vmatpush1.msra.mxu0 0.0
        %3339 = vmatprep.subr.mxu0 0.0
        %3340 = vmatpush1.msra.mxu0 0.0
        %3341 = vmatprep.subr.mxu0 0.0
        %3342 = vmatpush1.msra.mxu0 0.0
        %3343 = vmatprep.subr.mxu0 0.0
        %3344 = vmatpush1.msra.mxu0 0.0
        %3345 = vmatprep.subr.mxu0 0.0
        %3346 = vmatpush1.msra.mxu0 0.0
        %3347 = vmatprep.subr.mxu0 0.0
        %3348 = vmatpush1.msra.mxu0 0.0
        %3349 = vmatprep.subr.mxu0 0.0
        %3350 = vmatpush1.msra.mxu0 0.0
        %3351 = vmatprep.subr.mxu0 0.0
        %3352 = vmatpush1.msra.mxu0 0.0
        %3353 = vmatprep.subr.mxu0 0.0
        %3354 = vmatpush1.msra.mxu0 0.0
        %3355 = vmatprep.subr.mxu0 0.0
        %3356 = vmatpush1.msra.mxu0 0.0
        %3357 = vmatprep.subr.mxu0 0.0
        %3358 = vmatpush1.msra.mxu0 0.0
        %3359 = vmatprep.subr.mxu0 0.0
        %3360 = vmatpush1.msra.mxu0 0.0
        %3361 = vmatprep.subr.mxu0 0.0
        %3362 = vmatpush1.msra.mxu0 0.0
        %3363 = vmatprep.subr.mxu0 0.0
        %3364 = vmatpush1.msra.mxu0 0.0
        %3365 = vmatprep.subr.mxu0 0.0
        %3366 = vmatpush1.msra.mxu0 0.0
        %3367 = vmatprep.mubr.f32.mxu0 0.0
        %3368 = vmatmul.mubr.f32.gmra.mrb[0].mxu0 %v3301
        %v3369 = vpop.f32.mrb[0].mxu0
        %v3370 = vadd.f32 0.0, %v3369
        %v3371 = vpop.f32.mrb[0].mxu0
        %3372 = vdwg.mxu0
        %v3373 = vlaneseq
        %v3374 = vshrl.u32 %v3373, 7
        %v3375 = vsub.s32 0, %v3374
        %v3376 = vrot.slane %v3370, %v3375
        %v3377 = vsub.f32 %v3117, %v3376
        %v3378 = vsub.f32 %v3118, %v3376
        %v3379 = vsub.f32 %v3119, %v3376
        %v3380 = vsub.f32 %v3120, %v3376
        %v3381 = vsub.f32 %v3121, %v3376
        %v3382 = vsub.f32 %v3122, %v3376
        %v3383 = vsub.f32 %v3123, %v3376
        %v3384 = vsub.f32 %v3124, %v3376
        %v3385 = vsub.f32 %v3125, %v3376
        %v3386 = vsub.f32 %v3126, %v3376
        %v3387 = vsub.f32 %v3127, %v3376
        %v3388 = vsub.f32 %v3128, %v3376
        %v3389 = vsub.f32 %v3129, %v3376
        %v3390 = vsub.f32 %v3130, %v3376
        %v3391 = vsub.f32 %v3131, %v3376
        %v3392 = vsub.f32 %v3132, %v3376
        %v3393 = vsub.f32 %v3133, %v3376
        %v3394 = vsub.f32 %v3134, %v3376
        %v3395 = vsub.f32 %v3135, %v3376
        %v3396 = vsub.f32 %v3136, %v3376
        %v3397 = vsub.f32 %v3137, %v3376
        %v3398 = vsub.f32 %v3138, %v3376
        %v3399 = vsub.f32 %v3139, %v3376
        %v3400 = vsub.f32 %v3140, %v3376
        %v3401 = vsub.f32 %v3141, %v3376
        %v3402 = vsub.f32 %v3142, %v3376
        %v3403 = vsub.f32 %v3143, %v3376
        %v3404 = vsub.f32 %v3144, %v3376
        %v3405 = vsub.f32 %v3145, %v3376
        %v3406 = vsub.f32 %v3146, %v3376
        %v3407 = vsub.f32 %v3147, %v3376
        %v3408 = vsub.f32 %v3148, %v3376
        %v3409 = vmul.f32 %v3377, %v3377
        %v3410 = vmul.f32 %v3378, %v3378
        %v3411 = vmul.f32 %v3379, %v3379
        %v3412 = vmul.f32 %v3380, %v3380
        %v3413 = vmul.f32 %v3381, %v3381
        %v3414 = vmul.f32 %v3382, %v3382
        %v3415 = vmul.f32 %v3383, %v3383
        %v3416 = vmul.f32 %v3384, %v3384
        %v3417 = vmul.f32 %v3385, %v3385
        %v3418 = vmul.f32 %v3386, %v3386
        %v3419 = vmul.f32 %v3387, %v3387
        %v3420 = vmul.f32 %v3388, %v3388
        %v3421 = vmul.f32 %v3389, %v3389
        %v3422 = vmul.f32 %v3390, %v3390
        %v3423 = vmul.f32 %v3391, %v3391
        %v3424 = vmul.f32 %v3392, %v3392
        %v3425 = vmul.f32 %v3393, %v3393
        %v3426 = vmul.f32 %v3394, %v3394
        %v3427 = vmul.f32 %v3395, %v3395
        %v3428 = vmul.f32 %v3396, %v3396
        %v3429 = vmul.f32 %v3397, %v3397
        %v3430 = vmul.f32 %v3398, %v3398
        %v3431 = vmul.f32 %v3399, %v3399
        %v3432 = vmul.f32 %v3400, %v3400
        %v3433 = vmul.f32 %v3401, %v3401
        %v3434 = vmul.f32 %v3402, %v3402
        %v3435 = vmul.f32 %v3403, %v3403
        %v3436 = vmul.f32 %v3404, %v3404
        %v3437 = vmul.f32 %v3405, %v3405
        %v3438 = vmul.f32 %v3406, %v3406
        %v3439 = vmul.f32 %v3407, %v3407
        %v3440 = vmul.f32 %v3408, %v3408
        %v3441 = vsel %vm3156, %v3409, 0.0
        %v3442 = vsel %vm3156, %v3410, 0.0
        %v3443 = vadd.f32 %v3441, %v3442
        %v3444 = vsel %vm3156, %v3411, 0.0
        %v3445 = vadd.f32 %v3443, %v3444
        %v3446 = vsel %vm3156, %v3412, 0.0
        %v3447 = vadd.f32 %v3445, %v3446
        %v3448 = vsel %vm3156, %v3413, 0.0
        %v3449 = vadd.f32 %v3447, %v3448
        %v3450 = vsel %vm3156, %v3414, 0.0
        %v3451 = vadd.f32 %v3449, %v3450
        %v3452 = vsel %vm3156, %v3415, 0.0
        %v3453 = vadd.f32 %v3451, %v3452
        %v3454 = vsel %vm3156, %v3416, 0.0
        %v3455 = vadd.f32 %v3453, %v3454
        %v3456 = vsel %vm3156, %v3417, 0.0
        %v3457 = vadd.f32 %v3455, %v3456
        %v3458 = vsel %vm3156, %v3418, 0.0
        %v3459 = vadd.f32 %v3457, %v3458
        %v3460 = vsel %vm3156, %v3419, 0.0
        %v3461 = vadd.f32 %v3459, %v3460
        %v3462 = vsel %vm3156, %v3420, 0.0
        %v3463 = vadd.f32 %v3461, %v3462
        %v3464 = vsel %vm3156, %v3421, 0.0
        %v3465 = vadd.f32 %v3463, %v3464
        %v3466 = vsel %vm3156, %v3422, 0.0
        %v3467 = vadd.f32 %v3465, %v3466
        %v3468 = vsel %vm3156, %v3423, 0.0
        %v3469 = vadd.f32 %v3467, %v3468
        %v3470 = vsel %vm3156, %v3424, 0.0
        %v3471 = vadd.f32 %v3469, %v3470
        %v3472 = vsel %vm3156, %v3425, 0.0
        %v3473 = vadd.f32 %v3471, %v3472
        %v3474 = vsel %vm3156, %v3426, 0.0
        %v3475 = vadd.f32 %v3473, %v3474
        %v3476 = vsel %vm3156, %v3427, 0.0
        %v3477 = vadd.f32 %v3475, %v3476
        %v3478 = vsel %vm3156, %v3428, 0.0
        %v3479 = vadd.f32 %v3477, %v3478
        %v3480 = vsel %vm3156, %v3429, 0.0
        %v3481 = vadd.f32 %v3479, %v3480
        %v3482 = vsel %vm3156, %v3430, 0.0
        %v3483 = vadd.f32 %v3481, %v3482
        %v3484 = vsel %vm3156, %v3431, 0.0
        %v3485 = vadd.f32 %v3483, %v3484
        %v3486 = vsel %vm3156, %v3432, 0.0
        %v3487 = vadd.f32 %v3485, %v3486
        %v3488 = vsel %vm3156, %v3433, 0.0
        %v3489 = vadd.f32 %v3487, %v3488
        %v3490 = vsel %vm3156, %v3434, 0.0
        %v3491 = vadd.f32 %v3489, %v3490
        %v3492 = vsel %vm3156, %v3435, 0.0
        %v3493 = vadd.f32 %v3491, %v3492
        %v3494 = vsel %vm3156, %v3436, 0.0
        %v3495 = vadd.f32 %v3493, %v3494
        %v3496 = vsel %vm3156, %v3437, 0.0
        %v3497 = vadd.f32 %v3495, %v3496
        %v3498 = vsel %vm3156, %v3438, 0.0
        %v3499 = vadd.f32 %v3497, %v3498
        %v3500 = vsel %vm3156, %v3439, 0.0
        %v3501 = vadd.f32 %v3499, %v3500
        %v3502 = vsel %vm3156, %v3440, 0.0
        %v3503 = vadd.f32 %v3501, %v3502
        %v3504 = vrot.slane %v3503, 4
        %v3505 = vadd.f32 %v3503, %v3504
        %v3506 = vrot.slane %v3505, 2
        %v3507 = vadd.f32 %v3505, %v3506
        %v3508 = vrot.slane %v3507, 1
        %v3509 = vadd.f32 %v3507, %v3508
        %v3511 = vsel %vm3156, %v3509, 0
        %3513 = vmatprep.subr.mxu0 0.0
        %3514 = vmatpush1.msra.mxu0 %v3149
        %3515 = vmatprep.subr.mxu0 0.0
        %3516 = vmatpush1.msra.mxu0 %v3150
        %3517 = vmatprep.subr.mxu0 0.0
        %3518 = vmatpush1.msra.mxu0 %v3151
        %3519 = vmatprep.subr.mxu0 0.0
        %3520 = vmatpush1.msra.mxu0 %v3152
        %3521 = vmatprep.subr.mxu0 0.0
        %3522 = vmatpush1.msra.mxu0 0.0
        %3523 = vmatprep.subr.mxu0 0.0
        %3524 = vmatpush1.msra.mxu0 0.0
        %3525 = vmatprep.subr.mxu0 0.0
        %3526 = vmatpush1.msra.mxu0 0.0
        %3527 = vmatprep.subr.mxu0 0.0
        %3528 = vmatpush1.msra.mxu0 0.0
        %3529 = vmatprep.subr.mxu0 0.0
        %3530 = vmatpush1.msra.mxu0 0.0
        %3531 = vmatprep.subr.mxu0 0.0
        %3532 = vmatpush1.msra.mxu0 0.0
        %3533 = vmatprep.subr.mxu0 0.0
        %3534 = vmatpush1.msra.mxu0 0.0
        %3535 = vmatprep.subr.mxu0 0.0
        %3536 = vmatpush1.msra.mxu0 0.0
        %3537 = vmatprep.subr.mxu0 0.0
        %3538 = vmatpush1.msra.mxu0 0.0
        %3539 = vmatprep.subr.mxu0 0.0
        %3540 = vmatpush1.msra.mxu0 0.0
        %3541 = vmatprep.subr.mxu0 0.0
        %3542 = vmatpush1.msra.mxu0 0.0
        %3543 = vmatprep.subr.mxu0 0.0
        %3544 = vmatpush1.msra.mxu0 0.0
        %3545 = vmatprep.subr.mxu0 0.0
        %3546 = vmatpush1.msra.mxu0 0.0
        %3547 = vmatprep.subr.mxu0 0.0
        %3548 = vmatpush1.msra.mxu0 0.0
        %3549 = vmatprep.subr.mxu0 0.0
        %3550 = vmatpush1.msra.mxu0 0.0
        %3551 = vmatprep.subr.mxu0 0.0
        %3552 = vmatpush1.msra.mxu0 0.0
        %3553 = vmatprep.subr.mxu0 0.0
        %3554 = vmatpush1.msra.mxu0 0.0
        %3555 = vmatprep.subr.mxu0 0.0
        %3556 = vmatpush1.msra.mxu0 0.0
        %3557 = vmatprep.subr.mxu0 0.0
        %3558 = vmatpush1.msra.mxu0 0.0
        %3559 = vmatprep.subr.mxu0 0.0
        %3560 = vmatpush1.msra.mxu0 0.0
        %3561 = vmatprep.subr.mxu0 0.0
        %3562 = vmatpush1.msra.mxu0 0.0
        %3563 = vmatprep.subr.mxu0 0.0
        %3564 = vmatpush1.msra.mxu0 0.0
        %3565 = vmatprep.subr.mxu0 0.0
        %3566 = vmatpush1.msra.mxu0 0.0
        %3567 = vmatprep.subr.mxu0 0.0
        %3568 = vmatpush1.msra.mxu0 0.0
        %3569 = vmatprep.subr.mxu0 0.0
        %3570 = vmatpush1.msra.mxu0 0.0
        %3571 = vmatprep.subr.mxu0 0.0
        %3572 = vmatpush1.msra.mxu0 0.0
        %3573 = vmatprep.subr.mxu0 0.0
        %3574 = vmatpush1.msra.mxu0 0.0
        %3575 = vmatprep.subr.mxu0 0.0
        %3576 = vmatpush1.msra.mxu0 0.0
        %3577 = vmatprep.mubr.f32.mxu0 0.0
        %3578 = vmatmul.mubr.f32.gmra.mrb[0].mxu0 %v3511
        %v3579 = vpop.f32.mrb[0].mxu0
        %v3580 = vadd.f32 0.0, %v3579
        %v3581 = vpop.f32.mrb[0].mxu0
        %3582 = vdwg.mxu0
        %v3583 = vmul.f32 %v3580, 0.0009765625
        %v3585 = vsel %vm1143, %v3583, 0
        %3587 = vmatprep.subr.mxu0 0.0
        %3588 = vmatpush1.msra.mxu0 %v3153
        %3589 = vmatprep.subr.mxu0 0.0
        %3590 = vmatpush1.msra.mxu0 0.0
        %3591 = vmatprep.subr.mxu0 0.0
        %3592 = vmatpush1.msra.mxu0 0.0
        %3593 = vmatprep.subr.mxu0 0.0
        %3594 = vmatpush1.msra.mxu0 0.0
        %3595 = vmatprep.subr.mxu0 0.0
        %3596 = vmatpush1.msra.mxu0 0.0
        %3597 = vmatprep.subr.mxu0 0.0
        %3598 = vmatpush1.msra.mxu0 0.0
        %3599 = vmatprep.subr.mxu0 0.0
        %3600 = vmatpush1.msra.mxu0 0.0
        %3601 = vmatprep.subr.mxu0 0.0
        %3602 = vmatpush1.msra.mxu0 0.0
        %3603 = vmatprep.subr.mxu0 0.0
        %3604 = vmatpush1.msra.mxu0 0.0
        %3605 = vmatprep.subr.mxu0 0.0
        %3606 = vmatpush1.msra.mxu0 0.0
        %3607 = vmatprep.subr.mxu0 0.0
        %3608 = vmatpush1.msra.mxu0 0.0
        %3609 = vmatprep.subr.mxu0 0.0
        %3610 = vmatpush1.msra.mxu0 0.0
        %3611 = vmatprep.subr.mxu0 0.0
        %3612 = vmatpush1.msra.mxu0 0.0
        %3613 = vmatprep.subr.mxu0 0.0
        %3614 = vmatpush1.msra.mxu0 0.0
        %3615 = vmatprep.subr.mxu0 0.0
        %3616 = vmatpush1.msra.mxu0 0.0
        %3617 = vmatprep.subr.mxu0 0.0
        %3618 = vmatpush1.msra.mxu0 0.0
        %3619 = vmatprep.subr.mxu0 0.0
        %3620 = vmatpush1.msra.mxu0 0.0
        %3621 = vmatprep.subr.mxu0 0.0
        %3622 = vmatpush1.msra.mxu0 0.0
        %3623 = vmatprep.subr.mxu0 0.0
        %3624 = vmatpush1.msra.mxu0 0.0
        %3625 = vmatprep.subr.mxu0 0.0
        %3626 = vmatpush1.msra.mxu0 0.0
        %3627 = vmatprep.subr.mxu0 0.0
        %3628 = vmatpush1.msra.mxu0 0.0
        %3629 = vmatprep.subr.mxu0 0.0
        %3630 = vmatpush1.msra.mxu0 0.0
        %3631 = vmatprep.subr.mxu0 0.0
        %3632 = vmatpush1.msra.mxu0 0.0
        %3633 = vmatprep.subr.mxu0 0.0
        %3634 = vmatpush1.msra.mxu0 0.0
        %3635 = vmatprep.subr.mxu0 0.0
        %3636 = vmatpush1.msra.mxu0 0.0
        %3637 = vmatprep.subr.mxu0 0.0
        %3638 = vmatpush1.msra.mxu0 0.0
        %3639 = vmatprep.subr.mxu0 0.0
        %3640 = vmatpush1.msra.mxu0 0.0
        %3641 = vmatprep.subr.mxu0 0.0
        %3642 = vmatpush1.msra.mxu0 0.0
        %3643 = vmatprep.subr.mxu0 0.0
        %3644 = vmatpush1.msra.mxu0 0.0
        %3645 = vmatprep.subr.mxu0 0.0
        %3646 = vmatpush1.msra.mxu0 0.0
        %3647 = vmatprep.subr.mxu0 0.0
        %3648 = vmatpush1.msra.mxu0 0.0
        %3649 = vmatprep.subr.mxu0 0.0
        %3650 = vmatpush1.msra.mxu0 0.0
        %3651 = vmatprep.mubr.f32.mxu0 0.0
        %3652 = vmatmul.mubr.f32.gmra.mrb[0].mxu0 %v3585
        %v3653 = vpop.f32.mrb[0].mxu0
        %v3654 = vadd.f32 1e-06, %v3653
        %v3655 = vpop.f32.mrb[0].mxu0
        %3656 = vdwg.mxu0
        %v3657 = vrsqrt.pop %v3654
        %v3658 = vlaneseq
        %v3659 = vshrl.u32 %v3658, 7
        %v3660 = vsub.s32 0, %v3659
        %v3661 = vrot.slane %v3657, %v3660
        %v3662 = vmul.f32 %v3377, %v3661
        %v3663 = vmul.f32 %v3378, %v3661
        %v3664 = vmul.f32 %v3379, %v3661
        %v3665 = vmul.f32 %v3380, %v3661
        %v3666 = vmul.f32 %v3381, %v3661
        %v3667 = vmul.f32 %v3382, %v3661
        %v3668 = vmul.f32 %v3383, %v3661
        %v3669 = vmul.f32 %v3384, %v3661
        %v3670 = vmul.f32 %v3385, %v3661
        %v3671 = vmul.f32 %v3386, %v3661
        %v3672 = vmul.f32 %v3387, %v3661
        %v3673 = vmul.f32 %v3388, %v3661
        %v3674 = vmul.f32 %v3389, %v3661
        %v3675 = vmul.f32 %v3390, %v3661
        %v3676 = vmul.f32 %v3391, %v3661
        %v3677 = vmul.f32 %v3392, %v3661
        %v3678 = vmul.f32 %v3393, %v3661
        %v3679 = vmul.f32 %v3394, %v3661
        %v3680 = vmul.f32 %v3395, %v3661
        %v3681 = vmul.f32 %v3396, %v3661
        %v3682 = vmul.f32 %v3397, %v3661
        %v3683 = vmul.f32 %v3398, %v3661
        %v3684 = vmul.f32 %v3399, %v3661
        %v3685 = vmul.f32 %v3400, %v3661
        %v3686 = vmul.f32 %v3401, %v3661
        %v3687 = vmul.f32 %v3402, %v3661
        %v3688 = vmul.f32 %v3403, %v3661
        %v3689 = vmul.f32 %v3404, %v3661
        %v3690 = vmul.f32 %v3405, %v3661
        %v3691 = vmul.f32 %v3406, %v3661
        %v3692 = vmul.f32 %v3407, %v3661
        %v3693 = vmul.f32 %v3408, %v3661
        %v3695 = vlaneseq
        %v3696 = vshrl.u32 %v3695, 7
        %v3697 = vsub.s32 0, %v3696
        %v3698 = vrot.slane %v3154, %v3697
        %v3700 = vmul.f32 %v3662, %v3698
        %v3701 = vmul.f32 %v3663, %v3698
        %v3702 = vmul.f32 %v3664, %v3698
        %v3703 = vmul.f32 %v3665, %v3698
        %v3704 = vmul.f32 %v3666, %v3698
        %v3705 = vmul.f32 %v3667, %v3698
        %v3706 = vmul.f32 %v3668, %v3698
        %v3707 = vmul.f32 %v3669, %v3698
        %v3708 = vmul.f32 %v3670, %v3698
        %v3709 = vmul.f32 %v3671, %v3698
        %v3710 = vmul.f32 %v3672, %v3698
        %v3711 = vmul.f32 %v3673, %v3698
        %v3712 = vmul.f32 %v3674, %v3698
        %v3713 = vmul.f32 %v3675, %v3698
        %v3714 = vmul.f32 %v3676, %v3698
        %v3715 = vmul.f32 %v3677, %v3698
        %v3716 = vmul.f32 %v3678, %v3698
        %v3717 = vmul.f32 %v3679, %v3698
        %v3718 = vmul.f32 %v3680, %v3698
        %v3719 = vmul.f32 %v3681, %v3698
        %v3720 = vmul.f32 %v3682, %v3698
        %v3721 = vmul.f32 %v3683, %v3698
        %v3722 = vmul.f32 %v3684, %v3698
        %v3723 = vmul.f32 %v3685, %v3698
        %v3724 = vmul.f32 %v3686, %v3698
        %v3725 = vmul.f32 %v3687, %v3698
        %v3726 = vmul.f32 %v3688, %v3698
        %v3727 = vmul.f32 %v3689, %v3698
        %v3728 = vmul.f32 %v3690, %v3698
        %v3729 = vmul.f32 %v3691, %v3698
        %v3730 = vmul.f32 %v3692, %v3698
        %v3731 = vmul.f32 %v3693, %v3698
        %v3733 = vlaneseq
        %v3734 = vshrl.u32 %v3733, 7
        %v3735 = vsub.s32 0, %v3734
        %v3736 = vrot.slane %v3155, %v3735
        %v3738 = vadd.f32 %v3700, %v3736
        %v3739 = vadd.f32 %v3701, %v3736
        %v3740 = vadd.f32 %v3702, %v3736
        %v3741 = vadd.f32 %v3703, %v3736
        %v3742 = vadd.f32 %v3704, %v3736
        %v3743 = vadd.f32 %v3705, %v3736
        %v3744 = vadd.f32 %v3706, %v3736
        %v3745 = vadd.f32 %v3707, %v3736
        %v3746 = vadd.f32 %v3708, %v3736
        %v3747 = vadd.f32 %v3709, %v3736
        %v3748 = vadd.f32 %v3710, %v3736
        %v3749 = vadd.f32 %v3711, %v3736
        %v3750 = vadd.f32 %v3712, %v3736
        %v3751 = vadd.f32 %v3713, %v3736
        %v3752 = vadd.f32 %v3714, %v3736
        %v3753 = vadd.f32 %v3715, %v3736
        %v3754 = vadd.f32 %v3716, %v3736
        %v3755 = vadd.f32 %v3717, %v3736
        %v3756 = vadd.f32 %v3718, %v3736
        %v3757 = vadd.f32 %v3719, %v3736
        %v3758 = vadd.f32 %v3720, %v3736
        %v3759 = vadd.f32 %v3721, %v3736
        %v3760 = vadd.f32 %v3722, %v3736
        %v3761 = vadd.f32 %v3723, %v3736
        %v3762 = vadd.f32 %v3724, %v3736
        %v3763 = vadd.f32 %v3725, %v3736
        %v3764 = vadd.f32 %v3726, %v3736
        %v3765 = vadd.f32 %v3727, %v3736
        %v3766 = vadd.f32 %v3728, %v3736
        %v3767 = vadd.f32 %v3729, %v3736
        %v3768 = vadd.f32 %v3730, %v3736
        %v3769 = vadd.f32 %v3731, %v3736
        %v3770 = vxor.u32 %v3738, 2147483648
        %v3771 = vxor.u32 %v3739, 2147483648
        %v3772 = vxor.u32 %v3740, 2147483648
        %v3773 = vxor.u32 %v3741, 2147483648
        %v3774 = vxor.u32 %v3742, 2147483648
        %v3775 = vxor.u32 %v3743, 2147483648
        %v3776 = vxor.u32 %v3744, 2147483648
        %v3777 = vxor.u32 %v3745, 2147483648
        %v3778 = vxor.u32 %v3746, 2147483648
        %v3779 = vxor.u32 %v3747, 2147483648
        %v3780 = vxor.u32 %v3748, 2147483648
        %v3781 = vxor.u32 %v3749, 2147483648
        %v3782 = vxor.u32 %v3750, 2147483648
        %v3783 = vxor.u32 %v3751, 2147483648
        %v3784 = vxor.u32 %v3752, 2147483648
        %v3785 = vxor.u32 %v3753, 2147483648
        %v3786 = vxor.u32 %v3754, 2147483648
        %v3787 = vxor.u32 %v3755, 2147483648
        %v3788 = vxor.u32 %v3756, 2147483648
        %v3789 = vxor.u32 %v3757, 2147483648
        %v3790 = vxor.u32 %v3758, 2147483648
        %v3791 = vxor.u32 %v3759, 2147483648
        %v3792 = vxor.u32 %v3760, 2147483648
        %v3793 = vxor.u32 %v3761, 2147483648
        %v3794 = vxor.u32 %v3762, 2147483648
        %v3795 = vxor.u32 %v3763, 2147483648
        %v3796 = vxor.u32 %v3764, 2147483648
        %v3797 = vxor.u32 %v3765, 2147483648
        %v3798 = vxor.u32 %v3766, 2147483648
        %v3799 = vxor.u32 %v3767, 2147483648
        %v3800 = vxor.u32 %v3768, 2147483648
        %v3801 = vxor.u32 %v3769, 2147483648
        %v3802 = vmul.f32 %v3770, 1.442695
        %v3803 = vpow.pop %v3802
        %v3804 = vmul.f32 %v3771, 1.442695
        %v3805 = vpow.pop %v3804
        %v3806 = vmul.f32 %v3772, 1.442695
        %v3807 = vpow.pop %v3806
        %v3808 = vmul.f32 %v3773, 1.442695
        %v3809 = vpow.pop %v3808
        %v3810 = vmul.f32 %v3774, 1.442695
        %v3811 = vpow.pop %v3810
        %v3812 = vmul.f32 %v3775, 1.442695
        %v3813 = vpow.pop %v3812
        %v3814 = vmul.f32 %v3776, 1.442695
        %v3815 = vpow.pop %v3814
        %v3816 = vmul.f32 %v3777, 1.442695
        %v3817 = vpow.pop %v3816
        %v3818 = vmul.f32 %v3778, 1.442695
        %v3819 = vpow.pop %v3818
        %v3820 = vmul.f32 %v3779, 1.442695
        %v3821 = vpow.pop %v3820
        %v3822 = vmul.f32 %v3780, 1.442695
        %v3823 = vpow.pop %v3822
        %v3824 = vmul.f32 %v3781, 1.442695
        %v3825 = vpow.pop %v3824
        %v3826 = vmul.f32 %v3782, 1.442695
        %v3827 = vpow.pop %v3826
        %v3828 = vmul.f32 %v3783, 1.442695
        %v3829 = vpow.pop %v3828
        %v3830 = vmul.f32 %v3784, 1.442695
        %v3831 = vpow.pop %v3830
        %v3832 = vmul.f32 %v3785, 1.442695
        %v3833 = vpow.pop %v3832
        %v3834 = vmul.f32 %v3786, 1.442695
        %v3835 = vpow.pop %v3834
        %v3836 = vmul.f32 %v3787, 1.442695
        %v3837 = vpow.pop %v3836
        %v3838 = vmul.f32 %v3788, 1.442695
        %v3839 = vpow.pop %v3838
        %v3840 = vmul.f32 %v3789, 1.442695
        %v3841 = vpow.pop %v3840
        %v3842 = vmul.f32 %v3790, 1.442695
        %v3843 = vpow.pop %v3842
        %v3844 = vmul.f32 %v3791, 1.442695
        %v3845 = vpow.pop %v3844
        %v3846 = vmul.f32 %v3792, 1.442695
        %v3847 = vpow.pop %v3846
        %v3848 = vmul.f32 %v3793, 1.442695
        %v3849 = vpow.pop %v3848
        %v3850 = vmul.f32 %v3794, 1.442695
        %v3851 = vpow.pop %v3850
        %v3852 = vmul.f32 %v3795, 1.442695
        %v3853 = vpow.pop %v3852
        %v3854 = vmul.f32 %v3796, 1.442695
        %v3855 = vpow.pop %v3854
        %v3856 = vmul.f32 %v3797, 1.442695
        %v3857 = vpow.pop %v3856
        %v3858 = vmul.f32 %v3798, 1.442695
        %v3859 = vpow.pop %v3858
        %v3860 = vmul.f32 %v3799, 1.442695
        %v3861 = vpow.pop %v3860
        %v3862 = vmul.f32 %v3800, 1.442695
        %v3863 = vpow.pop %v3862
        %v3864 = vmul.f32 %v3801, 1.442695
        %v3865 = vpow.pop %v3864
        %v3866 = vadd.f32 %v3803, 1.0
        %v3867 = vadd.f32 %v3805, 1.0
        %v3868 = vadd.f32 %v3807, 1.0
        %v3869 = vadd.f32 %v3809, 1.0
        %v3870 = vadd.f32 %v3811, 1.0
        %v3871 = vadd.f32 %v3813, 1.0
        %v3872 = vadd.f32 %v3815, 1.0
        %v3873 = vadd.f32 %v3817, 1.0
        %v3874 = vadd.f32 %v3819, 1.0
        %v3875 = vadd.f32 %v3821, 1.0
        %v3876 = vadd.f32 %v3823, 1.0
        %v3877 = vadd.f32 %v3825, 1.0
        %v3878 = vadd.f32 %v3827, 1.0
        %v3879 = vadd.f32 %v3829, 1.0
        %v3880 = vadd.f32 %v3831, 1.0
        %v3881 = vadd.f32 %v3833, 1.0
        %v3882 = vadd.f32 %v3835, 1.0
        %v3883 = vadd.f32 %v3837, 1.0
        %v3884 = vadd.f32 %v3839, 1.0
        %v3885 = vadd.f32 %v3841, 1.0
        %v3886 = vadd.f32 %v3843, 1.0
        %v3887 = vadd.f32 %v3845, 1.0
        %v3888 = vadd.f32 %v3847, 1.0
        %v3889 = vadd.f32 %v3849, 1.0
        %v3890 = vadd.f32 %v3851, 1.0
        %v3891 = vadd.f32 %v3853, 1.0
        %v3892 = vadd.f32 %v3855, 1.0
        %v3893 = vadd.f32 %v3857, 1.0
        %v3894 = vadd.f32 %v3859, 1.0
        %v3895 = vadd.f32 %v3861, 1.0
        %v3896 = vadd.f32 %v3863, 1.0
        %v3897 = vadd.f32 %v3865, 1.0
        %v3898 = vrcp.pop %v3866
        %v3899 = vmul.f32 1.0, %v3898
        %v3900 = vrcp.pop %v3867
        %v3901 = vmul.f32 1.0, %v3900
        %v3902 = vrcp.pop %v3868
        %v3903 = vmul.f32 1.0, %v3902
        %v3904 = vrcp.pop %v3869
        %v3905 = vmul.f32 1.0, %v3904
        %v3906 = vrcp.pop %v3870
        %v3907 = vmul.f32 1.0, %v3906
        %v3908 = vrcp.pop %v3871
        %v3909 = vmul.f32 1.0, %v3908
        %v3910 = vrcp.pop %v3872
        %v3911 = vmul.f32 1.0, %v3910
        %v3912 = vrcp.pop %v3873
        %v3913 = vmul.f32 1.0, %v3912
        %v3914 = vrcp.pop %v3874
        %v3915 = vmul.f32 1.0, %v3914
        %v3916 = vrcp.pop %v3875
        %v3917 = vmul.f32 1.0, %v3916
        %v3918 = vrcp.pop %v3876
        %v3919 = vmul.f32 1.0, %v3918
        %v3920 = vrcp.pop %v3877
        %v3921 = vmul.f32 1.0, %v3920
        %v3922 = vrcp.pop %v3878
        %v3923 = vmul.f32 1.0, %v3922
        %v3924 = vrcp.pop %v3879
        %v3925 = vmul.f32 1.0, %v3924
        %v3926 = vrcp.pop %v3880
        %v3927 = vmul.f32 1.0, %v3926
        %v3928 = vrcp.pop %v3881
        %v3929 = vmul.f32 1.0, %v3928
        %v3930 = vrcp.pop %v3882
        %v3931 = vmul.f32 1.0, %v3930
        %v3932 = vrcp.pop %v3883
        %v3933 = vmul.f32 1.0, %v3932
        %v3934 = vrcp.pop %v3884
        %v3935 = vmul.f32 1.0, %v3934
        %v3936 = vrcp.pop %v3885
        %v3937 = vmul.f32 1.0, %v3936
        %v3938 = vrcp.pop %v3886
        %v3939 = vmul.f32 1.0, %v3938
        %v3940 = vrcp.pop %v3887
        %v3941 = vmul.f32 1.0, %v3940
        %v3942 = vrcp.pop %v3888
        %v3943 = vmul.f32 1.0, %v3942
        %v3944 = vrcp.pop %v3889
        %v3945 = vmul.f32 1.0, %v3944
        %v3946 = vrcp.pop %v3890
        %v3947 = vmul.f32 1.0, %v3946
        %v3948 = vrcp.pop %v3891
        %v3949 = vmul.f32 1.0, %v3948
        %v3950 = vrcp.pop %v3892
        %v3951 = vmul.f32 1.0, %v3950
        %v3952 = vrcp.pop %v3893
        %v3953 = vmul.f32 1.0, %v3952
        %v3954 = vrcp.pop %v3894
        %v3955 = vmul.f32 1.0, %v3954
        %v3956 = vrcp.pop %v3895
        %v3957 = vmul.f32 1.0, %v3956
        %v3958 = vrcp.pop %v3896
        %v3959 = vmul.f32 1.0, %v3958
        %v3960 = vrcp.pop %v3897
        %v3961 = vmul.f32 1.0, %v3960
        %v3962 = vmul.f32 %v3738, %v3899
        %v3963 = vmul.f32 %v3739, %v3901
        %v3964 = vmul.f32 %v3740, %v3903
        %v3965 = vmul.f32 %v3741, %v3905
        %v3966 = vmul.f32 %v3742, %v3907
        %v3967 = vmul.f32 %v3743, %v3909
        %v3968 = vmul.f32 %v3744, %v3911
        %v3969 = vmul.f32 %v3745, %v3913
        %v3970 = vmul.f32 %v3746, %v3915
        %v3971 = vmul.f32 %v3747, %v3917
        %v3972 = vmul.f32 %v3748, %v3919
        %v3973 = vmul.f32 %v3749, %v3921
        %v3974 = vmul.f32 %v3750, %v3923
        %v3975 = vmul.f32 %v3751, %v3925
        %v3976 = vmul.f32 %v3752, %v3927
        %v3977 = vmul.f32 %v3753, %v3929
        %v3978 = vmul.f32 %v3754, %v3931
        %v3979 = vmul.f32 %v3755, %v3933
        %v3980 = vmul.f32 %v3756, %v3935
        %v3981 = vmul.f32 %v3757, %v3937
        %v3982 = vmul.f32 %v3758, %v3939
        %v3983 = vmul.f32 %v3759, %v3941
        %v3984 = vmul.f32 %v3760, %v3943
        %v3985 = vmul.f32 %v3761, %v3945
        %v3986 = vmul.f32 %v3762, %v3947
        %v3987 = vmul.f32 %v3763, %v3949
        %v3988 = vmul.f32 %v3764, %v3951
        %v3989 = vmul.f32 %v3765, %v3953
        %v3990 = vmul.f32 %v3766, %v3955
        %v3991 = vmul.f32 %v3767, %v3957
        %v3992 = vmul.f32 %v3768, %v3959
        %v3993 = vmul.f32 %v3769, %v3961
        %vm3994 = vcmask 785408
        %3995 = vst.msk [vmem:[#allocation3] sm:$0xff] %vm3994, 0
        %3996 = vst.msk [vmem:[#allocation3 + $0x88] sm:$0xff] %vm3994, 0
        %v3997 = vrot.slane %v3962, 7
        %v3998 = vrot.slane %v3963, 7
        %v3999 = vrot.slane %v3964, 7
        %v4000 = vrot.slane %v3965, 7
        %v4001 = vrot.slane %v3966, 7
        %v4002 = vrot.slane %v3967, 7
        %v4003 = vrot.slane %v3968, 7
        %v4004 = vrot.slane %v3969, 7
        %v4005 = vrot.slane %v3970, 7
        %v4006 = vrot.slane %v3971, 7
        %v4007 = vrot.slane %v3972, 7
        %v4008 = vrot.slane %v3973, 7
        %v4009 = vrot.slane %v3974, 7
        %v4010 = vrot.slane %v3975, 7
        %v4011 = vrot.slane %v3976, 7
        %v4012 = vrot.slane %v3977, 7
        %v4013 = vrot.slane %v3978, 7
        %v4014 = vrot.slane %v3979, 7
        %v4015 = vrot.slane %v3980, 7
        %v4016 = vrot.slane %v3981, 7
        %v4017 = vrot.slane %v3982, 7
        %v4018 = vrot.slane %v3983, 7
        %v4019 = vrot.slane %v3984, 7
        %v4020 = vrot.slane %v3985, 7
        %v4021 = vrot.slane %v3986, 7
        %v4022 = vrot.slane %v3987, 7
        %v4023 = vrot.slane %v3988, 7
        %v4024 = vrot.slane %v3989, 7
        %v4025 = vrot.slane %v3990, 7
        %v4026 = vrot.slane %v3991, 7
        %v4027 = vrot.slane %v3992, 7
        %v4028 = vrot.slane %v3993, 7
        %v4029 = vsel %vm1873, %v4027, %v4028
        %v4030 = vsel %vm1873, %v4026, %v4027
        %v4031 = vsel %vm1873, %v4025, %v4026
        %v4032 = vsel %vm1873, %v4024, %v4025
        %v4033 = vsel %vm1873, %v4023, %v4024
        %v4034 = vsel %vm1873, %v4022, %v4023
        %v4035 = vsel %vm1873, %v4021, %v4022
        %v4036 = vsel %vm1873, %v4020, %v4021
        %v4037 = vsel %vm1873, %v4019, %v4020
        %v4038 = vsel %vm1873, %v4018, %v4019
        %v4039 = vsel %vm1873, %v4017, %v4018
        %v4040 = vsel %vm1873, %v4016, %v4017
        %v4041 = vsel %vm1873, %v4015, %v4016
        %v4042 = vsel %vm1873, %v4014, %v4015
        %v4043 = vsel %vm1873, %v4013, %v4014
        %v4044 = vsel %vm1873, %v4012, %v4013
        %v4045 = vsel %vm1873, %v4011, %v4012
        %v4046 = vsel %vm1873, %v4010, %v4011
        %v4047 = vsel %vm1873, %v4009, %v4010
        %v4048 = vsel %vm1873, %v4008, %v4009
        %v4049 = vsel %vm1873, %v4007, %v4008
        %v4050 = vsel %vm1873, %v4006, %v4007
        %v4051 = vsel %vm1873, %v4005, %v4006
        %v4052 = vsel %vm1873, %v4004, %v4005
        %v4053 = vsel %vm1873, %v4003, %v4004
        %v4054 = vsel %vm1873, %v4002, %v4003
        %v4055 = vsel %vm1873, %v4001, %v4002
        %v4056 = vsel %vm1873, %v4000, %v4001
        %v4057 = vsel %vm1873, %v3999, %v4000
        %v4058 = vsel %vm1873, %v3998, %v3999
        %v4059 = vsel %vm1873, %v3997, %v3998
        %v4060 = vsel %vm1873, %v4028, %v3997
        %v4061 = vsel %vm1938, %v4060, 0.0
        %v4062 = vsel %vm1939, %v4059, 0.0
        %v4063 = vsel %vm1940, %v4058, 0.0
        %v4064 = vsel %vm1941, %v4057, 0.0
        %v4065 = vsel %vm1942, %v4056, 0.0
        %v4066 = vsel %vm1943, %v4055, 0.0
        %v4067 = vsel %vm1944, %v4054, 0.0
        %v4068 = vsel %vm1945, %v4053, 0.0
        %v4069 = vsel %vm1946, %v4052, 0.0
        %v4070 = vsel %vm1947, %v4051, 0.0
        %v4071 = vsel %vm1948, %v4050, 0.0
        %v4072 = vsel %vm1949, %v4049, 0.0
        %v4073 = vsel %vm1950, %v4048, 0.0
        %v4074 = vsel %vm1951, %v4047, 0.0
        %v4075 = vsel %vm1952, %v4046, 0.0
        %v4076 = vsel %vm1953, %v4045, 0.0
        %v4077 = vsel %vm1954, %v4044, 0.0
        %v4078 = vsel %vm1955, %v4043, 0.0
        %v4079 = vsel %vm1956, %v4042, 0.0
        %v4080 = vsel %vm1957, %v4041, 0.0
        %v4081 = vsel %vm1958, %v4040, 0.0
        %v4082 = vsel %vm1959, %v4039, 0.0
        %v4083 = vsel %vm1960, %v4038, 0.0
        %v4084 = vsel %vm1961, %v4037, 0.0
        %v4085 = vsel %vm1962, %v4036, 0.0
        %v4086 = vsel %vm1963, %v4035, 0.0
        %v4087 = vsel %vm1964, %v4034, 0.0
        %v4088 = vsel %vm1965, %v4033, 0.0
        %v4089 = vsel %vm1966, %v4032, 0.0
        %v4090 = vsel %vm1967, %v4031, 0.0
        %v4091 = vsel %vm1968, %v4030, 0.0
        %v4092 = vsel %vm1969, %v4029, 0.0
        %v4093 = vrot.slane %v3962, 1
        %v4094 = vrot.slane %v3963, 1
        %v4095 = vrot.slane %v3964, 1
        %v4096 = vrot.slane %v3965, 1
        %v4097 = vrot.slane %v3966, 1
        %v4098 = vrot.slane %v3967, 1
        %v4099 = vrot.slane %v3968, 1
        %v4100 = vrot.slane %v3969, 1
        %v4101 = vrot.slane %v3970, 1
        %v4102 = vrot.slane %v3971, 1
        %v4103 = vrot.slane %v3972, 1
        %v4104 = vrot.slane %v3973, 1
        %v4105 = vrot.slane %v3974, 1
        %v4106 = vrot.slane %v3975, 1
        %v4107 = vrot.slane %v3976, 1
        %v4108 = vrot.slane %v3977, 1
        %v4109 = vrot.slane %v3978, 1
        %v4110 = vrot.slane %v3979, 1
        %v4111 = vrot.slane %v3980, 1
        %v4112 = vrot.slane %v3981, 1
        %v4113 = vrot.slane %v3982, 1
        %v4114 = vrot.slane %v3983, 1
        %v4115 = vrot.slane %v3984, 1
        %v4116 = vrot.slane %v3985, 1
        %v4117 = vrot.slane %v3986, 1
        %v4118 = vrot.slane %v3987, 1
        %v4119 = vrot.slane %v3988, 1
        %v4120 = vrot.slane %v3989, 1
        %v4121 = vrot.slane %v3990, 1
        %v4122 = vrot.slane %v3991, 1
        %v4123 = vrot.slane %v3992, 1
        %v4124 = vrot.slane %v3993, 1
        %v4125 = vsel %vm2034, %v4123, %v4124
        %v4126 = vsel %vm2034, %v4122, %v4123
        %v4127 = vsel %vm2034, %v4121, %v4122
        %v4128 = vsel %vm2034, %v4120, %v4121
        %v4129 = vsel %vm2034, %v4119, %v4120
        %v4130 = vsel %vm2034, %v4118, %v4119
        %v4131 = vsel %vm2034, %v4117, %v4118
        %v4132 = vsel %vm2034, %v4116, %v4117
        %v4133 = vsel %vm2034, %v4115, %v4116
        %v4134 = vsel %vm2034, %v4114, %v4115
        %v4135 = vsel %vm2034, %v4113, %v4114
        %v4136 = vsel %vm2034, %v4112, %v4113
        %v4137 = vsel %vm2034, %v4111, %v4112
        %v4138 = vsel %vm2034, %v4110, %v4111
        %v4139 = vsel %vm2034, %v4109, %v4110
        %v4140 = vsel %vm2034, %v4108, %v4109
        %v4141 = vsel %vm2034, %v4107, %v4108
        %v4142 = vsel %vm2034, %v4106, %v4107
        %v4143 = vsel %vm2034, %v4105, %v4106
        %v4144 = vsel %vm2034, %v4104, %v4105
        %v4145 = vsel %vm2034, %v4103, %v4104
        %v4146 = vsel %vm2034, %v4102, %v4103
        %v4147 = vsel %vm2034, %v4101, %v4102
        %v4148 = vsel %vm2034, %v4100, %v4101
        %v4149 = vsel %vm2034, %v4099, %v4100
        %v4150 = vsel %vm2034, %v4098, %v4099
        %v4151 = vsel %vm2034, %v4097, %v4098
        %v4152 = vsel %vm2034, %v4096, %v4097
        %v4153 = vsel %vm2034, %v4095, %v4096
        %v4154 = vsel %vm2034, %v4094, %v4095
        %v4155 = vsel %vm2034, %v4093, %v4094
        %v4156 = vsel %vm2034, %v4124, %v4093
        %v4157 = vsel %vm2099, %v4155, 0.0
        %v4158 = vsel %vm2100, %v4154, 0.0
        %v4159 = vsel %vm2101, %v4153, 0.0
        %v4160 = vsel %vm2102, %v4152, 0.0
        %v4161 = vsel %vm2103, %v4151, 0.0
        %v4162 = vsel %vm2104, %v4150, 0.0
        %v4163 = vsel %vm2105, %v4149, 0.0
        %v4164 = vsel %vm2106, %v4148, 0.0
        %v4165 = vsel %vm2107, %v4147, 0.0
        %v4166 = vsel %vm2108, %v4146, 0.0
        %v4167 = vsel %vm2109, %v4145, 0.0
        %v4168 = vsel %vm2110, %v4144, 0.0
        %v4169 = vsel %vm2111, %v4143, 0.0
        %v4170 = vsel %vm2112, %v4142, 0.0
        %v4171 = vsel %vm2113, %v4141, 0.0
        %v4172 = vsel %vm2114, %v4140, 0.0
        %v4173 = vsel %vm2115, %v4139, 0.0
        %v4174 = vsel %vm2116, %v4138, 0.0
        %v4175 = vsel %vm2117, %v4137, 0.0
        %v4176 = vsel %vm2118, %v4136, 0.0
        %v4177 = vsel %vm2119, %v4135, 0.0
        %v4178 = vsel %vm2120, %v4134, 0.0
        %v4179 = vsel %vm2121, %v4133, 0.0
        %v4180 = vsel %vm2122, %v4132, 0.0
        %v4181 = vsel %vm2123, %v4131, 0.0
        %v4182 = vsel %vm2124, %v4130, 0.0
        %v4183 = vsel %vm2125, %v4129, 0.0
        %v4184 = vsel %vm2126, %v4128, 0.0
        %v4185 = vsel %vm2127, %v4127, 0.0
        %v4186 = vsel %vm2128, %v4126, 0.0
        %v4187 = vsel %vm2129, %v4125, 0.0
        %v4188 = vsel %vm2130, %v4156, 0.0
        %v4189 = vpack.c.bf16 %v4062, %v4061
        %v4190 = vpack.c.bf16 %v4064, %v4063
        %v4191 = vpack.c.bf16 %v4066, %v4065
        %v4192 = vpack.c.bf16 %v4068, %v4067
        %v4193 = vpack.c.bf16 %v4070, %v4069
        %v4194 = vpack.c.bf16 %v4072, %v4071
        %v4195 = vpack.c.bf16 %v4074, %v4073
        %v4196 = vpack.c.bf16 %v4076, %v4075
        %v4197 = vpack.c.bf16 %v4078, %v4077
        %v4198 = vpack.c.bf16 %v4080, %v4079
        %v4199 = vpack.c.bf16 %v4082, %v4081
        %v4200 = vpack.c.bf16 %v4084, %v4083
        %v4201 = vpack.c.bf16 %v4086, %v4085
        %v4202 = vpack.c.bf16 %v4088, %v4087
        %v4203 = vpack.c.bf16 %v4090, %v4089
        %v4204 = vpack.c.bf16 %v4092, %v4091
        %4205 = vst.msk [vmem:[#allocation3 + $0x8] sm:$0xff] %vm3156, %v4189
        %4206 = vst.msk [vmem:[#allocation3 + $0x10] sm:$0xff] %vm3156, %v4190
        %4207 = vst.msk [vmem:[#allocation3 + $0x18] sm:$0xff] %vm3156, %v4191
        %4208 = vst.msk [vmem:[#allocation3 + $0x20] sm:$0xff] %vm3156, %v4192
        %4209 = vst.msk [vmem:[#allocation3 + $0x28] sm:$0xff] %vm3156, %v4193
        %4210 = vst.msk [vmem:[#allocation3 + $0x30] sm:$0xff] %vm3156, %v4194
        %4211 = vst.msk [vmem:[#allocation3 + $0x38] sm:$0xff] %vm3156, %v4195
        %4212 = vst.msk [vmem:[#allocation3 + $0x40] sm:$0xff] %vm3156, %v4196
        %4213 = vst.msk [vmem:[#allocation3 + $0x48] sm:$0xff] %vm3156, %v4197
        %4214 = vst.msk [vmem:[#allocation3 + $0x50] sm:$0xff] %vm3156, %v4198
        %4215 = vst.msk [vmem:[#allocation3 + $0x58] sm:$0xff] %vm3156, %v4199
        %4216 = vst.msk [vmem:[#allocation3 + $0x60] sm:$0xff] %vm3156, %v4200
        %4217 = vst.msk [vmem:[#allocation3 + $0x68] sm:$0xff] %vm3156, %v4201
        %4218 = vst.msk [vmem:[#allocation3 + $0x70] sm:$0xff] %vm3156, %v4202
        %4219 = vst.msk [vmem:[#allocation3 + $0x78] sm:$0xff] %vm3156, %v4203
        %4220 = vst.msk [vmem:[#allocation3 + $0x80] sm:$0xff] %vm3156, %v4204
        %v4221 = vpack.c.bf16 %v3963, %v3962
        %v4222 = vpack.c.bf16 %v3965, %v3964
        %v4223 = vpack.c.bf16 %v3967, %v3966
        %v4224 = vpack.c.bf16 %v3969, %v3968
        %v4225 = vpack.c.bf16 %v3971, %v3970
        %v4226 = vpack.c.bf16 %v3973, %v3972
        %v4227 = vpack.c.bf16 %v3975, %v3974
        %v4228 = vpack.c.bf16 %v3977, %v3976
        %v4229 = vpack.c.bf16 %v3979, %v3978
        %v4230 = vpack.c.bf16 %v3981, %v3980
        %v4231 = vpack.c.bf16 %v3983, %v3982
        %v4232 = vpack.c.bf16 %v3985, %v3984
        %v4233 = vpack.c.bf16 %v3987, %v3986
        %v4234 = vpack.c.bf16 %v3989, %v3988
        %v4235 = vpack.c.bf16 %v3991, %v3990
        %v4236 = vpack.c.bf16 %v3993, %v3992
        %4253 = vrot.lane.b32.xlu0 %v4221, 32
        %v4254 = vpop.permute.xlu0 %4253
        %4255 = vrot.lane.b32.xlu0 %v4222, 32
        %v4256 = vpop.permute.xlu0 %4255
        %4257 = vrot.lane.b32.xlu0 %v4223, 32
        %v4258 = vpop.permute.xlu0 %4257
        %4259 = vrot.lane.b32.xlu0 %v4224, 32
        %v4260 = vpop.permute.xlu0 %4259
        %4261 = vrot.lane.b32.xlu0 %v4225, 32
        %v4262 = vpop.permute.xlu0 %4261
        %4263 = vrot.lane.b32.xlu0 %v4226, 32
        %v4264 = vpop.permute.xlu0 %4263
        %4265 = vrot.lane.b32.xlu0 %v4227, 32
        %v4266 = vpop.permute.xlu0 %4265
        %4267 = vrot.lane.b32.xlu0 %v4228, 32
        %v4268 = vpop.permute.xlu0 %4267
        %4269 = vrot.lane.b32.xlu0 %v4229, 32
        %v4270 = vpop.permute.xlu0 %4269
        %4271 = vrot.lane.b32.xlu0 %v4230, 32
        %v4272 = vpop.permute.xlu0 %4271
        %4273 = vrot.lane.b32.xlu0 %v4231, 32
        %v4274 = vpop.permute.xlu0 %4273
        %4275 = vrot.lane.b32.xlu0 %v4232, 32
        %v4276 = vpop.permute.xlu0 %4275
        %4277 = vrot.lane.b32.xlu0 %v4233, 32
        %v4278 = vpop.permute.xlu0 %4277
        %4279 = vrot.lane.b32.xlu0 %v4234, 32
        %v4280 = vpop.permute.xlu0 %4279
        %4281 = vrot.lane.b32.xlu0 %v4235, 32
        %v4282 = vpop.permute.xlu0 %4281
        %4283 = vrot.lane.b32.xlu0 %v4236, 32
        %v4284 = vpop.permute.xlu0 %4283
        %vm4301 = vcmask 523520
        %4302 = vst.msk [vmem:[#allocation3 + $0x8] sm:$0xff] %vm4301, %v4254
        %4303 = vst.msk [vmem:[#allocation3 + $0x10] sm:$0xff] %vm4301, %v4256
        %4304 = vst.msk [vmem:[#allocation3 + $0x18] sm:$0xff] %vm4301, %v4258
        %4305 = vst.msk [vmem:[#allocation3 + $0x20] sm:$0xff] %vm4301, %v4260
        %4306 = vst.msk [vmem:[#allocation3 + $0x28] sm:$0xff] %vm4301, %v4262
        %4307 = vst.msk [vmem:[#allocation3 + $0x30] sm:$0xff] %vm4301, %v4264
        %4308 = vst.msk [vmem:[#allocation3 + $0x38] sm:$0xff] %vm4301, %v4266
        %4309 = vst.msk [vmem:[#allocation3 + $0x40] sm:$0xff] %vm4301, %v4268
        %4310 = vst.msk [vmem:[#allocation3 + $0x48] sm:$0xff] %vm4301, %v4270
        %4311 = vst.msk [vmem:[#allocation3 + $0x50] sm:$0xff] %vm4301, %v4272
        %4312 = vst.msk [vmem:[#allocation3 + $0x58] sm:$0xff] %vm4301, %v4274
        %4313 = vst.msk [vmem:[#allocation3 + $0x60] sm:$0xff] %vm4301, %v4276
        %4314 = vst.msk [vmem:[#allocation3 + $0x68] sm:$0xff] %vm4301, %v4278
        %4315 = vst.msk [vmem:[#allocation3 + $0x70] sm:$0xff] %vm4301, %v4280
        %4316 = vst.msk [vmem:[#allocation3 + $0x78] sm:$0xff] %vm4301, %v4282
        %4317 = vst.msk [vmem:[#allocation3 + $0x80] sm:$0xff] %vm4301, %v4284
        %v4318 = vpack.c.bf16 %v4158, %v4157
        %v4319 = vpack.c.bf16 %v4160, %v4159
        %v4320 = vpack.c.bf16 %v4162, %v4161
        %v4321 = vpack.c.bf16 %v4164, %v4163
        %v4322 = vpack.c.bf16 %v4166, %v4165
        %v4323 = vpack.c.bf16 %v4168, %v4167
        %v4324 = vpack.c.bf16 %v4170, %v4169
        %v4325 = vpack.c.bf16 %v4172, %v4171
        %v4326 = vpack.c.bf16 %v4174, %v4173
        %v4327 = vpack.c.bf16 %v4176, %v4175
        %v4328 = vpack.c.bf16 %v4178, %v4177
        %v4329 = vpack.c.bf16 %v4180, %v4179
        %v4330 = vpack.c.bf16 %v4182, %v4181
        %v4331 = vpack.c.bf16 %v4184, %v4183
        %v4332 = vpack.c.bf16 %v4186, %v4185
        %v4333 = vpack.c.bf16 %v4188, %v4187
        %4350 = vrot.lane.b32.xlu0 %v4318, 64
        %v4351 = vpop.permute.xlu0 %4350
        %4352 = vrot.lane.b32.xlu0 %v4319, 64
        %v4353 = vpop.permute.xlu0 %4352
        %4354 = vrot.lane.b32.xlu0 %v4320, 64
        %v4355 = vpop.permute.xlu0 %4354
        %4356 = vrot.lane.b32.xlu0 %v4321, 64
        %v4357 = vpop.permute.xlu0 %4356
        %4358 = vrot.lane.b32.xlu0 %v4322, 64
        %v4359 = vpop.permute.xlu0 %4358
        %4360 = vrot.lane.b32.xlu0 %v4323, 64
        %v4361 = vpop.permute.xlu0 %4360
        %4362 = vrot.lane.b32.xlu0 %v4324, 64
        %v4363 = vpop.permute.xlu0 %4362
        %4364 = vrot.lane.b32.xlu0 %v4325, 64
        %v4365 = vpop.permute.xlu0 %4364
        %4366 = vrot.lane.b32.xlu0 %v4326, 64
        %v4367 = vpop.permute.xlu0 %4366
        %4368 = vrot.lane.b32.xlu0 %v4327, 64
        %v4369 = vpop.permute.xlu0 %4368
        %4370 = vrot.lane.b32.xlu0 %v4328, 64
        %v4371 = vpop.permute.xlu0 %4370
        %4372 = vrot.lane.b32.xlu0 %v4329, 64
        %v4373 = vpop.permute.xlu0 %4372
        %4374 = vrot.lane.b32.xlu0 %v4330, 64
        %v4375 = vpop.permute.xlu0 %4374
        %4376 = vrot.lane.b32.xlu0 %v4331, 64
        %v4377 = vpop.permute.xlu0 %4376
        %4378 = vrot.lane.b32.xlu0 %v4332, 64
        %v4379 = vpop.permute.xlu0 %4378
        %4380 = vrot.lane.b32.xlu0 %v4333, 64
        %v4381 = vpop.permute.xlu0 %4380
        %vm4398 = vcmask 785920
        %4399 = vst.msk [vmem:[#allocation3 + $0x8] sm:$0xff] %vm4398, %v4351
        %4400 = vst.msk [vmem:[#allocation3 + $0x10] sm:$0xff] %vm4398, %v4353
        %4401 = vst.msk [vmem:[#allocation3 + $0x18] sm:$0xff] %vm4398, %v4355
        %4402 = vst.msk [vmem:[#allocation3 + $0x20] sm:$0xff] %vm4398, %v4357
        %4403 = vst.msk [vmem:[#allocation3 + $0x28] sm:$0xff] %vm4398, %v4359
        %4404 = vst.msk [vmem:[#allocation3 + $0x30] sm:$0xff] %vm4398, %v4361
        %4405 = vst.msk [vmem:[#allocation3 + $0x38] sm:$0xff] %vm4398, %v4363
        %4406 = vst.msk [vmem:[#allocation3 + $0x40] sm:$0xff] %vm4398, %v4365
        %4407 = vst.msk [vmem:[#allocation3 + $0x48] sm:$0xff] %vm4398, %v4367
        %4408 = vst.msk [vmem:[#allocation3 + $0x50] sm:$0xff] %vm4398, %v4369
        %4409 = vst.msk [vmem:[#allocation3 + $0x58] sm:$0xff] %vm4398, %v4371
        %4410 = vst.msk [vmem:[#allocation3 + $0x60] sm:$0xff] %vm4398, %v4373
        %4411 = vst.msk [vmem:[#allocation3 + $0x68] sm:$0xff] %vm4398, %v4375
        %4412 = vst.msk [vmem:[#allocation3 + $0x70] sm:$0xff] %vm4398, %v4377
        %4413 = vst.msk [vmem:[#allocation3 + $0x78] sm:$0xff] %vm4398, %v4379
        %4414 = vst.msk [vmem:[#allocation3 + $0x80] sm:$0xff] %vm4398, %v4381
        %v4415 = vld [vmem:[#allocation3] sm:$0xff]
        %v4416 = vld [vmem:[#allocation3 + $0x8] sm:$0xff]
        %v4417 = vld [vmem:[#allocation3 + $0x10] sm:$0xff]
        %v4418 = vld [vmem:[#allocation3 + $0x18] sm:$0xff]
        %v4419 = vld [vmem:[#allocation3 + $0x20] sm:$0xff]
        %v4420 = vld [vmem:[#allocation3 + $0x28] sm:$0xff]
        %v4421 = vld [vmem:[#allocation3 + $0x30] sm:$0xff]
        %v4422 = vld [vmem:[#allocation3 + $0x38] sm:$0xff]
        %v4423 = vld [vmem:[#allocation3 + $0x40] sm:$0xff]
        %v4424 = vld [vmem:[#allocation3 + $0x48] sm:$0xff]
        %v4425 = vld [vmem:[#allocation3 + $0x50] sm:$0xff]
        %v4426 = vld [vmem:[#allocation3 + $0x58] sm:$0xff]
        %v4427 = vld [vmem:[#allocation3 + $0x60] sm:$0xff]
        %v4428 = vld [vmem:[#allocation3 + $0x68] sm:$0xff]
        %v4429 = vld [vmem:[#allocation3 + $0x70] sm:$0xff]
        %v4430 = vld [vmem:[#allocation3 + $0x78] sm:$0xff]
        %v4431 = vld [vmem:[%s11] sm:$0xf]
        %v4432 = vld [vmem:[%s11 + $0x4] sm:$0xf]
        %v4433 = vld [vmem:[%s11 + $0x8] sm:$0xf]
        %v4434 = vld [vmem:[%s11 + $0xc] sm:$0xf]
        %v4435 = vld [vmem:[%s11 + $0x10] sm:$0xf]
        %v4436 = vld [vmem:[%s11 + $0x14] sm:$0xf]
        %v4437 = vld [vmem:[%s11 + $0x18] sm:$0xf]
        %v4438 = vld [vmem:[%s11 + $0x1c] sm:$0xf]
        %v4439 = vld [vmem:[%s11 + $0x20] sm:$0xf]
        %v4440 = vld [vmem:[%s11 + $0x24] sm:$0xf]
        %v4441 = vld [vmem:[%s11 + $0x28] sm:$0xf]
        %v4442 = vld [vmem:[%s11 + $0x2c] sm:$0xf]
        %v4443 = vld [vmem:[#allocation3 + $0x80] sm:$0xff]
        %s4444 = scalar_lea.vmem %s11, 48
        %v4445 = vld [vmem:[%s4444] sm:$0xf]
        %v4446 = vld [vmem:[%s4444 + $0x4] sm:$0xf]
        %v4447 = vld [vmem:[%s4444 + $0x8] sm:$0xf]
        %v4448 = vld [vmem:[%s4444 + $0xc] sm:$0xf]
        %v4449 = vld [vmem:[%s4444 + $0x10] sm:$0xf]
        %v4450 = vld [vmem:[%s4444 + $0x14] sm:$0xf]
        %v4451 = vld [vmem:[%s4444 + $0x18] sm:$0xf]
        %v4452 = vld [vmem:[%s4444 + $0x1c] sm:$0xf]
        %v4453 = vld [vmem:[%s4444 + $0x20] sm:$0xf]
        %v4454 = vld [vmem:[%s4444 + $0x24] sm:$0xf]
        %v4455 = vld [vmem:[%s4444 + $0x28] sm:$0xf]
        %v4456 = vld [vmem:[%s4444 + $0x2c] sm:$0xf]
        %v4469 = vunpack.c.l.b16 %v4445
        %v4470 = vunpack.c.l.b16 %v4446
        %v4471 = vunpack.c.l.b16 %v4447
        %v4472 = vunpack.c.l.b16 %v4448
        %v4473 = vunpack.c.l.b16 %v4449
        %v4474 = vunpack.c.l.b16 %v4450
        %v4475 = vunpack.c.l.b16 %v4451
        %v4476 = vunpack.c.l.b16 %v4452
        %v4477 = vunpack.c.l.b16 %v4453
        %v4478 = vunpack.c.l.b16 %v4454
        %v4479 = vunpack.c.l.b16 %v4455
        %v4480 = vunpack.c.l.b16 %v4456
        %v4481 = vpack.c.b16 %v4470, %v4469
        %v4482 = vpack.c.b16 %v4472, %v4471
        %v4483 = vpack.c.b16 %v4474, %v4473
        %v4484 = vpack.c.b16 %v4476, %v4475
        %v4485 = vpack.c.b16 %v4478, %v4477
        %v4486 = vpack.c.b16 %v4480, %v4479
        %v4494 = vsel %vm3994, %v4416, 0
        %v4497 = vsel %vm3994, %v4417, 0
        %v4500 = vsel %vm3994, %v4418, 0
        %v4503 = vsel %vm3994, %v4419, 0
        %v4506 = vsel %vm3994, %v4420, 0
        %v4509 = vsel %vm3994, %v4421, 0
        %v4512 = vsel %vm3994, %v4422, 0
        %v4515 = vsel %vm3994, %v4423, 0
        %v4518 = vsel %vm3994, %v4424, 0
        %v4521 = vsel %vm3994, %v4425, 0
        %v4524 = vsel %vm3994, %v4426, 0
        %v4527 = vsel %vm3994, %v4427, 0
        %v4530 = vsel %vm3994, %v4428, 0
        %v4533 = vsel %vm3994, %v4429, 0
        %v4536 = vsel %vm3994, %v4430, 0
        %v4539 = vsel %vm3994, %v4443, 0
        %4541 = vmatprep.subr.bf16.mxu0 0
        %4542 = vmatpush1.bf16.msra.mxu0 %v4481
        %4543 = vmatprep.subr.bf16.mxu0 0
        %4544 = vmatpush1.bf16.msra.mxu0 %v4482
        %4545 = vmatprep.subr.bf16.mxu0 0
        %4546 = vmatpush1.bf16.msra.mxu0 %v4483
        %4547 = vmatprep.subr.bf16.mxu0 0
        %4548 = vmatpush1.bf16.msra.mxu0 %v4484
        %4549 = vmatprep.subr.bf16.mxu0 0
        %4550 = vmatpush1.bf16.msra.mxu0 %v4485
        %4551 = vmatprep.subr.bf16.mxu0 0
        %4552 = vmatpush1.bf16.msra.mxu0 %v4486
        %4553 = vmatprep.subr.bf16.mxu0 0
        %4554 = vmatpush1.bf16.msra.mxu0 0
        %4555 = vmatprep.subr.bf16.mxu0 0
        %4556 = vmatpush1.bf16.msra.mxu0 0
        %4557 = vmatprep.subr.bf16.mxu0 0
        %4558 = vmatpush1.bf16.msra.mxu0 0
        %4559 = vmatprep.subr.bf16.mxu0 0
        %4560 = vmatpush1.bf16.msra.mxu0 0
        %4561 = vmatprep.subr.bf16.mxu0 0
        %4562 = vmatpush1.bf16.msra.mxu0 0
        %4563 = vmatprep.subr.bf16.mxu0 0
        %4564 = vmatpush1.bf16.msra.mxu0 0
        %4565 = vmatprep.subr.bf16.mxu0 0
        %4566 = vmatpush1.bf16.msra.mxu0 0
        %4567 = vmatprep.subr.bf16.mxu0 0
        %4568 = vmatpush1.bf16.msra.mxu0 0
        %4569 = vmatprep.subr.bf16.mxu0 0
        %4570 = vmatpush1.bf16.msra.mxu0 0
        %4571 = vmatprep.subr.bf16.mxu0 0
        %4572 = vmatpush1.bf16.msra.mxu0 0
        %4573 = vmatprep.mubr.bf16.mxu0 0
        %4574 = vmatmul.mubr.bf16.gmra.mrb[0].mxu0 %v4494
        %v4575 = vpop.f32.mrb[0].mxu0
        %v4576 = vadd.f32 0.0, %v4575
        %v4577 = vpop.f32.mrb[0].mxu0
        %v4578 = vpop.f32.mrb[0].mxu0
        %v4579 = vadd.f32 0.0, %v4578
        %v4580 = vpop.f32.mrb[0].mxu0
        %4581 = vmatprep.mubr.bf16.mxu0 0
        %4582 = vmatmul.mubr.bf16.gmra.mrb[0].mxu0 %v4497
        %v4583 = vpop.f32.mrb[0].mxu0
        %v4584 = vadd.f32 0.0, %v4583
        %v4585 = vpop.f32.mrb[0].mxu0
        %v4586 = vpop.f32.mrb[0].mxu0
        %v4587 = vadd.f32 0.0, %v4586
        %v4588 = vpop.f32.mrb[0].mxu0
        %4589 = vmatprep.mubr.bf16.mxu0 0
        %4590 = vmatmul.mubr.bf16.gmra.mrb[0].mxu0 %v4500
        %v4591 = vpop.f32.mrb[0].mxu0
        %v4592 = vadd.f32 0.0, %v4591
        %v4593 = vpop.f32.mrb[0].mxu0
        %v4594 = vpop.f32.mrb[0].mxu0
        %v4595 = vadd.f32 0.0, %v4594
        %v4596 = vpop.f32.mrb[0].mxu0
        %4597 = vmatprep.mubr.bf16.mxu0 0
        %4598 = vmatmul.mubr.bf16.gmra.mrb[0].mxu0 %v4503
        %v4599 = vpop.f32.mrb[0].mxu0
        %v4600 = vadd.f32 0.0, %v4599
        %v4601 = vpop.f32.mrb[0].mxu0
        %v4602 = vpop.f32.mrb[0].mxu0
        %v4603 = vadd.f32 0.0, %v4602
        %v4604 = vpop.f32.mrb[0].mxu0
        %4605 = vmatprep.mubr.bf16.mxu0 0
        %4606 = vmatmul.mubr.bf16.gmra.mrb[0].mxu0 %v4506
        %v4607 = vpop.f32.mrb[0].mxu0
        %v4608 = vadd.f32 0.0, %v4607
        %v4609 = vpop.f32.mrb[0].mxu0
        %v4610 = vpop.f32.mrb[0].mxu0
        %v4611 = vadd.f32 0.0, %v4610
        %v4612 = vpop.f32.mrb[0].mxu0
        %4613 = vmatprep.mubr.bf16.mxu0 0
        %4614 = vmatmul.mubr.bf16.gmra.mrb[0].mxu0 %v4509
        %v4615 = vpop.f32.mrb[0].mxu0
        %v4616 = vadd.f32 0.0, %v4615
        %v4617 = vpop.f32.mrb[0].mxu0
        %v4618 = vpop.f32.mrb[0].mxu0
        %v4619 = vadd.f32 0.0, %v4618
        %v4620 = vpop.f32.mrb[0].mxu0
        %4621 = vmatprep.mubr.bf16.mxu0 0
        %4622 = vmatmul.mubr.bf16.gmra.mrb[0].mxu0 %v4512
        %v4623 = vpop.f32.mrb[0].mxu0
        %v4624 = vadd.f32 0.0, %v4623
        %v4625 = vpop.f32.mrb[0].mxu0
        %v4626 = vpop.f32.mrb[0].mxu0
        %v4627 = vadd.f32 0.0, %v4626
        %v4628 = vpop.f32.mrb[0].mxu0
        %4629 = vmatprep.mubr.bf16.mxu0 0
        %4630 = vmatmul.mubr.bf16.gmra.mrb[0].mxu0 %v4515
        %v4631 = vpop.f32.mrb[0].mxu0
        %v4632 = vadd.f32 0.0, %v4631
        %v4633 = vpop.f32.mrb[0].mxu0
        %v4634 = vpop.f32.mrb[0].mxu0
        %v4635 = vadd.f32 0.0, %v4634
        %v4636 = vpop.f32.mrb[0].mxu0
        %4637 = vmatprep.mubr.bf16.mxu0 0
        %4638 = vmatmul.mubr.bf16.gmra.mrb[0].mxu0 %v4518
        %v4639 = vpop.f32.mrb[0].mxu0
        %v4640 = vadd.f32 0.0, %v4639
        %v4641 = vpop.f32.mrb[0].mxu0
        %v4642 = vpop.f32.mrb[0].mxu0
        %v4643 = vadd.f32 0.0, %v4642
        %v4644 = vpop.f32.mrb[0].mxu0
        %4645 = vmatprep.mubr.bf16.mxu0 0
        %4646 = vmatmul.mubr.bf16.gmra.mrb[0].mxu0 %v4521
        %v4647 = vpop.f32.mrb[0].mxu0
        %v4648 = vadd.f32 0.0, %v4647
        %v4649 = vpop.f32.mrb[0].mxu0
        %v4650 = vpop.f32.mrb[0].mxu0
        %v4651 = vadd.f32 0.0, %v4650
        %v4652 = vpop.f32.mrb[0].mxu0
        %4653 = vmatprep.mubr.bf16.mxu0 0
        %4654 = vmatmul.mubr.bf16.gmra.mrb[0].mxu0 %v4524
        %v4655 = vpop.f32.mrb[0].mxu0
        %v4656 = vadd.f32 0.0, %v4655
        %v4657 = vpop.f32.mrb[0].mxu0
        %v4658 = vpop.f32.mrb[0].mxu0
        %v4659 = vadd.f32 0.0, %v4658
        %v4660 = vpop.f32.mrb[0].mxu0
        %4661 = vmatprep.mubr.bf16.mxu0 0
        %4662 = vmatmul.mubr.bf16.gmra.mrb[0].mxu0 %v4527
        %v4663 = vpop.f32.mrb[0].mxu0
        %v4664 = vadd.f32 0.0, %v4663
        %v4665 = vpop.f32.mrb[0].mxu0
        %v4666 = vpop.f32.mrb[0].mxu0
        %v4667 = vadd.f32 0.0, %v4666
        %v4668 = vpop.f32.mrb[0].mxu0
        %4669 = vmatprep.mubr.bf16.mxu0 0
        %4670 = vmatmul.mubr.bf16.gmra.mrb[0].mxu0 %v4530
        %v4671 = vpop.f32.mrb[0].mxu0
        %v4672 = vadd.f32 0.0, %v4671
        %v4673 = vpop.f32.mrb[0].mxu0
        %v4674 = vpop.f32.mrb[0].mxu0
        %v4675 = vadd.f32 0.0, %v4674
        %v4676 = vpop.f32.mrb[0].mxu0
        %4677 = vmatprep.mubr.bf16.mxu0 0
        %4678 = vmatmul.mubr.bf16.gmra.mrb[0].mxu0 %v4533
        %v4679 = vpop.f32.mrb[0].mxu0
        %v4680 = vadd.f32 0.0, %v4679
        %v4681 = vpop.f32.mrb[0].mxu0
        %v4682 = vpop.f32.mrb[0].mxu0
        %v4683 = vadd.f32 0.0, %v4682
        %v4684 = vpop.f32.mrb[0].mxu0
        %4685 = vmatprep.mubr.bf16.mxu0 0
        %4686 = vmatmul.mubr.bf16.gmra.mrb[0].mxu0 %v4536
        %v4687 = vpop.f32.mrb[0].mxu0
        %v4688 = vadd.f32 0.0, %v4687
        %v4689 = vpop.f32.mrb[0].mxu0
        %v4690 = vpop.f32.mrb[0].mxu0
        %v4691 = vadd.f32 0.0, %v4690
        %v4692 = vpop.f32.mrb[0].mxu0
        %4693 = vmatprep.mubr.bf16.mxu0 0
        %4694 = vmatmul.mubr.bf16.gmra.mrb[0].mxu0 %v4539
        %v4695 = vpop.f32.mrb[0].mxu0
        %v4696 = vadd.f32 0.0, %v4695
        %v4697 = vpop.f32.mrb[0].mxu0
        %v4698 = vpop.f32.mrb[0].mxu0
        %v4699 = vadd.f32 0.0, %v4698
        %v4700 = vpop.f32.mrb[0].mxu0
        %4701 = vdwg.mxu0
        %v4714 = vunpack.c.l.b16 %v4431
        %v4715 = vunpack.c.l.b16 %v4432
        %v4716 = vunpack.c.l.b16 %v4433
        %v4717 = vunpack.c.l.b16 %v4434
        %v4718 = vunpack.c.l.b16 %v4435
        %v4719 = vunpack.c.l.b16 %v4436
        %v4720 = vunpack.c.l.b16 %v4437
        %v4721 = vunpack.c.l.b16 %v4438
        %v4722 = vunpack.c.l.b16 %v4439
        %v4723 = vunpack.c.l.b16 %v4440
        %v4724 = vunpack.c.l.b16 %v4441
        %v4725 = vunpack.c.l.b16 %v4442
        %v4726 = vpack.c.b16 %v4715, %v4714
        %v4727 = vpack.c.b16 %v4717, %v4716
        %v4728 = vpack.c.b16 %v4719, %v4718
        %v4729 = vpack.c.b16 %v4721, %v4720
        %v4730 = vpack.c.b16 %v4723, %v4722
        %v4731 = vpack.c.b16 %v4725, %v4724
        %v4739 = vsel %vm3994, %v4415, 0
        %4741 = vmatprep.subr.bf16.mxu0 0
        %4742 = vmatpush1.bf16.msra.mxu0 %v4726
        %4743 = vmatprep.subr.bf16.mxu0 0
        %4744 = vmatpush1.bf16.msra.mxu0 %v4727
        %4745 = vmatprep.subr.bf16.mxu0 0
        %4746 = vmatpush1.bf16.msra.mxu0 %v4728
        %4747 = vmatprep.subr.bf16.mxu0 0
        %4748 = vmatpush1.bf16.msra.mxu0 %v4729
        %4749 = vmatprep.subr.bf16.mxu0 0
        %4750 = vmatpush1.bf16.msra.mxu0 %v4730
        %4751 = vmatprep.subr.bf16.mxu0 0
        %4752 = vmatpush1.bf16.msra.mxu0 %v4731
        %4753 = vmatprep.subr.bf16.mxu0 0
        %4754 = vmatpush1.bf16.msra.mxu0 0
        %4755 = vmatprep.subr.bf16.mxu0 0
        %4756 = vmatpush1.bf16.msra.mxu0 0
        %4757 = vmatprep.subr.bf16.mxu0 0
        %4758 = vmatpush1.bf16.msra.mxu0 0
        %4759 = vmatprep.subr.bf16.mxu0 0
        %4760 = vmatpush1.bf16.msra.mxu0 0
        %4761 = vmatprep.subr.bf16.mxu0 0
        %4762 = vmatpush1.bf16.msra.mxu0 0
        %4763 = vmatprep.subr.bf16.mxu0 0
        %4764 = vmatpush1.bf16.msra.mxu0 0
        %4765 = vmatprep.subr.bf16.mxu0 0
        %4766 = vmatpush1.bf16.msra.mxu0 0
        %4767 = vmatprep.subr.bf16.mxu0 0
        %4768 = vmatpush1.bf16.msra.mxu0 0
        %4769 = vmatprep.subr.bf16.mxu0 0
        %4770 = vmatpush1.bf16.msra.mxu0 0
        %4771 = vmatprep.subr.bf16.mxu0 0
        %4772 = vmatpush1.bf16.msra.mxu0 0
        %4773 = vmatprep.mubr.bf16.mxu0 0
        %4774 = vmatmul.mubr.bf16.gmra.mrb[0].mxu0 %v4739
        %v4775 = vpop.f32.mrb[0].mxu0
        %v4776 = vadd.f32 %v4576, %v4775
        %v4777 = vpop.f32.mrb[0].mxu0
        %v4778 = vpop.f32.mrb[0].mxu0
        %v4779 = vadd.f32 %v4579, %v4778
        %v4780 = vpop.f32.mrb[0].mxu0
        %4781 = vmatprep.mubr.bf16.mxu0 0
        %4782 = vmatmul.mubr.bf16.gmra.mrb[0].mxu0 %v4494
        %v4783 = vpop.f32.mrb[0].mxu0
        %v4784 = vadd.f32 %v4584, %v4783
        %v4785 = vpop.f32.mrb[0].mxu0
        %v4786 = vpop.f32.mrb[0].mxu0
        %v4787 = vadd.f32 %v4587, %v4786
        %v4788 = vpop.f32.mrb[0].mxu0
        %4789 = vmatprep.mubr.bf16.mxu0 0
        %4790 = vmatmul.mubr.bf16.gmra.mrb[0].mxu0 %v4497
        %v4791 = vpop.f32.mrb[0].mxu0
        %v4792 = vadd.f32 %v4592, %v4791
        %v4793 = vpop.f32.mrb[0].mxu0
        %v4794 = vpop.f32.mrb[0].mxu0
        %v4795 = vadd.f32 %v4595, %v4794
        %v4796 = vpop.f32.mrb[0].mxu0
        %4797 = vmatprep.mubr.bf16.mxu0 0
        %4798 = vmatmul.mubr.bf16.gmra.mrb[0].mxu0 %v4500
        %v4799 = vpop.f32.mrb[0].mxu0
        %v4800 = vadd.f32 %v4600, %v4799
        %v4801 = vpop.f32.mrb[0].mxu0
        %v4802 = vpop.f32.mrb[0].mxu0
        %v4803 = vadd.f32 %v4603, %v4802
        %v4804 = vpop.f32.mrb[0].mxu0
        %4805 = vmatprep.mubr.bf16.mxu0 0
        %4806 = vmatmul.mubr.bf16.gmra.mrb[0].mxu0 %v4503
        %v4807 = vpop.f32.mrb[0].mxu0
        %v4808 = vadd.f32 %v4608, %v4807
        %v4809 = vpop.f32.mrb[0].mxu0
        %v4810 = vpop.f32.mrb[0].mxu0
        %v4811 = vadd.f32 %v4611, %v4810
        %v4812 = vpop.f32.mrb[0].mxu0
        %4813 = vmatprep.mubr.bf16.mxu0 0
        %4814 = vmatmul.mubr.bf16.gmra.mrb[0].mxu0 %v4506
        %v4815 = vpop.f32.mrb[0].mxu0
        %v4816 = vadd.f32 %v4616, %v4815
        %v4817 = vpop.f32.mrb[0].mxu0
        %v4818 = vpop.f32.mrb[0].mxu0
        %v4819 = vadd.f32 %v4619, %v4818
        %v4820 = vpop.f32.mrb[0].mxu0
        %4821 = vmatprep.mubr.bf16.mxu0 0
        %4822 = vmatmul.mubr.bf16.gmra.mrb[0].mxu0 %v4509
        %v4823 = vpop.f32.mrb[0].mxu0
        %v4824 = vadd.f32 %v4624, %v4823
        %v4825 = vpop.f32.mrb[0].mxu0
        %v4826 = vpop.f32.mrb[0].mxu0
        %v4827 = vadd.f32 %v4627, %v4826
        %v4828 = vpop.f32.mrb[0].mxu0
        %4829 = vmatprep.mubr.bf16.mxu0 0
        %4830 = vmatmul.mubr.bf16.gmra.mrb[0].mxu0 %v4512
        %v4831 = vpop.f32.mrb[0].mxu0
        %v4832 = vadd.f32 %v4632, %v4831
        %v4833 = vpop.f32.mrb[0].mxu0
        %v4834 = vpop.f32.mrb[0].mxu0
        %v4835 = vadd.f32 %v4635, %v4834
        %v4836 = vpop.f32.mrb[0].mxu0
        %4837 = vmatprep.mubr.bf16.mxu0 0
        %4838 = vmatmul.mubr.bf16.gmra.mrb[0].mxu0 %v4515
        %v4839 = vpop.f32.mrb[0].mxu0
        %v4840 = vadd.f32 %v4640, %v4839
        %v4841 = vpop.f32.mrb[0].mxu0
        %v4842 = vpop.f32.mrb[0].mxu0
        %v4843 = vadd.f32 %v4643, %v4842
        %v4844 = vpop.f32.mrb[0].mxu0
        %4845 = vmatprep.mubr.bf16.mxu0 0
        %4846 = vmatmul.mubr.bf16.gmra.mrb[0].mxu0 %v4518
        %v4847 = vpop.f32.mrb[0].mxu0
        %v4848 = vadd.f32 %v4648, %v4847
        %v4849 = vpop.f32.mrb[0].mxu0
        %v4850 = vpop.f32.mrb[0].mxu0
        %v4851 = vadd.f32 %v4651, %v4850
        %v4852 = vpop.f32.mrb[0].mxu0
        %4853 = vmatprep.mubr.bf16.mxu0 0
        %4854 = vmatmul.mubr.bf16.gmra.mrb[0].mxu0 %v4521
        %v4855 = vpop.f32.mrb[0].mxu0
        %v4856 = vadd.f32 %v4656, %v4855
        %v4857 = vpop.f32.mrb[0].mxu0
        %v4858 = vpop.f32.mrb[0].mxu0
        %v4859 = vadd.f32 %v4659, %v4858
        %v4860 = vpop.f32.mrb[0].mxu0
        %4861 = vmatprep.mubr.bf16.mxu0 0
        %4862 = vmatmul.mubr.bf16.gmra.mrb[0].mxu0 %v4524
        %v4863 = vpop.f32.mrb[0].mxu0
        %v4864 = vadd.f32 %v4664, %v4863
        %v4865 = vpop.f32.mrb[0].mxu0
        %v4866 = vpop.f32.mrb[0].mxu0
        %v4867 = vadd.f32 %v4667, %v4866
        %v4868 = vpop.f32.mrb[0].mxu0
        %4869 = vmatprep.mubr.bf16.mxu0 0
        %4870 = vmatmul.mubr.bf16.gmra.mrb[0].mxu0 %v4527
        %v4871 = vpop.f32.mrb[0].mxu0
        %v4872 = vadd.f32 %v4672, %v4871
        %v4873 = vpop.f32.mrb[0].mxu0
        %v4874 = vpop.f32.mrb[0].mxu0
        %v4875 = vadd.f32 %v4675, %v4874
        %v4876 = vpop.f32.mrb[0].mxu0
        %4877 = vmatprep.mubr.bf16.mxu0 0
        %4878 = vmatmul.mubr.bf16.gmra.mrb[0].mxu0 %v4530
        %v4879 = vpop.f32.mrb[0].mxu0
        %v4880 = vadd.f32 %v4680, %v4879
        %v4881 = vpop.f32.mrb[0].mxu0
        %v4882 = vpop.f32.mrb[0].mxu0
        %v4883 = vadd.f32 %v4683, %v4882
        %v4884 = vpop.f32.mrb[0].mxu0
        %4885 = vmatprep.mubr.bf16.mxu0 0
        %4886 = vmatmul.mubr.bf16.gmra.mrb[0].mxu0 %v4533
        %v4887 = vpop.f32.mrb[0].mxu0
        %v4888 = vadd.f32 %v4688, %v4887
        %v4889 = vpop.f32.mrb[0].mxu0
        %v4890 = vpop.f32.mrb[0].mxu0
        %v4891 = vadd.f32 %v4691, %v4890
        %v4892 = vpop.f32.mrb[0].mxu0
        %4893 = vmatprep.mubr.bf16.mxu0 0
        %4894 = vmatmul.mubr.bf16.gmra.mrb[0].mxu0 %v4536
        %v4895 = vpop.f32.mrb[0].mxu0
        %v4896 = vadd.f32 %v4696, %v4895
        %v4897 = vpop.f32.mrb[0].mxu0
        %v4898 = vpop.f32.mrb[0].mxu0
        %v4899 = vadd.f32 %v4699, %v4898
        %v4900 = vpop.f32.mrb[0].mxu0
        %4901 = vdwg.mxu0
        %v4902 = vld [vmem:[#allocation3 + $0x10] sm:$0xff]
        %v4903 = vld [vmem:[#allocation3 + $0x18] sm:$0xff]
        %v4904 = vld [vmem:[#allocation3 + $0x20] sm:$0xff]
        %v4905 = vld [vmem:[#allocation3 + $0x28] sm:$0xff]
        %v4906 = vld [vmem:[#allocation3 + $0x30] sm:$0xff]
        %v4907 = vld [vmem:[#allocation3 + $0x38] sm:$0xff]
        %v4908 = vld [vmem:[#allocation3 + $0x40] sm:$0xff]
        %v4909 = vld [vmem:[#allocation3 + $0x48] sm:$0xff]
        %v4910 = vld [vmem:[#allocation3 + $0x50] sm:$0xff]
        %v4911 = vld [vmem:[#allocation3 + $0x58] sm:$0xff]
        %v4912 = vld [vmem:[#allocation3 + $0x60] sm:$0xff]
        %v4913 = vld [vmem:[#allocation3 + $0x68] sm:$0xff]
        %v4914 = vld [vmem:[#allocation3 + $0x70] sm:$0xff]
        %v4915 = vld [vmem:[#allocation3 + $0x78] sm:$0xff]
        %v4916 = vld [vmem:[#allocation3 + $0x80] sm:$0xff]
        %v4917 = vld [vmem:[#allocation3 + $0x88] sm:$0xff]
        %s4918 = scalar_lea.vmem %s11, 96
        %v4919 = vld [vmem:[%s4918] sm:$0xf]
        %v4920 = vld [vmem:[%s4918 + $0x4] sm:$0xf]
        %v4921 = vld [vmem:[%s4918 + $0x8] sm:$0xf]
        %v4922 = vld [vmem:[%s4918 + $0xc] sm:$0xf]
        %v4923 = vld [vmem:[%s4918 + $0x10] sm:$0xf]
        %v4924 = vld [vmem:[%s4918 + $0x14] sm:$0xf]
        %v4925 = vld [vmem:[%s4918 + $0x18] sm:$0xf]
        %v4926 = vld [vmem:[%s4918 + $0x1c] sm:$0xf]
        %v4927 = vld [vmem:[%s4918 + $0x20] sm:$0xf]
        %v4928 = vld [vmem:[%s4918 + $0x24] sm:$0xf]
        %v4929 = vld [vmem:[%s4918 + $0x28] sm:$0xf]
        %v4930 = vld [vmem:[%s4918 + $0x2c] sm:$0xf]
        %v4943 = vunpack.c.l.b16 %v4919
        %v4944 = vunpack.c.l.b16 %v4920
        %v4945 = vunpack.c.l.b16 %v4921
        %v4946 = vunpack.c.l.b16 %v4922
        %v4947 = vunpack.c.l.b16 %v4923
        %v4948 = vunpack.c.l.b16 %v4924
        %v4949 = vunpack.c.l.b16 %v4925
        %v4950 = vunpack.c.l.b16 %v4926
        %v4951 = vunpack.c.l.b16 %v4927
        %v4952 = vunpack.c.l.b16 %v4928
        %v4953 = vunpack.c.l.b16 %v4929
        %v4954 = vunpack.c.l.b16 %v4930
        %v4955 = vpack.c.b16 %v4944, %v4943
        %v4956 = vpack.c.b16 %v4946, %v4945
        %v4957 = vpack.c.b16 %v4948, %v4947
        %v4958 = vpack.c.b16 %v4950, %v4949
        %v4959 = vpack.c.b16 %v4952, %v4951
        %v4960 = vpack.c.b16 %v4954, %v4953
        %v4968 = vsel %vm3994, %v4902, 0
        %v4971 = vsel %vm3994, %v4903, 0
        %v4974 = vsel %vm3994, %v4904, 0
        %v4977 = vsel %vm3994, %v4905, 0
        %v4980 = vsel %vm3994, %v4906, 0
        %v4983 = vsel %vm3994, %v4907, 0
        %v4986 = vsel %vm3994, %v4908, 0
        %v4989 = vsel %vm3994, %v4909, 0
        %v4992 = vsel %vm3994, %v4910, 0
        %v4995 = vsel %vm3994, %v4911, 0
        %v4998 = vsel %vm3994, %v4912, 0
        %v5001 = vsel %vm3994, %v4913, 0
        %v5004 = vsel %vm3994, %v4914, 0
        %v5007 = vsel %vm3994, %v4915, 0
        %v5010 = vsel %vm3994, %v4916, 0
        %v5013 = vsel %vm3994, %v4917, 0
        %5015 = vmatprep.subr.bf16.mxu0 0
        %5016 = vmatpush1.bf16.msra.mxu0 %v4955
        %5017 = vmatprep.subr.bf16.mxu0 0
        %5018 = vmatpush1.bf16.msra.mxu0 %v4956
        %5019 = vmatprep.subr.bf16.mxu0 0
        %5020 = vmatpush1.bf16.msra.mxu0 %v4957
        %5021 = vmatprep.subr.bf16.mxu0 0
        %5022 = vmatpush1.bf16.msra.mxu0 %v4958
        %5023 = vmatprep.subr.bf16.mxu0 0
        %5024 = vmatpush1.bf16.msra.mxu0 %v4959
        %5025 = vmatprep.subr.bf16.mxu0 0
        %5026 = vmatpush1.bf16.msra.mxu0 %v4960
        %5027 = vmatprep.subr.bf16.mxu0 0
        %5028 = vmatpush1.bf16.msra.mxu0 0
        %5029 = vmatprep.subr.bf16.mxu0 0
        %5030 = vmatpush1.bf16.msra.mxu0 0
        %5031 = vmatprep.subr.bf16.mxu0 0
        %5032 = vmatpush1.bf16.msra.mxu0 0
        %5033 = vmatprep.subr.bf16.mxu0 0
        %5034 = vmatpush1.bf16.msra.mxu0 0
        %5035 = vmatprep.subr.bf16.mxu0 0
        %5036 = vmatpush1.bf16.msra.mxu0 0
        %5037 = vmatprep.subr.bf16.mxu0 0
        %5038 = vmatpush1.bf16.msra.mxu0 0
        %5039 = vmatprep.subr.bf16.mxu0 0
        %5040 = vmatpush1.bf16.msra.mxu0 0
        %5041 = vmatprep.subr.bf16.mxu0 0
        %5042 = vmatpush1.bf16.msra.mxu0 0
        %5043 = vmatprep.subr.bf16.mxu0 0
        %5044 = vmatpush1.bf16.msra.mxu0 0
        %5045 = vmatprep.subr.bf16.mxu0 0
        %5046 = vmatpush1.bf16.msra.mxu0 0
        %5047 = vmatprep.mubr.bf16.mxu0 0
        %5048 = vmatmul.mubr.bf16.gmra.mrb[0].mxu0 %v4968
        %v5049 = vpop.f32.mrb[0].mxu0
        %v5050 = vadd.f32 0.0, %v5049
        %v5051 = vpop.f32.mrb[0].mxu0
        %v5052 = vpop.f32.mrb[0].mxu0
        %v5053 = vadd.f32 0.0, %v5052
        %v5054 = vpop.f32.mrb[0].mxu0
        %5055 = vmatprep.mubr.bf16.mxu0 0
        %5056 = vmatmul.mubr.bf16.gmra.mrb[0].mxu0 %v4971
        %v5057 = vpop.f32.mrb[0].mxu0
        %v5058 = vadd.f32 0.0, %v5057
        %v5059 = vpop.f32.mrb[0].mxu0
        %v5060 = vpop.f32.mrb[0].mxu0
        %v5061 = vadd.f32 0.0, %v5060
        %v5062 = vpop.f32.mrb[0].mxu0
        %5063 = vmatprep.mubr.bf16.mxu0 0
        %5064 = vmatmul.mubr.bf16.gmra.mrb[0].mxu0 %v4974
        %v5065 = vpop.f32.mrb[0].mxu0
        %v5066 = vadd.f32 0.0, %v5065
        %v5067 = vpop.f32.mrb[0].mxu0
        %v5068 = vpop.f32.mrb[0].mxu0
        %v5069 = vadd.f32 0.0, %v5068
        %v5070 = vpop.f32.mrb[0].mxu0
        %5071 = vmatprep.mubr.bf16.mxu0 0
        %5072 = vmatmul.mubr.bf16.gmra.mrb[0].mxu0 %v4977
        %v5073 = vpop.f32.mrb[0].mxu0
        %v5074 = vadd.f32 0.0, %v5073
        %v5075 = vpop.f32.mrb[0].mxu0
        %v5076 = vpop.f32.mrb[0].mxu0
        %v5077 = vadd.f32 0.0, %v5076
        %v5078 = vpop.f32.mrb[0].mxu0
        %5079 = vmatprep.mubr.bf16.mxu0 0
        %5080 = vmatmul.mubr.bf16.gmra.mrb[0].mxu0 %v4980
        %v5081 = vpop.f32.mrb[0].mxu0
        %v5082 = vadd.f32 0.0, %v5081
        %v5083 = vpop.f32.mrb[0].mxu0
        %v5084 = vpop.f32.mrb[0].mxu0
        %v5085 = vadd.f32 0.0, %v5084
        %v5086 = vpop.f32.mrb[0].mxu0
        %5087 = vmatprep.mubr.bf16.mxu0 0
        %5088 = vmatmul.mubr.bf16.gmra.mrb[0].mxu0 %v4983
        %v5089 = vpop.f32.mrb[0].mxu0
        %v5090 = vadd.f32 0.0, %v5089
        %v5091 = vpop.f32.mrb[0].mxu0
        %v5092 = vpop.f32.mrb[0].mxu0
        %v5093 = vadd.f32 0.0, %v5092
        %v5094 = vpop.f32.mrb[0].mxu0
        %5095 = vmatprep.mubr.bf16.mxu0 0
        %5096 = vmatmul.mubr.bf16.gmra.mrb[0].mxu0 %v4986
        %v5097 = vpop.f32.mrb[0].mxu0
        %v5098 = vadd.f32 0.0, %v5097
        %v5099 = vpop.f32.mrb[0].mxu0
        %v5100 = vpop.f32.mrb[0].mxu0
        %v5101 = vadd.f32 0.0, %v5100
        %v5102 = vpop.f32.mrb[0].mxu0
        %5103 = vmatprep.mubr.bf16.mxu0 0
        %5104 = vmatmul.mubr.bf16.gmra.mrb[0].mxu0 %v4989
        %v5105 = vpop.f32.mrb[0].mxu0
        %v5106 = vadd.f32 0.0, %v5105
        %v5107 = vpop.f32.mrb[0].mxu0
        %v5108 = vpop.f32.mrb[0].mxu0
        %v5109 = vadd.f32 0.0, %v5108
        %v5110 = vpop.f32.mrb[0].mxu0
        %5111 = vmatprep.mubr.bf16.mxu0 0
        %5112 = vmatmul.mubr.bf16.gmra.mrb[0].mxu0 %v4992
        %v5113 = vpop.f32.mrb[0].mxu0
        %v5114 = vadd.f32 0.0, %v5113
        %v5115 = vpop.f32.mrb[0].mxu0
        %v5116 = vpop.f32.mrb[0].mxu0
        %v5117 = vadd.f32 0.0, %v5116
        %v5118 = vpop.f32.mrb[0].mxu0
        %5119 = vmatprep.mubr.bf16.mxu0 0
        %5120 = vmatmul.mubr.bf16.gmra.mrb[0].mxu0 %v4995
        %v5121 = vpop.f32.mrb[0].mxu0
        %v5122 = vadd.f32 0.0, %v5121
        %v5123 = vpop.f32.mrb[0].mxu0
        %v5124 = vpop.f32.mrb[0].mxu0
        %v5125 = vadd.f32 0.0, %v5124
        %v5126 = vpop.f32.mrb[0].mxu0
        %5127 = vmatprep.mubr.bf16.mxu0 0
        %5128 = vmatmul.mubr.bf16.gmra.mrb[0].mxu0 %v4998
        %v5129 = vpop.f32.mrb[0].mxu0
        %v5130 = vadd.f32 0.0, %v5129
        %v5131 = vpop.f32.mrb[0].mxu0
        %v5132 = vpop.f32.mrb[0].mxu0
        %v5133 = vadd.f32 0.0, %v5132
        %v5134 = vpop.f32.mrb[0].mxu0
        %5135 = vmatprep.mubr.bf16.mxu0 0
        %5136 = vmatmul.mubr.bf16.gmra.mrb[0].mxu0 %v5001
        %v5137 = vpop.f32.mrb[0].mxu0
        %v5138 = vadd.f32 0.0, %v5137
        %v5139 = vpop.f32.mrb[0].mxu0
        %v5140 = vpop.f32.mrb[0].mxu0
        %v5141 = vadd.f32 0.0, %v5140
        %v5142 = vpop.f32.mrb[0].mxu0
        %5143 = vmatprep.mubr.bf16.mxu0 0
        %5144 = vmatmul.mubr.bf16.gmra.mrb[0].mxu0 %v5004
        %v5145 = vpop.f32.mrb[0].mxu0
        %v5146 = vadd.f32 0.0, %v5145
        %v5147 = vpop.f32.mrb[0].mxu0
        %v5148 = vpop.f32.mrb[0].mxu0
        %v5149 = vadd.f32 0.0, %v5148
        %v5150 = vpop.f32.mrb[0].mxu0
        %5151 = vmatprep.mubr.bf16.mxu0 0
        %5152 = vmatmul.mubr.bf16.gmra.mrb[0].mxu0 %v5007
        %v5153 = vpop.f32.mrb[0].mxu0
        %v5154 = vadd.f32 0.0, %v5153
        %v5155 = vpop.f32.mrb[0].mxu0
        %v5156 = vpop.f32.mrb[0].mxu0
        %v5157 = vadd.f32 0.0, %v5156
        %v5158 = vpop.f32.mrb[0].mxu0
        %5159 = vmatprep.mubr.bf16.mxu0 0
        %5160 = vmatmul.mubr.bf16.gmra.mrb[0].mxu0 %v5010
        %v5161 = vpop.f32.mrb[0].mxu0
        %v5162 = vadd.f32 0.0, %v5161
        %v5163 = vpop.f32.mrb[0].mxu0
        %v5164 = vpop.f32.mrb[0].mxu0
        %v5165 = vadd.f32 0.0, %v5164
        %v5166 = vpop.f32.mrb[0].mxu0
        %5167 = vmatprep.mubr.bf16.mxu0 0
        %5168 = vmatmul.mubr.bf16.gmra.mrb[0].mxu0 %v5013
        %v5169 = vpop.f32.mrb[0].mxu0
        %v5170 = vadd.f32 0.0, %v5169
        %v5171 = vpop.f32.mrb[0].mxu0
        %v5172 = vpop.f32.mrb[0].mxu0
        %v5173 = vadd.f32 0.0, %v5172
        %v5174 = vpop.f32.mrb[0].mxu0
        %5175 = vdwg.mxu0
        %v5176 = vadd.f32 %v4776, %v5050
        %v5177 = vadd.f32 %v4779, %v5053
        %v5178 = vadd.f32 %v4784, %v5058
        %v5179 = vadd.f32 %v4787, %v5061
        %v5180 = vadd.f32 %v4792, %v5066
        %v5181 = vadd.f32 %v4795, %v5069
        %v5182 = vadd.f32 %v4800, %v5074
        %v5183 = vadd.f32 %v4803, %v5077
        %v5184 = vadd.f32 %v4808, %v5082
        %v5185 = vadd.f32 %v4811, %v5085
        %v5186 = vadd.f32 %v4816, %v5090
        %v5187 = vadd.f32 %v4819, %v5093
        %v5188 = vadd.f32 %v4824, %v5098
        %v5189 = vadd.f32 %v4827, %v5101
        %v5190 = vadd.f32 %v4832, %v5106
        %v5191 = vadd.f32 %v4835, %v5109
        %v5192 = vadd.f32 %v4840, %v5114
        %v5193 = vadd.f32 %v4843, %v5117
        %v5194 = vadd.f32 %v4848, %v5122
        %v5195 = vadd.f32 %v4851, %v5125
        %v5196 = vadd.f32 %v4856, %v5130
        %v5197 = vadd.f32 %v4859, %v5133
        %v5198 = vadd.f32 %v4864, %v5138
        %v5199 = vadd.f32 %v4867, %v5141
        %v5200 = vadd.f32 %v4872, %v5146
        %v5201 = vadd.f32 %v4875, %v5149
        %v5202 = vadd.f32 %v4880, %v5154
        %v5203 = vadd.f32 %v4883, %v5157
        %v5204 = vadd.f32 %v4888, %v5162
        %v5205 = vadd.f32 %v4891, %v5165
        %v5206 = vadd.f32 %v4896, %v5170
        %v5207 = vadd.f32 %v4899, %v5173
        %v5208 = vpack.c.bf16 %v482, %v481
        %v5209 = vpack.c.bf16 %v484, %v483
        %v5210 = vpack.c.bf16 %v486, %v485
        %v5211 = vpack.c.bf16 %v488, %v487
        %v5212 = vpack.c.bf16 %v490, %v489
        %v5213 = vpack.c.bf16 %v492, %v491
        %v5214 = vpack.c.bf16 %v494, %v493
        %v5215 = vpack.c.bf16 %v496, %v495
        %v5216 = vpack.c.bf16 %v498, %v497
        %v5217 = vpack.c.bf16 %v500, %v499
        %v5218 = vpack.c.bf16 %v502, %v501
        %v5219 = vpack.c.bf16 %v504, %v503
        %v5220 = vpack.c.bf16 %v506, %v505
        %v5221 = vpack.c.bf16 %v508, %v507
        %v5222 = vpack.c.bf16 %v510, %v509
        %v5223 = vpack.c.bf16 %v512, %v511
        %v5224 = vld [vmem:[%s12] sm:$0xf]
        %v5225 = vld [vmem:[%s12 + $0x4] sm:$0xf]
        %v5228 = vunpack.c.l.b16 %v5224
        %v5229 = vunpack.c.l.b16 %v5225
        %v5230 = vpack.c.b16 %v5229, %v5228
        %v5233 = vsel %vm999, %v5208, 0
        %v5236 = vsel %vm999, %v5209, 0
        %v5239 = vsel %vm999, %v5210, 0
        %v5242 = vsel %vm999, %v5211, 0
        %v5245 = vsel %vm999, %v5212, 0
        %v5248 = vsel %vm999, %v5213, 0
        %v5251 = vsel %vm999, %v5214, 0
        %v5254 = vsel %vm999, %v5215, 0
        %v5257 = vsel %vm999, %v5216, 0
        %v5260 = vsel %vm999, %v5217, 0
        %v5263 = vsel %vm999, %v5218, 0
        %v5266 = vsel %vm999, %v5219, 0
        %v5269 = vsel %vm999, %v5220, 0
        %v5272 = vsel %vm999, %v5221, 0
        %v5275 = vsel %vm999, %v5222, 0
        %v5278 = vsel %vm999, %v5223, 0
        %5280 = vmatprep.subr.bf16.mxu0 0
        %5281 = vmatpush1.bf16.msra.mxu0 %v5230
        %5282 = vmatprep.subr.bf16.mxu0 0
        %5283 = vmatpush1.bf16.msra.mxu0 0
        %5284 = vmatprep.subr.bf16.mxu0 0
        %5285 = vmatpush1.bf16.msra.mxu0 0
        %5286 = vmatprep.subr.bf16.mxu0 0
        %5287 = vmatpush1.bf16.msra.mxu0 0
        %5288 = vmatprep.subr.bf16.mxu0 0
        %5289 = vmatpush1.bf16.msra.mxu0 0
        %5290 = vmatprep.subr.bf16.mxu0 0
        %5291 = vmatpush1.bf16.msra.mxu0 0
        %5292 = vmatprep.subr.bf16.mxu0 0
        %5293 = vmatpush1.bf16.msra.mxu0 0
        %5294 = vmatprep.subr.bf16.mxu0 0
        %5295 = vmatpush1.bf16.msra.mxu0 0
        %5296 = vmatprep.subr.bf16.mxu0 0
        %5297 = vmatpush1.bf16.msra.mxu0 0
        %5298 = vmatprep.subr.bf16.mxu0 0
        %5299 = vmatpush1.bf16.msra.mxu0 0
        %5300 = vmatprep.subr.bf16.mxu0 0
        %5301 = vmatpush1.bf16.msra.mxu0 0
        %5302 = vmatprep.subr.bf16.mxu0 0
        %5303 = vmatpush1.bf16.msra.mxu0 0
        %5304 = vmatprep.subr.bf16.mxu0 0
        %5305 = vmatpush1.bf16.msra.mxu0 0
        %5306 = vmatprep.subr.bf16.mxu0 0
        %5307 = vmatpush1.bf16.msra.mxu0 0
        %5308 = vmatprep.subr.bf16.mxu0 0
        %5309 = vmatpush1.bf16.msra.mxu0 0
        %5310 = vmatprep.subr.bf16.mxu0 0
        %5311 = vmatpush1.bf16.msra.mxu0 0
        %5312 = vmatprep.mubr.bf16.mxu0 0
        %5313 = vmatmul.mubr.bf16.gmra.mrb[0].mxu0 %v5233
        %v5314 = vpop.f32.mrb[0].mxu0
        %v5315 = vadd.f32 0.0, %v5314
        %v5316 = vpop.f32.mrb[0].mxu0
        %v5317 = vpop.f32.mrb[0].mxu0
        %v5318 = vadd.f32 0.0, %v5317
        %v5319 = vpop.f32.mrb[0].mxu0
        %5320 = vmatprep.mubr.bf16.mxu0 0
        %5321 = vmatmul.mubr.bf16.gmra.mrb[0].mxu0 %v5236
        %v5322 = vpop.f32.mrb[0].mxu0
        %v5323 = vadd.f32 0.0, %v5322
        %v5324 = vpop.f32.mrb[0].mxu0
        %v5325 = vpop.f32.mrb[0].mxu0
        %v5326 = vadd.f32 0.0, %v5325
        %v5327 = vpop.f32.mrb[0].mxu0
        %5328 = vmatprep.mubr.bf16.mxu0 0
        %5329 = vmatmul.mubr.bf16.gmra.mrb[0].mxu0 %v5239
        %v5330 = vpop.f32.mrb[0].mxu0
        %v5331 = vadd.f32 0.0, %v5330
        %v5332 = vpop.f32.mrb[0].mxu0
        %v5333 = vpop.f32.mrb[0].mxu0
        %v5334 = vadd.f32 0.0, %v5333
        %v5335 = vpop.f32.mrb[0].mxu0
        %5336 = vmatprep.mubr.bf16.mxu0 0
        %5337 = vmatmul.mubr.bf16.gmra.mrb[0].mxu0 %v5242
        %v5338 = vpop.f32.mrb[0].mxu0
        %v5339 = vadd.f32 0.0, %v5338
        %v5340 = vpop.f32.mrb[0].mxu0
        %v5341 = vpop.f32.mrb[0].mxu0
        %v5342 = vadd.f32 0.0, %v5341
        %v5343 = vpop.f32.mrb[0].mxu0
        %5344 = vmatprep.mubr.bf16.mxu0 0
        %5345 = vmatmul.mubr.bf16.gmra.mrb[0].mxu0 %v5245
        %v5346 = vpop.f32.mrb[0].mxu0
        %v5347 = vadd.f32 0.0, %v5346
        %v5348 = vpop.f32.mrb[0].mxu0
        %v5349 = vpop.f32.mrb[0].mxu0
        %v5350 = vadd.f32 0.0, %v5349
        %v5351 = vpop.f32.mrb[0].mxu0
        %5352 = vmatprep.mubr.bf16.mxu0 0
        %5353 = vmatmul.mubr.bf16.gmra.mrb[0].mxu0 %v5248
        %v5354 = vpop.f32.mrb[0].mxu0
        %v5355 = vadd.f32 0.0, %v5354
        %v5356 = vpop.f32.mrb[0].mxu0
        %v5357 = vpop.f32.mrb[0].mxu0
        %v5358 = vadd.f32 0.0, %v5357
        %v5359 = vpop.f32.mrb[0].mxu0
        %5360 = vmatprep.mubr.bf16.mxu0 0
        %5361 = vmatmul.mubr.bf16.gmra.mrb[0].mxu0 %v5251
        %v5362 = vpop.f32.mrb[0].mxu0
        %v5363 = vadd.f32 0.0, %v5362
        %v5364 = vpop.f32.mrb[0].mxu0
        %v5365 = vpop.f32.mrb[0].mxu0
        %v5366 = vadd.f32 0.0, %v5365
        %v5367 = vpop.f32.mrb[0].mxu0
        %5368 = vmatprep.mubr.bf16.mxu0 0
        %5369 = vmatmul.mubr.bf16.gmra.mrb[0].mxu0 %v5254
        %v5370 = vpop.f32.mrb[0].mxu0
        %v5371 = vadd.f32 0.0, %v5370
        %v5372 = vpop.f32.mrb[0].mxu0
        %v5373 = vpop.f32.mrb[0].mxu0
        %v5374 = vadd.f32 0.0, %v5373
        %v5375 = vpop.f32.mrb[0].mxu0
        %5376 = vmatprep.mubr.bf16.mxu0 0
        %5377 = vmatmul.mubr.bf16.gmra.mrb[0].mxu0 %v5257
        %v5378 = vpop.f32.mrb[0].mxu0
        %v5379 = vadd.f32 0.0, %v5378
        %v5380 = vpop.f32.mrb[0].mxu0
        %v5381 = vpop.f32.mrb[0].mxu0
        %v5382 = vadd.f32 0.0, %v5381
        %v5383 = vpop.f32.mrb[0].mxu0
        %5384 = vmatprep.mubr.bf16.mxu0 0
        %5385 = vmatmul.mubr.bf16.gmra.mrb[0].mxu0 %v5260
        %v5386 = vpop.f32.mrb[0].mxu0
        %v5387 = vadd.f32 0.0, %v5386
        %v5388 = vpop.f32.mrb[0].mxu0
        %v5389 = vpop.f32.mrb[0].mxu0
        %v5390 = vadd.f32 0.0, %v5389
        %v5391 = vpop.f32.mrb[0].mxu0
        %5392 = vmatprep.mubr.bf16.mxu0 0
        %5393 = vmatmul.mubr.bf16.gmra.mrb[0].mxu0 %v5263
        %v5394 = vpop.f32.mrb[0].mxu0
        %v5395 = vadd.f32 0.0, %v5394
        %v5396 = vpop.f32.mrb[0].mxu0
        %v5397 = vpop.f32.mrb[0].mxu0
        %v5398 = vadd.f32 0.0, %v5397
        %v5399 = vpop.f32.mrb[0].mxu0
        %5400 = vmatprep.mubr.bf16.mxu0 0
        %5401 = vmatmul.mubr.bf16.gmra.mrb[0].mxu0 %v5266
        %v5402 = vpop.f32.mrb[0].mxu0
        %v5403 = vadd.f32 0.0, %v5402
        %v5404 = vpop.f32.mrb[0].mxu0
        %v5405 = vpop.f32.mrb[0].mxu0
        %v5406 = vadd.f32 0.0, %v5405
        %v5407 = vpop.f32.mrb[0].mxu0
        %5408 = vmatprep.mubr.bf16.mxu0 0
        %5409 = vmatmul.mubr.bf16.gmra.mrb[0].mxu0 %v5269
        %v5410 = vpop.f32.mrb[0].mxu0
        %v5411 = vadd.f32 0.0, %v5410
        %v5412 = vpop.f32.mrb[0].mxu0
        %v5413 = vpop.f32.mrb[0].mxu0
        %v5414 = vadd.f32 0.0, %v5413
        %v5415 = vpop.f32.mrb[0].mxu0
        %5416 = vmatprep.mubr.bf16.mxu0 0
        %5417 = vmatmul.mubr.bf16.gmra.mrb[0].mxu0 %v5272
        %v5418 = vpop.f32.mrb[0].mxu0
        %v5419 = vadd.f32 0.0, %v5418
        %v5420 = vpop.f32.mrb[0].mxu0
        %v5421 = vpop.f32.mrb[0].mxu0
        %v5422 = vadd.f32 0.0, %v5421
        %v5423 = vpop.f32.mrb[0].mxu0
        %5424 = vmatprep.mubr.bf16.mxu0 0
        %5425 = vmatmul.mubr.bf16.gmra.mrb[0].mxu0 %v5275
        %v5426 = vpop.f32.mrb[0].mxu0
        %v5427 = vadd.f32 0.0, %v5426
        %v5428 = vpop.f32.mrb[0].mxu0
        %v5429 = vpop.f32.mrb[0].mxu0
        %v5430 = vadd.f32 0.0, %v5429
        %v5431 = vpop.f32.mrb[0].mxu0
        %5432 = vmatprep.mubr.bf16.mxu0 0
        %5433 = vmatmul.mubr.bf16.gmra.mrb[0].mxu0 %v5278
        %v5434 = vpop.f32.mrb[0].mxu0
        %v5435 = vadd.f32 0.0, %v5434
        %v5436 = vpop.f32.mrb[0].mxu0
        %v5437 = vpop.f32.mrb[0].mxu0
        %v5438 = vadd.f32 0.0, %v5437
        %v5439 = vpop.f32.mrb[0].mxu0
        %5440 = vdwg.mxu0
        %v5441 = vadd.f32 %v5176, %v5315
        %v5442 = vadd.f32 %v5177, %v5318
        %v5443 = vadd.f32 %v5178, %v5323
        %v5444 = vadd.f32 %v5179, %v5326
        %v5445 = vadd.f32 %v5180, %v5331
        %v5446 = vadd.f32 %v5181, %v5334
        %v5447 = vadd.f32 %v5182, %v5339
        %v5448 = vadd.f32 %v5183, %v5342
        %v5449 = vadd.f32 %v5184, %v5347
        %v5450 = vadd.f32 %v5185, %v5350
        %v5451 = vadd.f32 %v5186, %v5355
        %v5452 = vadd.f32 %v5187, %v5358
        %v5453 = vadd.f32 %v5188, %v5363
        %v5454 = vadd.f32 %v5189, %v5366
        %v5455 = vadd.f32 %v5190, %v5371
        %v5456 = vadd.f32 %v5191, %v5374
        %v5457 = vadd.f32 %v5192, %v5379
        %v5458 = vadd.f32 %v5193, %v5382
        %v5459 = vadd.f32 %v5194, %v5387
        %v5460 = vadd.f32 %v5195, %v5390
        %v5461 = vadd.f32 %v5196, %v5395
        %v5462 = vadd.f32 %v5197, %v5398
        %v5463 = vadd.f32 %v5198, %v5403
        %v5464 = vadd.f32 %v5199, %v5406
        %v5465 = vadd.f32 %v5200, %v5411
        %v5466 = vadd.f32 %v5201, %v5414
        %v5467 = vadd.f32 %v5202, %v5419
        %v5468 = vadd.f32 %v5203, %v5422
        %v5469 = vadd.f32 %v5204, %v5427
        %v5470 = vadd.f32 %v5205, %v5430
        %v5471 = vadd.f32 %v5206, %v5435
        %v5472 = vadd.f32 %v5207, %v5438
        %v5473 = vld [vmem:[%s13] sm:$0x1]
        %v5475 = vlaneseq
        %v5476 = vshrl.u32 %v5475, 7
        %v5477 = vsub.s32 0, %v5476
        %v5478 = vrot.slane %v5473, %v5477
        %v5480 = vadd.f32 %v5441, %v5478
        %v5481 = vadd.f32 %v5442, %v5478
        %v5482 = vadd.f32 %v5443, %v5478
        %v5483 = vadd.f32 %v5444, %v5478
        %v5484 = vadd.f32 %v5445, %v5478
        %v5485 = vadd.f32 %v5446, %v5478
        %v5486 = vadd.f32 %v5447, %v5478
        %v5487 = vadd.f32 %v5448, %v5478
        %v5488 = vadd.f32 %v5449, %v5478
        %v5489 = vadd.f32 %v5450, %v5478
        %v5490 = vadd.f32 %v5451, %v5478
        %v5491 = vadd.f32 %v5452, %v5478
        %v5492 = vadd.f32 %v5453, %v5478
        %v5493 = vadd.f32 %v5454, %v5478
        %v5494 = vadd.f32 %v5455, %v5478
        %v5495 = vadd.f32 %v5456, %v5478
        %v5496 = vadd.f32 %v5457, %v5478
        %v5497 = vadd.f32 %v5458, %v5478
        %v5498 = vadd.f32 %v5459, %v5478
        %v5499 = vadd.f32 %v5460, %v5478
        %v5500 = vadd.f32 %v5461, %v5478
        %v5501 = vadd.f32 %v5462, %v5478
        %v5502 = vadd.f32 %v5463, %v5478
        %v5503 = vadd.f32 %v5464, %v5478
        %v5504 = vadd.f32 %v5465, %v5478
        %v5505 = vadd.f32 %v5466, %v5478
        %v5506 = vadd.f32 %v5467, %v5478
        %v5507 = vadd.f32 %v5468, %v5478
        %v5508 = vadd.f32 %v5469, %v5478
        %v5509 = vadd.f32 %v5470, %v5478
        %v5510 = vadd.f32 %v5471, %v5478
        %v5511 = vadd.f32 %v5472, %v5478
        %5512 = vst.msk [vmem:[%s471] sm:$0xff] %vm3156, %v5480
        %5513 = vst.msk [vmem:[%s471 + $0x8] sm:$0xff] %vm3156, %v5481
        %5514 = vst.msk [vmem:[%s471 + $0x10] sm:$0xff] %vm3156, %v5482
        %5515 = vst.msk [vmem:[%s471 + $0x18] sm:$0xff] %vm3156, %v5483
        %5516 = vst.msk [vmem:[%s471 + $0x20] sm:$0xff] %vm3156, %v5484
        %5517 = vst.msk [vmem:[%s471 + $0x28] sm:$0xff] %vm3156, %v5485
        %5518 = vst.msk [vmem:[%s471 + $0x30] sm:$0xff] %vm3156, %v5486
        %5519 = vst.msk [vmem:[%s471 + $0x38] sm:$0xff] %vm3156, %v5487
        %5520 = vst.msk [vmem:[%s471 + $0x40] sm:$0xff] %vm3156, %v5488
        %5521 = vst.msk [vmem:[%s471 + $0x48] sm:$0xff] %vm3156, %v5489
        %5522 = vst.msk [vmem:[%s471 + $0x50] sm:$0xff] %vm3156, %v5490
        %5523 = vst.msk [vmem:[%s471 + $0x58] sm:$0xff] %vm3156, %v5491
        %5524 = vst.msk [vmem:[%s471 + $0x60] sm:$0xff] %vm3156, %v5492
        %5525 = vst.msk [vmem:[%s471 + $0x68] sm:$0xff] %vm3156, %v5493
        %5526 = vst.msk [vmem:[%s471 + $0x70] sm:$0xff] %vm3156, %v5494
        %5527 = vst.msk [vmem:[%s471 + $0x78] sm:$0xff] %vm3156, %v5495
        %5528 = vst.msk [vmem:[%s471 + $0x80] sm:$0xff] %vm3156, %v5496
        %5529 = vst.msk [vmem:[%s471 + $0x88] sm:$0xff] %vm3156, %v5497
        %5530 = vst.msk [vmem:[%s471 + $0x90] sm:$0xff] %vm3156, %v5498
        %5531 = vst.msk [vmem:[%s471 + $0x98] sm:$0xff] %vm3156, %v5499
        %5532 = vst.msk [vmem:[%s471 + $0xa0] sm:$0xff] %vm3156, %v5500
        %5533 = vst.msk [vmem:[%s471 + $0xa8] sm:$0xff] %vm3156, %v5501
        %5534 = vst.msk [vmem:[%s471 + $0xb0] sm:$0xff] %vm3156, %v5502
        %5535 = vst.msk [vmem:[%s471 + $0xb8] sm:$0xff] %vm3156, %v5503
        %5536 = vst.msk [vmem:[%s471 + $0xc0] sm:$0xff] %vm3156, %v5504
        %5537 = vst.msk [vmem:[%s471 + $0xc8] sm:$0xff] %vm3156, %v5505
        %5538 = vst.msk [vmem:[%s471 + $0xd0] sm:$0xff] %vm3156, %v5506
        %5539 = vst.msk [vmem:[%s471 + $0xd8] sm:$0xff] %vm3156, %v5507
        %5540 = vst.msk [vmem:[%s471 + $0xe0] sm:$0xff] %vm3156, %v5508
        %5541 = vst.msk [vmem:[%s471 + $0xe8] sm:$0xff] %vm3156, %v5509
        %5542 = vst.msk [vmem:[%s471 + $0xf0] sm:$0xff] %vm3156, %v5510
        %5543 = vst.msk [vmem:[%s471 + $0xf8] sm:$0xff] %vm3156, %v5511
        %s5544 = sand.u32 %s340, 1
        %s5545 = scalar_lea.sflag [#allocation5], %s5544
        %s5546 = sand.u32 %s340, 1
        %s5547 = smul.addr %s5546, 256
        %s5548 = scalar_lea.vmem [#allocation4], %s5547
        // Predicated region
        $region77: #{resnet_block_forward.1} parent=75 // pred_check
          %p5549 = pneg %p350
        $region78: #{resnet_block_forward.1} parent=75 // pred_check_branch
          %5551 = sbr.rel (%p5549) target = $region80
        $region79: #{resnet_block_forward.1} parent=75 // pred_region
          %s5553 = ssub.s32 4096, 4096
          %5554 = vsyncadd %s5545, %s5553
          %s5555 = smul.addr %s28, 32
          %s5556 = smul.addr %s5555, 128
          %s5557 = scalar_lea.hbm %s14, %s5556
          %s5558 = sshll.u32 %s5548, 4
          %s5559 = int_to_ptr.vmem [resolvable:$true] %s5558
          %5564 = dma.vmem_to_hbm [thread:$0]  %s5559, 4096, %s5557, %s5545, 128, 128, 8
        $region80: #{resnet_block_forward.1} parent=75 // pred_fallthru
          _
      $region76: #{resnet_block_forward.1} parent=5 // pred_fallthru
        _
      %p5565 = scmp.le.s32.totalorder 2, %s23
      // Predicated region
      $region81: #{resnet_block_forward.1} parent=5 // pred_check
        %p5566 = pneg %p5565
      $region82: #{resnet_block_forward.1} parent=5 // pred_check_branch
        %5568 = sbr.rel (%p5566) target = $region84
      $region83: #{resnet_block_forward.1} parent=5 // pred_region
        %s5569 = ssub.s32 %s23, 2
        // Predicated region
        $region85: #{resnet_block_forward.1} parent=83 // pred_check
          %p5570 = pneg %p356
        $region86: #{resnet_block_forward.1} parent=83 // pred_check_branch
          %5572 = sbr.rel (%p5570) target = $region88
        $region87: #{resnet_block_forward.1} parent=83 // pred_region
          %s5573 = sand.u32 %s341, 1
          %s5574 = scalar_lea.sflag [#allocation5], %s5573
          %s5575 = sand.u32 %s341, 1
          %s5576 = smul.addr %s5575, 256
          %s5577 = scalar_lea.vmem [#allocation4], %s5576
          %5578 = dma.done %s5574, 4096
        $region88: #{resnet_block_forward.1} parent=83 // pred_fallthru
          _
      $region84: #{resnet_block_forward.1} parent=5 // pred_fallthru
        _
    $region6: #{resnet_block_forward.1} parent=1 // loop_footer
      %s27 = sadd.s32 1, %s23
    $region7: #{resnet_block_forward.1} parent=1 // loop_footer_branch
      %22 = sbr.rel target = $region3
    $region8: #{resnet_block_forward.1} parent=1 // loop_exit
      _
    %5579 = vsyncpa [#allocation5], 1
    %s5580 = scalar_lea.sflag [#allocation5], 1
    %5581 = vsyncpa %s5580, 1

</llo_original>
